<compile_context>
chip_gen: v7x
topology: tpu7x:2x2x1
jax: 0.10.0
libtpu: 0.0.40
codegen_flags: <defaults>
</compile_context>

<pallas_src>
import functools

import jax
import jax.numpy as jnp
from jax import lax
from jax.experimental import pallas as pl
from jax.experimental.pallas import tpu as pltpu

EPS = 1e-5


def _round_up(x, m):
    return ((x + m - 1) // m) * m


# ------------------------------- fused kernel ------------------------------- #

def _bottleneck_kernel(x_ref, w1_ref, w2_ref, w3_ref, b1_ref, b2_ref, b3_ref,
                       o_ref, h1p_ref, *, H, W, PAD, compute_dtype):
    """One grid step = one image, fully resident in VMEM."""
    HW = H * W
    P = w1_ref.shape[1]
    f32 = jnp.float32

    # ---- conv1 (1x1, BN1 scale folded into w1) + bias + ReLU ----------------
    h1 = jnp.dot(x_ref[...], w1_ref[...], preferred_element_type=f32)
    h1 = jnp.maximum(h1 + b1_ref[...], 0.0)
    h1c = h1.astype(compute_dtype)            # single hoisted cast for staging

    # Left/right wrap masks for the flattened 3x3 shifts, built in-kernel and
    # baked into the dw=-1 / dw=+1 copies at staging time: an h1 row at image
    # column W-1 never feeds a dw=-1 tap, column 0 never feeds a dw=+1 tap.
    col = lax.broadcasted_iota(jnp.int32, (HW, 1), 0) % W
    h1_l = h1c * (col < (W - 1)).astype(compute_dtype)   # used by kw=0 (dw=-1)
    h1_r = h1c * (col > 0).astype(compute_dtype)         # used by kw=2 (dw=+1)

    # Zero the rows of the wide staging buffer that edge taps read but no
    # store below covers (top/bottom image border).  Re-zeroed every step so
    # each TensorCore's private scratch is valid on its first step (megacore).
    zr = W + 1
    zeros = jnp.zeros((zr, 9 * P), h1p_ref.dtype)
    h1p_ref[PAD:PAD + zr, :] = zeros
    h1p_ref[PAD + HW - zr:PAD + HW, :] = zeros

    # Stage h1 nine times: tap (kh, kw) goes to column block kh*3+kw, shifted
    # up by (kh-1)*W + (kw-1) rows, so the single row window [PAD, PAD+HW)
    # holds the full im2col patch matrix (HW, 9P) in compute dtype.
    staged = (h1_l, h1c, h1_r)
    for kh in range(3):
        for kw in range(3):
            r0 = PAD - ((kh - 1) * W + (kw - 1))
            c0 = (kh * 3 + kw) * P
            h1p_ref[r0:r0 + HW, c0:c0 + P] = staged[kw]

    # ---- conv2 (3x3, BN2 scale folded) as ONE wide MXU matmul ---------------
    patch = h1p_ref[PAD:PAD + HW, :]                       # (HW, 9P)
    h2 = jnp.dot(patch, w2_ref[...], preferred_element_type=f32)
    h2 = jnp.maximum(h2 + b2_ref[...], 0.0).astype(compute_dtype)

    # ---- conv3 (1x1, BN3 scale folded) + bias + residual + ReLU -------------
    # x is re-read here (not kept live across conv2) and upcast for the f32
    # residual add; output is written in the compute dtype.
    h3 = jnp.dot(h2, w3_ref[...], preferred_element_type=f32)
    res = x_ref[...].astype(f32)
    o_ref[...] = jnp.maximum(h3 + b3_ref[...] + res, 0.0).astype(o_ref.dtype)


# ------------------------------ param folding ------------------------------- #

def _fold_bn(gamma, beta, mean, var):
    scale = gamma / jnp.sqrt(var + EPS)
    bias = beta - mean * scale
    return scale, bias


def fold_params(params, compute_dtype):
    """Fold eval-mode BN scales into conv weights (f32 fold, then cast)."""
    w1, bn1, w2, bn2, w3, bn3 = params
    s1, b1 = _fold_bn(*bn1)
    s2, b2 = _fold_bn(*bn2)
    s3, b3 = _fold_bn(*bn3)
    w1f = (w1 * s1).astype(compute_dtype)             # (Cin, P)     * (P,)
    w2f = (w2 * s2).astype(compute_dtype)             # (3, 3, P, P) * (P,)
    w3f = (w3 * s3).astype(compute_dtype)             # (P, Cout)    * (Cout,)
    return (w1f, b1.reshape(1, -1), w2f, b2.reshape(1, -1),
            w3f, b3.reshape(1, -1))


# ------------------------------ module wrapper ------------------------------ #

def bottleneck_forward(x_nhwc, params, compute_dtype=jnp.float32):
    """Fused Pallas Bottleneck.forward on NHWC activations (stride=1)."""
    N, H, W, Cin = x_nhwc.shape
    w1f, b1, w2f, b2, w3f, b3 = fold_params(params, compute_dtype)
    P = w1f.shape[1]
    Cout = w3f.shape[1]
    assert Cin == Cout, "identity residual requires inplanes == planes*expansion"
    assert H >= 3 and W >= 2, "degenerate spatial sizes not supported"
    HW = H * W
    PAD = _round_up(W + 1, 16)     # sublane-aligned staging for f32 and bf16

    # im2col-ordered conv2 weight: row blocks of size P ordered (kh, kw).
    w2k = w2f.reshape(9 * P, P)

    # NHWC -> (N, HW, C) is a free reshape (no transpose).  On the bf16 path
    # the activations are cast once here so HBM in/out traffic is halved.
    x = x_nhwc.reshape(N, HW, Cin).astype(compute_dtype)

    kernel = functools.partial(_bottleneck_kernel, H=H, W=W, PAD=PAD,
                               compute_dtype=compute_dtype)

    itemsize = jnp.dtype(compute_dtype).itemsize
    flops = 2 * N * HW * (Cin * P + 9 * P * P + P * Cout)
    bytes_accessed = (N * HW * (Cin + Cout) * itemsize
                      + (w1f.size + w2k.size + w3f.size) * itemsize
                      + (b1.size + b2.size + b3.size) * 4)

    const2 = lambda n: (0, 0)
    out = pl.pallas_call(
        kernel,
        out_shape=jax.ShapeDtypeStruct((N, HW, Cout), compute_dtype),
        grid_spec=pltpu.PrefetchScalarGridSpec(
            num_scalar_prefetch=0,
            grid=(N,),
            in_specs=[
                pl.BlockSpec((None, HW, Cin), lambda n: (n, 0, 0)),  # x (per image)
                pl.BlockSpec((Cin, P), const2),                      # w1 (resident)
                pl.BlockSpec((9 * P, P), const2),                    # w2 im2col (resident)
                pl.BlockSpec((P, Cout), const2),                     # w3 (resident)
                pl.BlockSpec((1, P), const2),                        # b1
                pl.BlockSpec((1, P), const2),                        # b2
                pl.BlockSpec((1, Cout), const2),                     # b3
            ],
            out_specs=pl.BlockSpec((None, HW, Cout), lambda n: (n, 0, 0)),
            scratch_shapes=[
                pltpu.VMEM((HW + 2 * PAD, 9 * P), compute_dtype),    # wide h1 staging
            ]),
        compiler_params=pltpu.CompilerParams(
            dimension_semantics=("parallel",),       # megacore-shard images
            vmem_limit_bytes=48 * 1024 * 1024),
        cost_estimate=pl.CostEstimate(flops=flops, transcendentals=0,
                                      bytes_accessed=bytes_accessed),
    )(x, w1f, w2k, w3f, b1, b2, b3)

    return out.reshape(N, H, W, Cout)


def bottleneck_forward_nchw(x_nchw, params, compute_dtype=jnp.float32):
    """Layout adapter only: prefer the NHWC entry point so the two full-tensor
    transposes (each an extra HBM pass) never appear in the hot path."""
    x = jnp.transpose(x_nchw, (0, 2, 3, 1))
    out = bottleneck_forward(x, params, compute_dtype)
    return jnp.transpose(out, (0, 3, 1, 2))


# ------------------------------ references (JAX) ---------------------------- #

def bottleneck_reference(x_nhwc, params, compute_dtype=jnp.float32):
    """Pure-JAX NHWC reference with the same BN fold / operand casts as the kernel."""
    w1f, b1, w2f, b2, w3f, b3 = fold_params(params, compute_dtype)
    cd = compute_dtype
    hp = lax.Precision.HIGHEST
    x = x_nhwc.astype(cd)
    h = jnp.einsum('nhwc,co->nhwo', x, w1f,
                   preferred_element_type=jnp.float32, precision=hp)
    h = jax.nn.relu(h + b1)
    h = lax.conv_general_dilated(h.astype(cd), w2f, (1, 1), 'SAME',
                                 dimension_numbers=('NHWC', 'HWIO', 'NHWC'),
                                 preferred_element_type=jnp.float32, precision=hp)
    h = jax.nn.relu(h + b2)
    h = jnp.einsum('nhwc,co->nhwo', h.astype(cd), w3f,
                   preferred_element_type=jnp.float32, precision=hp)
    h = jax.nn.relu(h + b3 + x.astype(jnp.float32))
    return h.astype(cd)


def bottleneck_reference_module(x_nhwc, params):
    """Eval-mode module semantics (BN applied separately, all f32)."""
    w1, bn1, w2, bn2, w3, bn3 = params
    hp = lax.Precision.HIGHEST

    def bn(y, g, b, m, v):
        return (y - m) / jnp.sqrt(v + EPS) * g + b

    x = x_nhwc
    h = jnp.einsum('nhwc,co->nhwo', x, w1, precision=hp)
    h = jax.nn.relu(bn(h, *bn1))
    h = lax.conv_general_dilated(h, w2, (1, 1), 'SAME',
                                 dimension_numbers=('NHWC', 'HWIO', 'NHWC'),
                                 precision=hp)
    h = jax.nn.relu(bn(h, *bn2))
    h = jnp.einsum('nhwc,co->nhwo', h, w3, precision=hp)
    return jax.nn.relu(bn(h, *bn3) + x)


# -------------------------------- param init -------------------------------- #

def make_params(key, inplanes, planes):
    exp = 4
    ks = jax.random.split(key, 6)

    def bn_params(k, c):
        k1, k2, k3, k4 = jax.random.split(k, 4)
        gamma = jax.random.uniform(k1, (c,), jnp.float32, 0.5, 1.5)
        beta = 0.1 * jax.random.normal(k2, (c,), jnp.float32)
        mean = 0.1 * jax.random.normal(k3, (c,), jnp.float32)
        var = jax.random.uniform(k4, (c,), jnp.float32, 0.5, 1.5)
        return gamma, beta, mean, var

    w1 = jax.random.normal(ks[0], (inplanes, planes), jnp.float32) * (2.0 / inplanes) ** 0.5
    w2 = jax.random.normal(ks[1], (3, 3, planes, planes), jnp.float32) * (2.0 / (9 * planes)) ** 0.5
    w3 = jax.random.normal(ks[2], (planes, planes * exp), jnp.float32) * (2.0 / planes) ** 0.5
    bn1 = bn_params(ks[3], planes)
    bn2 = bn_params(ks[4], planes)
    bn3 = bn_params(ks[5], planes * exp)
    return (w1, bn1, w2, bn2, w3, bn3)


# ----------------------------------- main ------------------------------------ #

if __name__ == "__main__":
    planes = 32
    inplanes = planes * 4          # 128: identity residual valid, lane-dense I/O
    N, H, W = 2, 16, 16

    key = jax.random.PRNGKey(0)
    kx, kp = jax.random.split(key)
    x = jax.random.normal(kx, (N, H, W, inplanes), jnp.float32)   # NHWC input
    params = make_params(kp, inplanes, planes)

    fwd = jax.jit(bottleneck_forward, static_argnames=("compute_dtype",))

    # f32 path.  Tolerances are chosen to cover possible matmul precision-mode
    # differences between the Mosaic MXU path and XLA's dot/conv; structural
    # or indexing bugs would show up as O(1) errors.
    out_f32 = jax.block_until_ready(fwd(x, params, compute_dtype=jnp.float32))
    assert out_f32.shape == (N, H, W, inplanes) and out_f32.dtype == jnp.float32
    ref_fold = bottleneck_reference(x, params, jnp.float32)
    ref_mod = bottleneck_reference_module(x, params)
    assert jnp.allclose(out_f32, ref_fold, atol=3e-2, rtol=3e-2), (
        f"f32 max abs err {jnp.max(jnp.abs(out_f32 - ref_fold))}")
    assert jnp.allclose(out_f32, ref_mod, atol=3e-2, rtol=3e-2), (
        f"f32 module-ref max abs err {jnp.max(jnp.abs(out_f32 - ref_mod))}")

    # bf16 path (bf16 activations in HBM, bf16 output; f32 accumulation,
    # f32 bias/ReLU epilogues and f32 residual add), checked against a
    # reference that applies the identical BN fold and operand casts.
    out_bf16 = jax.block_until_ready(fwd(x, params, compute_dtype=jnp.bfloat16))
    assert out_bf16.dtype == jnp.bfloat16
    ref_bf16 = bottleneck_reference(x, params, jnp.bfloat16).astype(jnp.float32)
    assert jnp.allclose(out_bf16.astype(jnp.float32), ref_bf16,
                        atol=3e-2, rtol=3e-2), (
        f"bf16 max abs err {jnp.max(jnp.abs(out_bf16.astype(jnp.float32) - ref_bf16))}")

    print("KERNEL_OK")
</pallas_src>

<mosaic_0001>
module attributes {stable_mosaic.version = 11 : i64} {
  func.func @_bottleneck_kernel(%arg0: i32, %arg1: memref<1x256x128xf32, #tpu.memory_space<vmem>>, %arg2: memref<128x32xf32, #tpu.memory_space<vmem>>, %arg3: memref<288x32xf32, #tpu.memory_space<vmem>>, %arg4: memref<32x128xf32, #tpu.memory_space<vmem>>, %arg5: memref<1x32xf32, #tpu.memory_space<vmem>>, %arg6: memref<1x32xf32, #tpu.memory_space<vmem>>, %arg7: memref<1x128xf32, #tpu.memory_space<vmem>>, %arg8: memref<1x256x128xf32, #tpu.memory_space<vmem>>, %arg9: memref<320x288xf32, #tpu.memory_space<vmem>>) attributes {dimension_semantics = [#tpu.dimension_semantics<parallel>], iteration_bounds = array<i64: 2>, scalar_prefetch = 0 : i64, scratch_operands = 1 : i64, tpu.core_type = #tpu.core_type<tc>, window_params = [{transform_indices = @transform_0, window_bounds = array<i64: 1, 256, 128>}, {pipeline_mode = #tpu.pipeline_mode<synchronous>, transform_indices = @transform_1, window_bounds = array<i64: 128, 32>}, {pipeline_mode = #tpu.pipeline_mode<synchronous>, transform_indices = @transform_2, window_bounds = array<i64: 288, 32>}, {pipeline_mode = #tpu.pipeline_mode<synchronous>, transform_indices = @transform_3, window_bounds = array<i64: 32, 128>}, {pipeline_mode = #tpu.pipeline_mode<synchronous>, transform_indices = @transform_4, window_bounds = array<i64: 1, 32>}, {pipeline_mode = #tpu.pipeline_mode<synchronous>, transform_indices = @transform_5, window_bounds = array<i64: 1, 32>}, {pipeline_mode = #tpu.pipeline_mode<synchronous>, transform_indices = @transform_6, window_bounds = array<i64: 1, 128>}, {transform_indices = @transform_7, window_bounds = array<i64: 1, 256, 128>}]} {
    %c0 = arith.constant 0 : index
    %c0_0 = arith.constant 0 : index
    %c0_1 = arith.constant 0 : index
    %0 = vector.load %arg1[%c0, %c0_0, %c0_1] : memref<1x256x128xf32, #tpu.memory_space<vmem>>, vector<1x256x128xf32>
    %1 = vector.shape_cast %0 : vector<1x256x128xf32> to vector<256x128xf32>
    %c0_2 = arith.constant 0 : index
    %c0_3 = arith.constant 0 : index
    %2 = vector.load %arg2[%c0_2, %c0_3] : memref<128x32xf32, #tpu.memory_space<vmem>>, vector<128x32xf32>
    %cst = arith.constant dense<0.000000e+00> : vector<256x32xf32>
    %3 = tpu.matmul %1, %2, %cst {dimension_numbers = #tpu.dot_dimension_numbers<[1], [0], [0], [1], [0, 0, 1, 1], [], []>} : vector<256x128xf32>, vector<128x32xf32>, vector<256x32xf32> -> vector<256x32xf32>
    %c0_4 = arith.constant 0 : index
    %c0_5 = arith.constant 0 : index
    %4 = vector.load %arg5[%c0_4, %c0_5] : memref<1x32xf32, #tpu.memory_space<vmem>>, vector<1x32xf32>
    %5 = vector.broadcast %4 : vector<1x32xf32> to vector<256x32xf32>
    %6 = arith.addf %3, %5 : vector<256x32xf32>
    %cst_6 = arith.constant 0.000000e+00 : f32
    %7 = vector.broadcast %cst_6 : f32 to vector<256x32xf32>
    %8 = arith.maximumf %6, %7 : vector<256x32xf32>
    %9 = tpu.iota {dimensions = array<i32: 0>} : vector<256x1xi32>
    %c16_i32 = arith.constant 16 : i32
    %c0_i32 = arith.constant 0 : i32
    %10 = arith.cmpi eq, %c16_i32, %c0_i32 : i32
    %c1_i32 = arith.constant 1 : i32
    %11 = arith.select %10, %c1_i32, %c16_i32 : i32
    %12 = vector.broadcast %11 : i32 to vector<256x1xi32>
    %13 = arith.remsi %9, %12 : vector<256x1xi32>
    %c0_i32_7 = arith.constant 0 : i32
    %14 = vector.broadcast %c0_i32_7 : i32 to vector<256x1xi32>
    %15 = arith.cmpi ne, %13, %14 : vector<256x1xi32>
    %c0_i32_8 = arith.constant 0 : i32
    %16 = vector.broadcast %c0_i32_8 : i32 to vector<256x1xi32>
    %17 = arith.cmpi slt, %13, %16 : vector<256x1xi32>
    %c0_i32_9 = arith.constant 0 : i32
    %18 = arith.cmpi slt, %11, %c0_i32_9 : i32
    %19 = vector.broadcast %18 : i1 to vector<256x1xi1>
    %20 = vector.broadcast %19 : vector<256x1xi1> to vector<256x1xi1>
    %21 = arith.xori %17, %20 : vector<256x1xi1>
    %22 = arith.andi %21, %15 : vector<256x1xi1>
    %23 = vector.broadcast %11 : i32 to vector<256x1xi32>
    %24 = arith.addi %13, %23 : vector<256x1xi32>
    %25 = arith.select %22, %24, %13 : vector<256x1xi1>, vector<256x1xi32>
    %c15_i32 = arith.constant 15 : i32
    %26 = vector.broadcast %c15_i32 : i32 to vector<256x1xi32>
    %27 = arith.cmpi slt, %25, %26 : vector<256x1xi32>
    %28 = arith.extui %27 : vector<256x1xi1> to vector<256x1xi32>
    %29 = arith.sitofp %28 : vector<256x1xi32> to vector<256x1xf32>
    %30 = vector.broadcast %29 : vector<256x1xf32> to vector<256x32xf32>
    %31 = arith.mulf %8, %30 : vector<256x32xf32>
    %c0_i32_10 = arith.constant 0 : i32
    %32 = vector.broadcast %c0_i32_10 : i32 to vector<256x1xi32>
    %33 = arith.cmpi sgt, %25, %32 : vector<256x1xi32>
    %34 = arith.extui %33 : vector<256x1xi1> to vector<256x1xi32>
    %35 = arith.sitofp %34 : vector<256x1xi32> to vector<256x1xf32>
    %36 = vector.broadcast %35 : vector<256x1xf32> to vector<256x32xf32>
    %37 = arith.mulf %8, %36 : vector<256x32xf32>
    %cst_11 = arith.constant 0.000000e+00 : f32
    %38 = vector.broadcast %cst_11 : f32 to vector<17x288xf32>
    %c32 = arith.constant 32 : index
    %c0_12 = arith.constant 0 : index
    %39 = vector.load %arg9[%c32, %c0_12] : memref<320x288xf32, #tpu.memory_space<vmem>>, vector<17x288xf32>
    tpu.vector_store %arg9[%c32, %c0_12], %38 {strides = array<i32>} : memref<320x288xf32, #tpu.memory_space<vmem>>, vector<17x288xf32>,
    %c271 = arith.constant 271 : index
    %c0_13 = arith.constant 0 : index
    %40 = vector.load %arg9[%c271, %c0_13] : memref<320x288xf32, #tpu.memory_space<vmem>>, vector<17x288xf32>
    tpu.vector_store %arg9[%c271, %c0_13], %38 {strides = array<i32>} : memref<320x288xf32, #tpu.memory_space<vmem>>, vector<17x288xf32>,
    %c49 = arith.constant 49 : index
    %c0_14 = arith.constant 0 : index
    %41 = vector.load %arg9[%c49, %c0_14] : memref<320x288xf32, #tpu.memory_space<vmem>>, vector<256x32xf32>
    tpu.vector_store %arg9[%c49, %c0_14], %31 {strides = array<i32>} : memref<320x288xf32, #tpu.memory_space<vmem>>, vector<256x32xf32>,
    %c48 = arith.constant 48 : index
    %c32_15 = arith.constant 32 : index
    %42 = vector.load %arg9[%c48, %c32_15] : memref<320x288xf32, #tpu.memory_space<vmem>>, vector<256x32xf32>
    tpu.vector_store %arg9[%c48, %c32_15], %8 {strides = array<i32>} : memref<320x288xf32, #tpu.memory_space<vmem>>, vector<256x32xf32>,
    %c47 = arith.constant 47 : index
    %c64 = arith.constant 64 : index
    %43 = vector.load %arg9[%c47, %c64] : memref<320x288xf32, #tpu.memory_space<vmem>>, vector<256x32xf32>
    tpu.vector_store %arg9[%c47, %c64], %37 {strides = array<i32>} : memref<320x288xf32, #tpu.memory_space<vmem>>, vector<256x32xf32>,
    %c33 = arith.constant 33 : index
    %c96 = arith.constant 96 : index
    %44 = vector.load %arg9[%c33, %c96] : memref<320x288xf32, #tpu.memory_space<vmem>>, vector<256x32xf32>
    tpu.vector_store %arg9[%c33, %c96], %31 {strides = array<i32>} : memref<320x288xf32, #tpu.memory_space<vmem>>, vector<256x32xf32>,
    %c32_16 = arith.constant 32 : index
    %c128 = arith.constant 128 : index
    %45 = vector.load %arg9[%c32_16, %c128] : memref<320x288xf32, #tpu.memory_space<vmem>>, vector<256x32xf32>
    tpu.vector_store %arg9[%c32_16, %c128], %8 {strides = array<i32>} : memref<320x288xf32, #tpu.memory_space<vmem>>, vector<256x32xf32>,
    %c31 = arith.constant 31 : index
    %c160 = arith.constant 160 : index
    %46 = vector.load %arg9[%c31, %c160] : memref<320x288xf32, #tpu.memory_space<vmem>>, vector<256x32xf32>
    tpu.vector_store %arg9[%c31, %c160], %37 {strides = array<i32>} : memref<320x288xf32, #tpu.memory_space<vmem>>, vector<256x32xf32>,
    %c17 = arith.constant 17 : index
    %c192 = arith.constant 192 : index
    %47 = vector.load %arg9[%c17, %c192] : memref<320x288xf32, #tpu.memory_space<vmem>>, vector<256x32xf32>
    tpu.vector_store %arg9[%c17, %c192], %31 {strides = array<i32>} : memref<320x288xf32, #tpu.memory_space<vmem>>, vector<256x32xf32>,
    %c16 = arith.constant 16 : index
    %c224 = arith.constant 224 : index
    %48 = vector.load %arg9[%c16, %c224] : memref<320x288xf32, #tpu.memory_space<vmem>>, vector<256x32xf32>
    tpu.vector_store %arg9[%c16, %c224], %8 {strides = array<i32>} : memref<320x288xf32, #tpu.memory_space<vmem>>, vector<256x32xf32>,
    %c15 = arith.constant 15 : index
    %c256 = arith.constant 256 : index
    %49 = vector.load %arg9[%c15, %c256] : memref<320x288xf32, #tpu.memory_space<vmem>>, vector<256x32xf32>
    tpu.vector_store %arg9[%c15, %c256], %37 {strides = array<i32>} : memref<320x288xf32, #tpu.memory_space<vmem>>, vector<256x32xf32>,
    %c32_17 = arith.constant 32 : index
    %c0_18 = arith.constant 0 : index
    %50 = vector.load %arg9[%c32_17, %c0_18] : memref<320x288xf32, #tpu.memory_space<vmem>>, vector<256x288xf32>
    %c0_19 = arith.constant 0 : index
    %c0_20 = arith.constant 0 : index
    %51 = vector.load %arg3[%c0_19, %c0_20] : memref<288x32xf32, #tpu.memory_space<vmem>>, vector<288x32xf32>
    %cst_21 = arith.constant dense<0.000000e+00> : vector<256x32xf32>
    %52 = tpu.matmul %50, %51, %cst_21 {dimension_numbers = #tpu.dot_dimension_numbers<[1], [0], [0], [1], [0, 0, 1, 1], [], []>} : vector<256x288xf32>, vector<288x32xf32>, vector<256x32xf32> -> vector<256x32xf32>
    %c0_22 = arith.constant 0 : index
    %c0_23 = arith.constant 0 : index
    %53 = vector.load %arg6[%c0_22, %c0_23] : memref<1x32xf32, #tpu.memory_space<vmem>>, vector<1x32xf32>
    %54 = vector.broadcast %53 : vector<1x32xf32> to vector<256x32xf32>
    %55 = arith.addf %52, %54 : vector<256x32xf32>
    %cst_24 = arith.constant 0.000000e+00 : f32
    %56 = vector.broadcast %cst_24 : f32 to vector<256x32xf32>
    %57 = arith.maximumf %55, %56 : vector<256x32xf32>
    %c0_25 = arith.constant 0 : index
    %c0_26 = arith.constant 0 : index
    %58 = vector.load %arg4[%c0_25, %c0_26] : memref<32x128xf32, #tpu.memory_space<vmem>>, vector<32x128xf32>
    %cst_27 = arith.constant dense<0.000000e+00> : vector<256x128xf32>
    %59 = tpu.matmul %57, %58, %cst_27 {dimension_numbers = #tpu.dot_dimension_numbers<[1], [0], [0], [1], [0, 0, 1, 1], [], []>} : vector<256x32xf32>, vector<32x128xf32>, vector<256x128xf32> -> vector<256x128xf32>
    %c0_28 = arith.constant 0 : index
    %c0_29 = arith.constant 0 : index
    %c0_30 = arith.constant 0 : index
    %60 = vector.load %arg1[%c0_28, %c0_29, %c0_30] : memref<1x256x128xf32, #tpu.memory_space<vmem>>, vector<1x256x128xf32>
    %61 = vector.shape_cast %60 : vector<1x256x128xf32> to vector<256x128xf32>
    %c0_31 = arith.constant 0 : index
    %c0_32 = arith.constant 0 : index
    %62 = vector.load %arg7[%c0_31, %c0_32] : memref<1x128xf32, #tpu.memory_space<vmem>>, vector<1x128xf32>
    %63 = vector.broadcast %62 : vector<1x128xf32> to vector<256x128xf32>
    %64 = arith.addf %59, %63 : vector<256x128xf32>
    %65 = arith.addf %64, %61 : vector<256x128xf32>
    %cst_33 = arith.constant 0.000000e+00 : f32
    %66 = vector.broadcast %cst_33 : f32 to vector<256x128xf32>
    %67 = arith.maximumf %65, %66 : vector<256x128xf32>
    %c0_34 = arith.constant 0 : index
    %c0_35 = arith.constant 0 : index
    %c0_36 = arith.constant 0 : index
    %68 = vector.load %arg8[%c0_34, %c0_35, %c0_36] : memref<1x256x128xf32, #tpu.memory_space<vmem>>, vector<1x256x128xf32>
    %69 = vector.shape_cast %68 : vector<1x256x128xf32> to vector<256x128xf32>
    %70 = vector.shape_cast %67 : vector<256x128xf32> to vector<1x256x128xf32>
    tpu.vector_store %arg8[%c0_34, %c0_35, %c0_36], %70 {strides = array<i32>} : memref<1x256x128xf32, #tpu.memory_space<vmem>>, vector<1x256x128xf32>,
    return
  }
  func.func @transform_0(%arg0: i32) -> (i32, i32, i32) {
    %c0_i32 = arith.constant 0 : i32
    %c0_i32_0 = arith.constant 0 : i32
    %c0_i32_1 = arith.constant 0 : i32
    return %arg0, %c0_i32, %c0_i32_0 : i32, i32, i32
  }
  func.func @transform_1(%arg0: i32) -> (i32, i32) {
    %c0_i32 = arith.constant 0 : i32
    %c0_i32_0 = arith.constant 0 : i32
    %c0_i32_1 = arith.constant 0 : i32
    return %c0_i32, %c0_i32_0 : i32, i32
  }
  func.func @transform_2(%arg0: i32) -> (i32, i32) {
    %c0_i32 = arith.constant 0 : i32
    %c0_i32_0 = arith.constant 0 : i32
    %c0_i32_1 = arith.constant 0 : i32
    return %c0_i32, %c0_i32_0 : i32, i32
  }
  func.func @transform_3(%arg0: i32) -> (i32, i32) {
    %c0_i32 = arith.constant 0 : i32
    %c0_i32_0 = arith.constant 0 : i32
    %c0_i32_1 = arith.constant 0 : i32
    return %c0_i32, %c0_i32_0 : i32, i32
  }
  func.func @transform_4(%arg0: i32) -> (i32, i32) {
    %c0_i32 = arith.constant 0 : i32
    %c0_i32_0 = arith.constant 0 : i32
    %c0_i32_1 = arith.constant 0 : i32
    return %c0_i32, %c0_i32_0 : i32, i32
  }
  func.func @transform_5(%arg0: i32) -> (i32, i32) {
    %c0_i32 = arith.constant 0 : i32
    %c0_i32_0 = arith.constant 0 : i32
    %c0_i32_1 = arith.constant 0 : i32
    return %c0_i32, %c0_i32_0 : i32, i32
  }
  func.func @transform_6(%arg0: i32) -> (i32, i32) {
    %c0_i32 = arith.constant 0 : i32
    %c0_i32_0 = arith.constant 0 : i32
    %c0_i32_1 = arith.constant 0 : i32
    return %c0_i32, %c0_i32_0 : i32, i32
  }
  func.func @transform_7(%arg0: i32) -> (i32, i32, i32) {
    %c0_i32 = arith.constant 0 : i32
    %c0_i32_0 = arith.constant 0 : i32
    %c0_i32_1 = arith.constant 0 : i32
    return %arg0, %c0_i32, %c0_i32_0 : i32, i32, i32
  }
}

</mosaic_0001>

<llo_original>
// kernel: bottleneck_forward.1
$region0: #{bottleneck_forward.1}
  #allocation0 [shape = 'u32[]', space=smem, size = 0x4, offset = 0x4, fixed_abs, tag = 'smem constant byte address 0x4 - core index']
  #allocation1 [shape = 'u32[144,128]{1,0:T(1,128)}', space=vmem, size = 0x12000, scoped, tag = 'internal scratch']
  #allocation2 [shape = 'f32[320,288]{1,0:T(8,128)}', space=vmem, size = 0x78000, scoped, tag = 'scratch operand']
  %s0 = inlined_call_operand.vmem [shape: f32[2,256,128], index: 0, kind: input, shape index: {}]
  %s1 = inlined_call_operand.vmem [shape: f32[128,32], index: 1, kind: input, shape index: {}]
  %s2 = inlined_call_operand.vmem [shape: f32[288,32], index: 2, kind: input, shape index: {}]
  %s3 = inlined_call_operand.vmem [shape: f32[32,128], index: 3, kind: input, shape index: {}]
  %s4 = inlined_call_operand.vmem [shape: f32[1,32], index: 4, kind: input, shape index: {}]
  %s5 = inlined_call_operand.vmem [shape: f32[1,32], index: 5, kind: input, shape index: {}]
  %s6 = inlined_call_operand.vmem [shape: f32[1,128], index: 6, kind: input, shape index: {}]
  %s7 = inlined_call_operand.hbm [shape: f32[2,256,128], index: 7, kind: output, shape index: {}]
  %s8 = sld [smem:[#allocation0]]
  $region61: #{bottleneck_forward.1} parent=0
    _
  %s10 = ssub.s32 1, %s8
  %s11 = scalar_select 0, %s10, %s8
  $region1: #{bottleneck_forward.1} parent=0
    #allocation3 [shape = 'u8[262144]{0}', space=vmem, size = 0x40000, scoped, tag = 'output window, operand 0']
    #allocation4 [shape = 's32[2]{0}', space=sflag, size = 0x8, scoped, tag = 'scoped memory for bottleneck_forward.1']
    %12 = vsyncpa [#allocation4], 0
    %s13 = scalar_lea.sflag [#allocation4], 1
    %14 = vsyncpa %s13, 0
    loop: start=0, step=1, limit=4
    $region2: #{bottleneck_forward.1} parent=1 // loop_pre_header
      _
    $region3: #{bottleneck_forward.1} parent=1 // loop_header
      %s16 = sphi 0, %s20
      %p17 = scmp.ge.s32.totalorder %s16, 4
      %s26 = sphi 0, %s28
      %s29 = sphi 0, %s26
      %s30 = sphi 0, %s29
      %s46 = sphi 0, %s30
      %s50 = sphi 0, %s50
      %s52 = sphi 0, %s50
      %s53 = sphi 0, %s52
      %s67 = sphi 0, %s53
      %s71 = sphi 0, %s71
      %s73 = sphi 0, %s71
      %s74 = sphi 0, %s73
      %s88 = sphi 0, %s74
      %s92 = sphi 0, %s92
      %s94 = sphi 0, %s92
      %s95 = sphi 0, %s94
      %s109 = sphi 0, %s95
      %s113 = sphi 0, %s113
      %s115 = sphi 0, %s113
      %s116 = sphi 0, %s115
      %s130 = sphi 0, %s116
      %s134 = sphi 0, %s134
      %s136 = sphi 0, %s134
      %s137 = sphi 0, %s136
      %s151 = sphi 0, %s137
      %s155 = sphi 0, %s155
      %s157 = sphi 0, %s155
      %s158 = sphi 0, %s157
      %s172 = sphi 0, %s158
      %s178 = sphi 0, %s180
      %s181 = sphi 0, %s178
      %s182 = sphi 0, %s181
      %s198 = sphi 0, %s182
    $region4: #{bottleneck_forward.1} parent=1 // loop_header_branch
      %19 = sbr.rel (%p17) target = $region8
    $region5: #{bottleneck_forward.1} parent=1 // loop_body
      %s21 = ssub.s32 %s16, 1
      %s22 = ssub.s32 %s16, 2
      %s23 = sadd.s32 %s16, 1
      %s24 = ssub.s32 %s16, %s23
      %p25 = scmp.eq.s32.totalorder %s24, 0
      %s27 = sadd.s32 %s26, 1
      %s28 = scalar_select %p25, %s26, %s27
      %p31 = pneg %p25
      %p32 = scmp.eq.s32.totalorder %s16, 1
      %p33 = por %p31, %p32
      %p34 = scmp.ne.s32.totalorder %s26, %s29
      %p35 = scmp.eq.s32.totalorder %s16, 0
      %p36 = por %p34, %p35
      %p37 = scmp.ne.s32.totalorder %s26, %s29
      %p38 = scmp.eq.s32.totalorder %s21, 1
      %p39 = por %p37, %p38
      %p40 = scmp.ne.s32.totalorder %s29, %s30
      %p41 = scmp.eq.s32.totalorder %s21, 0
      %p42 = por %p40, %p41
      %p43 = scmp.ne.s32.totalorder %s29, %s30
      %p44 = scmp.eq.s32.totalorder %s22, 1
      %p45 = por %p43, %p44
      %p47 = scmp.ne.s32.totalorder %s30, %s46
      %p48 = scmp.eq.s32.totalorder %s22, 0
      %p49 = por %p47, %p48
      %s51 = sadd.s32 %s50, 1
      %p54 = scmp.eq.s32.totalorder %s16, 1
      %p55 = scmp.ne.s32.totalorder %s50, %s52
      %p56 = scmp.eq.s32.totalorder %s16, 0
      %p57 = por %p55, %p56
      %p58 = scmp.ne.s32.totalorder %s50, %s52
      %p59 = scmp.eq.s32.totalorder %s21, 1
      %p60 = por %p58, %p59
      %p61 = scmp.ne.s32.totalorder %s52, %s53
      %p62 = scmp.eq.s32.totalorder %s21, 0
      %p63 = por %p61, %p62
      %p64 = scmp.ne.s32.totalorder %s52, %s53
      %p65 = scmp.eq.s32.totalorder %s22, 1
      %p66 = por %p64, %p65
      %p68 = scmp.ne.s32.totalorder %s53, %s67
      %p69 = scmp.eq.s32.totalorder %s22, 0
      %p70 = por %p68, %p69
      %s72 = sadd.s32 %s71, 1
      %p75 = scmp.eq.s32.totalorder %s16, 1
      %p76 = scmp.ne.s32.totalorder %s71, %s73
      %p77 = scmp.eq.s32.totalorder %s16, 0
      %p78 = por %p76, %p77
      %p79 = scmp.ne.s32.totalorder %s71, %s73
      %p80 = scmp.eq.s32.totalorder %s21, 1
      %p81 = por %p79, %p80
      %p82 = scmp.ne.s32.totalorder %s73, %s74
      %p83 = scmp.eq.s32.totalorder %s21, 0
      %p84 = por %p82, %p83
      %p85 = scmp.ne.s32.totalorder %s73, %s74
      %p86 = scmp.eq.s32.totalorder %s22, 1
      %p87 = por %p85, %p86
      %p89 = scmp.ne.s32.totalorder %s74, %s88
      %p90 = scmp.eq.s32.totalorder %s22, 0
      %p91 = por %p89, %p90
      %s93 = sadd.s32 %s92, 1
      %p96 = scmp.eq.s32.totalorder %s16, 1
      %p97 = scmp.ne.s32.totalorder %s92, %s94
      %p98 = scmp.eq.s32.totalorder %s16, 0
      %p99 = por %p97, %p98
      %p100 = scmp.ne.s32.totalorder %s92, %s94
      %p101 = scmp.eq.s32.totalorder %s21, 1
      %p102 = por %p100, %p101
      %p103 = scmp.ne.s32.totalorder %s94, %s95
      %p104 = scmp.eq.s32.totalorder %s21, 0
      %p105 = por %p103, %p104
      %p106 = scmp.ne.s32.totalorder %s94, %s95
      %p107 = scmp.eq.s32.totalorder %s22, 1
      %p108 = por %p106, %p107
      %p110 = scmp.ne.s32.totalorder %s95, %s109
      %p111 = scmp.eq.s32.totalorder %s22, 0
      %p112 = por %p110, %p111
      %s114 = sadd.s32 %s113, 1
      %p117 = scmp.eq.s32.totalorder %s16, 1
      %p118 = scmp.ne.s32.totalorder %s113, %s115
      %p119 = scmp.eq.s32.totalorder %s16, 0
      %p120 = por %p118, %p119
      %p121 = scmp.ne.s32.totalorder %s113, %s115
      %p122 = scmp.eq.s32.totalorder %s21, 1
      %p123 = por %p121, %p122
      %p124 = scmp.ne.s32.totalorder %s115, %s116
      %p125 = scmp.eq.s32.totalorder %s21, 0
      %p126 = por %p124, %p125
      %p127 = scmp.ne.s32.totalorder %s115, %s116
      %p128 = scmp.eq.s32.totalorder %s22, 1
      %p129 = por %p127, %p128
      %p131 = scmp.ne.s32.totalorder %s116, %s130
      %p132 = scmp.eq.s32.totalorder %s22, 0
      %p133 = por %p131, %p132
      %s135 = sadd.s32 %s134, 1
      %p138 = scmp.eq.s32.totalorder %s16, 1
      %p139 = scmp.ne.s32.totalorder %s134, %s136
      %p140 = scmp.eq.s32.totalorder %s16, 0
      %p141 = por %p139, %p140
      %p142 = scmp.ne.s32.totalorder %s134, %s136
      %p143 = scmp.eq.s32.totalorder %s21, 1
      %p144 = por %p142, %p143
      %p145 = scmp.ne.s32.totalorder %s136, %s137
      %p146 = scmp.eq.s32.totalorder %s21, 0
      %p147 = por %p145, %p146
      %p148 = scmp.ne.s32.totalorder %s136, %s137
      %p149 = scmp.eq.s32.totalorder %s22, 1
      %p150 = por %p148, %p149
      %p152 = scmp.ne.s32.totalorder %s137, %s151
      %p153 = scmp.eq.s32.totalorder %s22, 0
      %p154 = por %p152, %p153
      %s156 = sadd.s32 %s155, 1
      %p159 = scmp.eq.s32.totalorder %s16, 1
      %p160 = scmp.ne.s32.totalorder %s155, %s157
      %p161 = scmp.eq.s32.totalorder %s16, 0
      %p162 = por %p160, %p161
      %p163 = scmp.ne.s32.totalorder %s155, %s157
      %p164 = scmp.eq.s32.totalorder %s21, 1
      %p165 = por %p163, %p164
      %p166 = scmp.ne.s32.totalorder %s157, %s158
      %p167 = scmp.eq.s32.totalorder %s21, 0
      %p168 = por %p166, %p167
      %p169 = scmp.ne.s32.totalorder %s157, %s158
      %p170 = scmp.eq.s32.totalorder %s22, 1
      %p171 = por %p169, %p170
      %p173 = scmp.ne.s32.totalorder %s158, %s172
      %p174 = scmp.eq.s32.totalorder %s22, 0
      %p175 = por %p173, %p174
      %s176 = ssub.s32 %s16, %s23
      %p177 = scmp.eq.s32.totalorder %s176, 0
      %s179 = sadd.s32 %s178, 1
      %s180 = scalar_select %p177, %s178, %s179
      %p183 = pneg %p177
      %p184 = scmp.eq.s32.totalorder %s16, 1
      %p185 = por %p183, %p184
      %p186 = scmp.ne.s32.totalorder %s178, %s181
      %p187 = scmp.eq.s32.totalorder %s16, 0
      %p188 = por %p186, %p187
      %p189 = scmp.ne.s32.totalorder %s178, %s181
      %p190 = scmp.eq.s32.totalorder %s21, 1
      %p191 = por %p189, %p190
      %p192 = scmp.ne.s32.totalorder %s181, %s182
      %p193 = scmp.eq.s32.totalorder %s21, 0
      %p194 = por %p192, %p193
      %p195 = scmp.ne.s32.totalorder %s181, %s182
      %p196 = scmp.eq.s32.totalorder %s22, 1
      %p197 = por %p195, %p196
      %p199 = scmp.ne.s32.totalorder %s182, %s198
      %p200 = scmp.eq.s32.totalorder %s22, 0
      %p201 = por %p199, %p200
      %p202 = scmp.le.s32.totalorder 1, %s16
      %p203 = scmp.lt.s32.totalorder %s16, 3
      %p204 = pnand %p202, %p203
      %p205 = pneg %p204
      // Predicated region
      $region9: #{bottleneck_forward.1} parent=5 // pred_check
        _
      $region10: #{bottleneck_forward.1} parent=5 // pred_check_branch
        %207 = sbr.rel (%p204) target = $region12
      $region11: #{bottleneck_forward.1} parent=5 // pred_region
        %s208 = ssub.s32 %s16, 1
        // Predicated region
        $region13: #{bottleneck_forward.1} parent=11 // pred_check
          %p209 = pneg %p63
        $region14: #{bottleneck_forward.1} parent=11 // pred_check_branch
          %211 = sbr.rel (%p209) target = $region16
        $region15: #{bottleneck_forward.1} parent=11 // pred_region
          _
        $region16: #{bottleneck_forward.1} parent=11 // pred_fallthru
          _
        // Predicated region
        $region17: #{bottleneck_forward.1} parent=11 // pred_check
          %p212 = pneg %p84
        $region18: #{bottleneck_forward.1} parent=11 // pred_check_branch
          %214 = sbr.rel (%p212) target = $region20
        $region19: #{bottleneck_forward.1} parent=11 // pred_region
          _
        $region20: #{bottleneck_forward.1} parent=11 // pred_fallthru
          _
        // Predicated region
        $region21: #{bottleneck_forward.1} parent=11 // pred_check
          %p215 = pneg %p105
        $region22: #{bottleneck_forward.1} parent=11 // pred_check_branch
          %217 = sbr.rel (%p215) target = $region24
        $region23: #{bottleneck_forward.1} parent=11 // pred_region
          _
        $region24: #{bottleneck_forward.1} parent=11 // pred_fallthru
          _
        // Predicated region
        $region25: #{bottleneck_forward.1} parent=11 // pred_check
          %p218 = pneg %p126
        $region26: #{bottleneck_forward.1} parent=11 // pred_check_branch
          %220 = sbr.rel (%p218) target = $region28
        $region27: #{bottleneck_forward.1} parent=11 // pred_region
          _
        $region28: #{bottleneck_forward.1} parent=11 // pred_fallthru
          _
        // Predicated region
        $region29: #{bottleneck_forward.1} parent=11 // pred_check
          %p221 = pneg %p147
        $region30: #{bottleneck_forward.1} parent=11 // pred_check_branch
          %223 = sbr.rel (%p221) target = $region32
        $region31: #{bottleneck_forward.1} parent=11 // pred_region
          _
        $region32: #{bottleneck_forward.1} parent=11 // pred_fallthru
          _
        // Predicated region
        $region33: #{bottleneck_forward.1} parent=11 // pred_check
          %p224 = pneg %p168
        $region34: #{bottleneck_forward.1} parent=11 // pred_check_branch
          %226 = sbr.rel (%p224) target = $region36
        $region35: #{bottleneck_forward.1} parent=11 // pred_region
          _
        $region36: #{bottleneck_forward.1} parent=11 // pred_fallthru
          _
      $region12: #{bottleneck_forward.1} parent=5 // pred_fallthru
        _
      %p227 = scmp.lt.s32.totalorder %s16, 2
      // Predicated region
      $region37: #{bottleneck_forward.1} parent=5 // pred_check
        %p228 = pneg %p227
      $region38: #{bottleneck_forward.1} parent=5 // pred_check_branch
        %230 = sbr.rel (%p228) target = $region40
      $region39: #{bottleneck_forward.1} parent=5 // pred_region
        // Predicated region
        $region41: #{bottleneck_forward.1} parent=39 // pred_check
          %p231 = pneg %p36
        $region42: #{bottleneck_forward.1} parent=39 // pred_check_branch
          %233 = sbr.rel (%p231) target = $region44
        $region43: #{bottleneck_forward.1} parent=39 // pred_region
          %p234 = scmp.lt.s32.totalorder %s16, 1
          %s235 = scalar_select %p234, %s16, 1
          %s236 = smul.addr %s235, 32
          %s237 = smul.addr %s236, 8
          %s238 = scalar_lea.vmem %s0, %s237
        $region44: #{bottleneck_forward.1} parent=39 // pred_fallthru
          _
      $region40: #{bottleneck_forward.1} parent=5 // pred_fallthru
        _
      %p239 = scmp.le.s32.totalorder 1, %s16
      %p240 = scmp.lt.s32.totalorder %s16, 3
      %p241 = pnand %p239, %p240
      %p242 = pneg %p241
      // Predicated region
      $region45: #{bottleneck_forward.1} parent=5 // pred_check
        _
      $region46: #{bottleneck_forward.1} parent=5 // pred_check_branch
        %244 = sbr.rel (%p241) target = $region48
      $region47: #{bottleneck_forward.1} parent=5 // pred_region
        %s245 = ssub.s32 %s16, 1
        %p246 = scmp.lt.s32.totalorder %s21, 1
        %s247 = scalar_select %p246, %s21, 1
        %s248 = smul.addr %s247, 32
        %s249 = smul.addr %s248, 8
        %s250 = scalar_lea.vmem %s0, %s249
        %p251 = pneg %p42
        %p252 = pneg %p39
        %p253 = pneg %p63
        %p254 = pneg %p60
        %p255 = pneg %p84
        %p256 = pneg %p81
        %p257 = pneg %p105
        %p258 = pneg %p102
        %p259 = pneg %p126
        %p260 = pneg %p123
        %p261 = pneg %p147
        %p262 = pneg %p144
        %p263 = pneg %p168
        %p264 = pneg %p165
        %p265 = pneg %p194
        %p266 = pneg %p191
        %s267 = sand.u32 %s181, 1
        %s268 = scalar_lea.sflag [#allocation4], %s267
        %s269 = sand.u32 %s181, 1
        %s270 = smul.addr %s269, 256
        %s271 = scalar_lea.vmem [#allocation3], %s270
        %p272 = scmp.lt.s32.totalorder %s21, 1
        %s273 = scalar_select %p272, %s21, 1
        %s274 = smul.addr %s273, 32
        %s275 = smul.addr %s274, 8
        %s276 = scalar_lea.vmem %s0, %s275
        %v277 = vld [vmem:[%s276] sm:$0xff]
        %v278 = vld [vmem:[%s276 + $0x8] sm:$0xff]
        %v279 = vld [vmem:[%s276 + $0x10] sm:$0xff]
        %v280 = vld [vmem:[%s276 + $0x18] sm:$0xff]
        %v281 = vld [vmem:[%s276 + $0x20] sm:$0xff]
        %v282 = vld [vmem:[%s276 + $0x28] sm:$0xff]
        %v283 = vld [vmem:[%s276 + $0x30] sm:$0xff]
        %v284 = vld [vmem:[%s276 + $0x38] sm:$0xff]
        %v285 = vld [vmem:[%s276 + $0x40] sm:$0xff]
        %v286 = vld [vmem:[%s276 + $0x48] sm:$0xff]
        %v287 = vld [vmem:[%s276 + $0x50] sm:$0xff]
        %v288 = vld [vmem:[%s276 + $0x58] sm:$0xff]
        %v289 = vld [vmem:[%s276 + $0x60] sm:$0xff]
        %v290 = vld [vmem:[%s276 + $0x68] sm:$0xff]
        %v291 = vld [vmem:[%s276 + $0x70] sm:$0xff]
        %v292 = vld [vmem:[%s276 + $0x78] sm:$0xff]
        %v293 = vld [vmem:[%s276 + $0x80] sm:$0xff]
        %v294 = vld [vmem:[%s276 + $0x88] sm:$0xff]
        %v295 = vld [vmem:[%s276 + $0x90] sm:$0xff]
        %v296 = vld [vmem:[%s276 + $0x98] sm:$0xff]
        %v297 = vld [vmem:[%s276 + $0xa0] sm:$0xff]
        %v298 = vld [vmem:[%s276 + $0xa8] sm:$0xff]
        %v299 = vld [vmem:[%s276 + $0xb0] sm:$0xff]
        %v300 = vld [vmem:[%s276 + $0xb8] sm:$0xff]
        %v301 = vld [vmem:[%s276 + $0xc0] sm:$0xff]
        %v302 = vld [vmem:[%s276 + $0xc8] sm:$0xff]
        %v303 = vld [vmem:[%s276 + $0xd0] sm:$0xff]
        %v304 = vld [vmem:[%s276 + $0xd8] sm:$0xff]
        %v305 = vld [vmem:[%s276 + $0xe0] sm:$0xff]
        %v306 = vld [vmem:[%s276 + $0xe8] sm:$0xff]
        %v307 = vld [vmem:[%s276 + $0xf0] sm:$0xff]
        %v308 = vld [vmem:[%s276 + $0xf8] sm:$0xff]
        %v309 = vld [vmem:[%s1] sm:$0xff]
        %v310 = vld [vmem:[%s1 + $0x8] sm:$0xff]
        %v311 = vld [vmem:[%s1 + $0x10] sm:$0xff]
        %v312 = vld [vmem:[%s1 + $0x18] sm:$0xff]
        %v313 = vld [vmem:[%s1 + $0x20] sm:$0xff]
        %v314 = vld [vmem:[%s1 + $0x28] sm:$0xff]
        %v315 = vld [vmem:[%s1 + $0x30] sm:$0xff]
        %v316 = vld [vmem:[%s1 + $0x38] sm:$0xff]
        %v317 = vld [vmem:[%s1 + $0x40] sm:$0xff]
        %v318 = vld [vmem:[%s1 + $0x48] sm:$0xff]
        %v319 = vld [vmem:[%s1 + $0x50] sm:$0xff]
        %v320 = vld [vmem:[%s1 + $0x58] sm:$0xff]
        %v321 = vld [vmem:[%s1 + $0x60] sm:$0xff]
        %v322 = vld [vmem:[%s1 + $0x68] sm:$0xff]
        %v323 = vld [vmem:[%s1 + $0x70] sm:$0xff]
        %v324 = vld [vmem:[%s1 + $0x78] sm:$0xff]
        %v325 = vld [vmem:[%s4] sm:$0x1]
        %v327 = vlaneseq
        %v328 = vshrl.u32 %v327, 7
        %v329 = vsub.s32 0, %v328
        %v330 = vrot.slane %v325, %v329
        %332 = vmatprep.subr.mxu0 0.0
        %333 = vmatpush1.msra.mxu0 %v309
        %334 = vmatprep.subr.mxu0 0.0
        %335 = vmatpush1.msra.mxu0 %v310
        %336 = vmatprep.subr.mxu0 0.0
        %337 = vmatpush1.msra.mxu0 %v311
        %338 = vmatprep.subr.mxu0 0.0
        %339 = vmatpush1.msra.mxu0 %v312
        %340 = vmatprep.subr.mxu0 0.0
        %341 = vmatpush1.msra.mxu0 %v313
        %342 = vmatprep.subr.mxu0 0.0
        %343 = vmatpush1.msra.mxu0 %v314
        %344 = vmatprep.subr.mxu0 0.0
        %345 = vmatpush1.msra.mxu0 %v315
        %346 = vmatprep.subr.mxu0 0.0
        %347 = vmatpush1.msra.mxu0 %v316
        %348 = vmatprep.subr.mxu0 0.0
        %349 = vmatpush1.msra.mxu0 %v317
        %350 = vmatprep.subr.mxu0 0.0
        %351 = vmatpush1.msra.mxu0 %v318
        %352 = vmatprep.subr.mxu0 0.0
        %353 = vmatpush1.msra.mxu0 %v319
        %354 = vmatprep.subr.mxu0 0.0
        %355 = vmatpush1.msra.mxu0 %v320
        %356 = vmatprep.subr.mxu0 0.0
        %357 = vmatpush1.msra.mxu0 %v321
        %358 = vmatprep.subr.mxu0 0.0
        %359 = vmatpush1.msra.mxu0 %v322
        %360 = vmatprep.subr.mxu0 0.0
        %361 = vmatpush1.msra.mxu0 %v323
        %362 = vmatprep.subr.mxu0 0.0
        %363 = vmatpush1.msra.mxu0 %v324
        %364 = vmatprep.subr.mxu0 0.0
        %365 = vmatpush1.msra.mxu0 0.0
        %366 = vmatprep.subr.mxu0 0.0
        %367 = vmatpush1.msra.mxu0 0.0
        %368 = vmatprep.subr.mxu0 0.0
        %369 = vmatpush1.msra.mxu0 0.0
        %370 = vmatprep.subr.mxu0 0.0
        %371 = vmatpush1.msra.mxu0 0.0
        %372 = vmatprep.subr.mxu0 0.0
        %373 = vmatpush1.msra.mxu0 0.0
        %374 = vmatprep.subr.mxu0 0.0
        %375 = vmatpush1.msra.mxu0 0.0
        %376 = vmatprep.subr.mxu0 0.0
        %377 = vmatpush1.msra.mxu0 0.0
        %378 = vmatprep.subr.mxu0 0.0
        %379 = vmatpush1.msra.mxu0 0.0
        %380 = vmatprep.subr.mxu0 0.0
        %381 = vmatpush1.msra.mxu0 0.0
        %382 = vmatprep.subr.mxu0 0.0
        %383 = vmatpush1.msra.mxu0 0.0
        %384 = vmatprep.subr.mxu0 0.0
        %385 = vmatpush1.msra.mxu0 0.0
        %386 = vmatprep.subr.mxu0 0.0
        %387 = vmatpush1.msra.mxu0 0.0
        %388 = vmatprep.subr.mxu0 0.0
        %389 = vmatpush1.msra.mxu0 0.0
        %390 = vmatprep.subr.mxu0 0.0
        %391 = vmatpush1.msra.mxu0 0.0
        %392 = vmatprep.subr.mxu0 0.0
        %393 = vmatpush1.msra.mxu0 0.0
        %394 = vmatprep.subr.mxu0 0.0
        %395 = vmatpush1.msra.mxu0 0.0
        %396 = vmatprep.mubr.f32.mxu0 0.0
        %397 = vmatmul.mubr.f32.gmra.mrb[0].mxu0 %v277
        %v398 = vpop.f32.mrb[0].mxu0
        %v399 = vadd.f32 %v330, %v398
        %v400 = vpop.f32.mrb[0].mxu0
        %401 = vmatprep.mubr.f32.mxu0 0.0
        %402 = vmatmul.mubr.f32.gmra.mrb[0].mxu0 %v278
        %v403 = vpop.f32.mrb[0].mxu0
        %v404 = vadd.f32 %v330, %v403
        %v405 = vpop.f32.mrb[0].mxu0
        %406 = vmatprep.mubr.f32.mxu0 0.0
        %407 = vmatmul.mubr.f32.gmra.mrb[0].mxu0 %v279
        %v408 = vpop.f32.mrb[0].mxu0
        %v409 = vadd.f32 %v330, %v408
        %v410 = vpop.f32.mrb[0].mxu0
        %411 = vmatprep.mubr.f32.mxu0 0.0
        %412 = vmatmul.mubr.f32.gmra.mrb[0].mxu0 %v280
        %v413 = vpop.f32.mrb[0].mxu0
        %v414 = vadd.f32 %v330, %v413
        %v415 = vpop.f32.mrb[0].mxu0
        %416 = vmatprep.mubr.f32.mxu0 0.0
        %417 = vmatmul.mubr.f32.gmra.mrb[0].mxu0 %v281
        %v418 = vpop.f32.mrb[0].mxu0
        %v419 = vadd.f32 %v330, %v418
        %v420 = vpop.f32.mrb[0].mxu0
        %421 = vmatprep.mubr.f32.mxu0 0.0
        %422 = vmatmul.mubr.f32.gmra.mrb[0].mxu0 %v282
        %v423 = vpop.f32.mrb[0].mxu0
        %v424 = vadd.f32 %v330, %v423
        %v425 = vpop.f32.mrb[0].mxu0
        %426 = vmatprep.mubr.f32.mxu0 0.0
        %427 = vmatmul.mubr.f32.gmra.mrb[0].mxu0 %v283
        %v428 = vpop.f32.mrb[0].mxu0
        %v429 = vadd.f32 %v330, %v428
        %v430 = vpop.f32.mrb[0].mxu0
        %431 = vmatprep.mubr.f32.mxu0 0.0
        %432 = vmatmul.mubr.f32.gmra.mrb[0].mxu0 %v284
        %v433 = vpop.f32.mrb[0].mxu0
        %v434 = vadd.f32 %v330, %v433
        %v435 = vpop.f32.mrb[0].mxu0
        %436 = vmatprep.mubr.f32.mxu0 0.0
        %437 = vmatmul.mubr.f32.gmra.mrb[0].mxu0 %v285
        %v438 = vpop.f32.mrb[0].mxu0
        %v439 = vadd.f32 %v330, %v438
        %v440 = vpop.f32.mrb[0].mxu0
        %441 = vmatprep.mubr.f32.mxu0 0.0
        %442 = vmatmul.mubr.f32.gmra.mrb[0].mxu0 %v286
        %v443 = vpop.f32.mrb[0].mxu0
        %v444 = vadd.f32 %v330, %v443
        %v445 = vpop.f32.mrb[0].mxu0
        %446 = vmatprep.mubr.f32.mxu0 0.0
        %447 = vmatmul.mubr.f32.gmra.mrb[0].mxu0 %v287
        %v448 = vpop.f32.mrb[0].mxu0
        %v449 = vadd.f32 %v330, %v448
        %v450 = vpop.f32.mrb[0].mxu0
        %451 = vmatprep.mubr.f32.mxu0 0.0
        %452 = vmatmul.mubr.f32.gmra.mrb[0].mxu0 %v288
        %v453 = vpop.f32.mrb[0].mxu0
        %v454 = vadd.f32 %v330, %v453
        %v455 = vpop.f32.mrb[0].mxu0
        %456 = vmatprep.mubr.f32.mxu0 0.0
        %457 = vmatmul.mubr.f32.gmra.mrb[0].mxu0 %v289
        %v458 = vpop.f32.mrb[0].mxu0
        %v459 = vadd.f32 %v330, %v458
        %v460 = vpop.f32.mrb[0].mxu0
        %461 = vmatprep.mubr.f32.mxu0 0.0
        %462 = vmatmul.mubr.f32.gmra.mrb[0].mxu0 %v290
        %v463 = vpop.f32.mrb[0].mxu0
        %v464 = vadd.f32 %v330, %v463
        %v465 = vpop.f32.mrb[0].mxu0
        %466 = vmatprep.mubr.f32.mxu0 0.0
        %467 = vmatmul.mubr.f32.gmra.mrb[0].mxu0 %v291
        %v468 = vpop.f32.mrb[0].mxu0
        %v469 = vadd.f32 %v330, %v468
        %v470 = vpop.f32.mrb[0].mxu0
        %471 = vmatprep.mubr.f32.mxu0 0.0
        %472 = vmatmul.mubr.f32.gmra.mrb[0].mxu0 %v292
        %v473 = vpop.f32.mrb[0].mxu0
        %v474 = vadd.f32 %v330, %v473
        %v475 = vpop.f32.mrb[0].mxu0
        %476 = vmatprep.mubr.f32.mxu0 0.0
        %477 = vmatmul.mubr.f32.gmra.mrb[0].mxu0 %v293
        %v478 = vpop.f32.mrb[0].mxu0
        %v479 = vadd.f32 %v330, %v478
        %v480 = vpop.f32.mrb[0].mxu0
        %481 = vmatprep.mubr.f32.mxu0 0.0
        %482 = vmatmul.mubr.f32.gmra.mrb[0].mxu0 %v294
        %v483 = vpop.f32.mrb[0].mxu0
        %v484 = vadd.f32 %v330, %v483
        %v485 = vpop.f32.mrb[0].mxu0
        %486 = vmatprep.mubr.f32.mxu0 0.0
        %487 = vmatmul.mubr.f32.gmra.mrb[0].mxu0 %v295
        %v488 = vpop.f32.mrb[0].mxu0
        %v489 = vadd.f32 %v330, %v488
        %v490 = vpop.f32.mrb[0].mxu0
        %491 = vmatprep.mubr.f32.mxu0 0.0
        %492 = vmatmul.mubr.f32.gmra.mrb[0].mxu0 %v296
        %v493 = vpop.f32.mrb[0].mxu0
        %v494 = vadd.f32 %v330, %v493
        %v495 = vpop.f32.mrb[0].mxu0
        %496 = vmatprep.mubr.f32.mxu0 0.0
        %497 = vmatmul.mubr.f32.gmra.mrb[0].mxu0 %v297
        %v498 = vpop.f32.mrb[0].mxu0
        %v499 = vadd.f32 %v330, %v498
        %v500 = vpop.f32.mrb[0].mxu0
        %501 = vmatprep.mubr.f32.mxu0 0.0
        %502 = vmatmul.mubr.f32.gmra.mrb[0].mxu0 %v298
        %v503 = vpop.f32.mrb[0].mxu0
        %v504 = vadd.f32 %v330, %v503
        %v505 = vpop.f32.mrb[0].mxu0
        %506 = vmatprep.mubr.f32.mxu0 0.0
        %507 = vmatmul.mubr.f32.gmra.mrb[0].mxu0 %v299
        %v508 = vpop.f32.mrb[0].mxu0
        %v509 = vadd.f32 %v330, %v508
        %v510 = vpop.f32.mrb[0].mxu0
        %511 = vmatprep.mubr.f32.mxu0 0.0
        %512 = vmatmul.mubr.f32.gmra.mrb[0].mxu0 %v300
        %v513 = vpop.f32.mrb[0].mxu0
        %v514 = vadd.f32 %v330, %v513
        %v515 = vpop.f32.mrb[0].mxu0
        %516 = vmatprep.mubr.f32.mxu0 0.0
        %517 = vmatmul.mubr.f32.gmra.mrb[0].mxu0 %v301
        %v518 = vpop.f32.mrb[0].mxu0
        %v519 = vadd.f32 %v330, %v518
        %v520 = vpop.f32.mrb[0].mxu0
        %521 = vmatprep.mubr.f32.mxu0 0.0
        %522 = vmatmul.mubr.f32.gmra.mrb[0].mxu0 %v302
        %v523 = vpop.f32.mrb[0].mxu0
        %v524 = vadd.f32 %v330, %v523
        %v525 = vpop.f32.mrb[0].mxu0
        %526 = vmatprep.mubr.f32.mxu0 0.0
        %527 = vmatmul.mubr.f32.gmra.mrb[0].mxu0 %v303
        %v528 = vpop.f32.mrb[0].mxu0
        %v529 = vadd.f32 %v330, %v528
        %v530 = vpop.f32.mrb[0].mxu0
        %531 = vmatprep.mubr.f32.mxu0 0.0
        %532 = vmatmul.mubr.f32.gmra.mrb[0].mxu0 %v304
        %v533 = vpop.f32.mrb[0].mxu0
        %v534 = vadd.f32 %v330, %v533
        %v535 = vpop.f32.mrb[0].mxu0
        %536 = vmatprep.mubr.f32.mxu0 0.0
        %537 = vmatmul.mubr.f32.gmra.mrb[0].mxu0 %v305
        %v538 = vpop.f32.mrb[0].mxu0
        %v539 = vadd.f32 %v330, %v538
        %v540 = vpop.f32.mrb[0].mxu0
        %541 = vmatprep.mubr.f32.mxu0 0.0
        %542 = vmatmul.mubr.f32.gmra.mrb[0].mxu0 %v306
        %v543 = vpop.f32.mrb[0].mxu0
        %v544 = vadd.f32 %v330, %v543
        %v545 = vpop.f32.mrb[0].mxu0
        %546 = vmatprep.mubr.f32.mxu0 0.0
        %547 = vmatmul.mubr.f32.gmra.mrb[0].mxu0 %v307
        %v548 = vpop.f32.mrb[0].mxu0
        %v549 = vadd.f32 %v330, %v548
        %v550 = vpop.f32.mrb[0].mxu0
        %551 = vmatprep.mubr.f32.mxu0 0.0
        %552 = vmatmul.mubr.f32.gmra.mrb[0].mxu0 %v308
        %v553 = vpop.f32.mrb[0].mxu0
        %v554 = vadd.f32 %v330, %v553
        %v555 = vpop.f32.mrb[0].mxu0
        %556 = vdwg.mxu0
        %v557 = vmax.f32 %v399, 0.0
        %v558 = vmax.f32 %v404, 0.0
        %v559 = vmax.f32 %v409, 0.0
        %v560 = vmax.f32 %v414, 0.0
        %v561 = vmax.f32 %v419, 0.0
        %v562 = vmax.f32 %v424, 0.0
        %v563 = vmax.f32 %v429, 0.0
        %v564 = vmax.f32 %v434, 0.0
        %v565 = vmax.f32 %v439, 0.0
        %v566 = vmax.f32 %v444, 0.0
        %v567 = vmax.f32 %v449, 0.0
        %v568 = vmax.f32 %v454, 0.0
        %v569 = vmax.f32 %v459, 0.0
        %v570 = vmax.f32 %v464, 0.0
        %v571 = vmax.f32 %v469, 0.0
        %v572 = vmax.f32 %v474, 0.0
        %v573 = vmax.f32 %v479, 0.0
        %v574 = vmax.f32 %v484, 0.0
        %v575 = vmax.f32 %v489, 0.0
        %v576 = vmax.f32 %v494, 0.0
        %v577 = vmax.f32 %v499, 0.0
        %v578 = vmax.f32 %v504, 0.0
        %v579 = vmax.f32 %v509, 0.0
        %v580 = vmax.f32 %v514, 0.0
        %v581 = vmax.f32 %v519, 0.0
        %v582 = vmax.f32 %v524, 0.0
        %v583 = vmax.f32 %v529, 0.0
        %v584 = vmax.f32 %v534, 0.0
        %v585 = vmax.f32 %v539, 0.0
        %v586 = vmax.f32 %v544, 0.0
        %v587 = vmax.f32 %v549, 0.0
        %v588 = vmax.f32 %v554, 0.0
        %v589 = vlaneseq
        %v590 = vshrl.u32 %v589, 7
        %v591 = vadd.s32 %v590, 8
        %v592 = vadd.s32 %v590, 16
        %v593 = vadd.s32 %v590, 24
        %v594 = vadd.s32 %v590, 32
        %v595 = vadd.s32 %v590, 40
        %v596 = vadd.s32 %v590, 48
        %v597 = vadd.s32 %v590, 56
        %v598 = vadd.s32 %v590, 64
        %v599 = vadd.s32 %v590, 72
        %v600 = vadd.s32 %v590, 80
        %v601 = vadd.s32 %v590, 88
        %v602 = vadd.s32 %v590, 96
        %v603 = vadd.s32 %v590, 104
        %v604 = vadd.s32 %v590, 112
        %v605 = vadd.s32 %v590, 120
        %v606 = vadd.s32 %v590, 128
        %v607 = vadd.s32 %v590, 136
        %v608 = vadd.s32 %v590, 144
        %v609 = vadd.s32 %v590, 152
        %v610 = vadd.s32 %v590, 160
        %v611 = vadd.s32 %v590, 168
        %v612 = vadd.s32 %v590, 176
        %v613 = vadd.s32 %v590, 184
        %v614 = vadd.s32 %v590, 192
        %v615 = vadd.s32 %v590, 200
        %v616 = vadd.s32 %v590, 208
        %v617 = vadd.s32 %v590, 216
        %v618 = vadd.s32 %v590, 224
        %v619 = vadd.s32 %v590, 232
        %v620 = vadd.s32 %v590, 240
        %v621 = vadd.s32 %v590, 248
        %vm622 = vcmp.lt.s32.totalorder %v590, 0
        %v623 = vsub.s32 0, %v590
        %v624 = vsel %vm622, %v623, %v590
        %v625 = vshrl.u32 %v624, 4
        %v626 = vand.u32 %v624, 15
        %v627 = vsub.s32 0, %v626
        %v628 = vsel %vm622, %v627, %v626
        %vm629 = vcmp.lt.s32.totalorder %v591, 0
        %v630 = vsub.s32 0, %v591
        %v631 = vsel %vm629, %v630, %v591
        %v632 = vshrl.u32 %v631, 4
        %v633 = vand.u32 %v631, 15
        %v634 = vsub.s32 0, %v633
        %v635 = vsel %vm629, %v634, %v633
        %vm636 = vcmp.lt.s32.totalorder %v592, 0
        %v637 = vsub.s32 0, %v592
        %v638 = vsel %vm636, %v637, %v592
        %v639 = vshrl.u32 %v638, 4
        %v640 = vand.u32 %v638, 15
        %v641 = vsub.s32 0, %v640
        %v642 = vsel %vm636, %v641, %v640
        %vm643 = vcmp.lt.s32.totalorder %v593, 0
        %v644 = vsub.s32 0, %v593
        %v645 = vsel %vm643, %v644, %v593
        %v646 = vshrl.u32 %v645, 4
        %v647 = vand.u32 %v645, 15
        %v648 = vsub.s32 0, %v647
        %v649 = vsel %vm643, %v648, %v647
        %vm650 = vcmp.lt.s32.totalorder %v594, 0
        %v651 = vsub.s32 0, %v594
        %v652 = vsel %vm650, %v651, %v594
        %v653 = vshrl.u32 %v652, 4
        %v654 = vand.u32 %v652, 15
        %v655 = vsub.s32 0, %v654
        %v656 = vsel %vm650, %v655, %v654
        %vm657 = vcmp.lt.s32.totalorder %v595, 0
        %v658 = vsub.s32 0, %v595
        %v659 = vsel %vm657, %v658, %v595
        %v660 = vshrl.u32 %v659, 4
        %v661 = vand.u32 %v659, 15
        %v662 = vsub.s32 0, %v661
        %v663 = vsel %vm657, %v662, %v661
        %vm664 = vcmp.lt.s32.totalorder %v596, 0
        %v665 = vsub.s32 0, %v596
        %v666 = vsel %vm664, %v665, %v596
        %v667 = vshrl.u32 %v666, 4
        %v668 = vand.u32 %v666, 15
        %v669 = vsub.s32 0, %v668
        %v670 = vsel %vm664, %v669, %v668
        %vm671 = vcmp.lt.s32.totalorder %v597, 0
        %v672 = vsub.s32 0, %v597
        %v673 = vsel %vm671, %v672, %v597
        %v674 = vshrl.u32 %v673, 4
        %v675 = vand.u32 %v673, 15
        %v676 = vsub.s32 0, %v675
        %v677 = vsel %vm671, %v676, %v675
        %vm678 = vcmp.lt.s32.totalorder %v598, 0
        %v679 = vsub.s32 0, %v598
        %v680 = vsel %vm678, %v679, %v598
        %v681 = vshrl.u32 %v680, 4
        %v682 = vand.u32 %v680, 15
        %v683 = vsub.s32 0, %v682
        %v684 = vsel %vm678, %v683, %v682
        %vm685 = vcmp.lt.s32.totalorder %v599, 0
        %v686 = vsub.s32 0, %v599
        %v687 = vsel %vm685, %v686, %v599
        %v688 = vshrl.u32 %v687, 4
        %v689 = vand.u32 %v687, 15
        %v690 = vsub.s32 0, %v689
        %v691 = vsel %vm685, %v690, %v689
        %vm692 = vcmp.lt.s32.totalorder %v600, 0
        %v693 = vsub.s32 0, %v600
        %v694 = vsel %vm692, %v693, %v600
        %v695 = vshrl.u32 %v694, 4
        %v696 = vand.u32 %v694, 15
        %v697 = vsub.s32 0, %v696
        %v698 = vsel %vm692, %v697, %v696
        %vm699 = vcmp.lt.s32.totalorder %v601, 0
        %v700 = vsub.s32 0, %v601
        %v701 = vsel %vm699, %v700, %v601
        %v702 = vshrl.u32 %v701, 4
        %v703 = vand.u32 %v701, 15
        %v704 = vsub.s32 0, %v703
        %v705 = vsel %vm699, %v704, %v703
        %vm706 = vcmp.lt.s32.totalorder %v602, 0
        %v707 = vsub.s32 0, %v602
        %v708 = vsel %vm706, %v707, %v602
        %v709 = vshrl.u32 %v708, 4
        %v710 = vand.u32 %v708, 15
        %v711 = vsub.s32 0, %v710
        %v712 = vsel %vm706, %v711, %v710
        %vm713 = vcmp.lt.s32.totalorder %v603, 0
        %v714 = vsub.s32 0, %v603
        %v715 = vsel %vm713, %v714, %v603
        %v716 = vshrl.u32 %v715, 4
        %v717 = vand.u32 %v715, 15
        %v718 = vsub.s32 0, %v717
        %v719 = vsel %vm713, %v718, %v717
        %vm720 = vcmp.lt.s32.totalorder %v604, 0
        %v721 = vsub.s32 0, %v604
        %v722 = vsel %vm720, %v721, %v604
        %v723 = vshrl.u32 %v722, 4
        %v724 = vand.u32 %v722, 15
        %v725 = vsub.s32 0, %v724
        %v726 = vsel %vm720, %v725, %v724
        %vm727 = vcmp.lt.s32.totalorder %v605, 0
        %v728 = vsub.s32 0, %v605
        %v729 = vsel %vm727, %v728, %v605
        %v730 = vshrl.u32 %v729, 4
        %v731 = vand.u32 %v729, 15
        %v732 = vsub.s32 0, %v731
        %v733 = vsel %vm727, %v732, %v731
        %vm734 = vcmp.lt.s32.totalorder %v606, 0
        %v735 = vsub.s32 0, %v606
        %v736 = vsel %vm734, %v735, %v606
        %v737 = vshrl.u32 %v736, 4
        %v738 = vand.u32 %v736, 15
        %v739 = vsub.s32 0, %v738
        %v740 = vsel %vm734, %v739, %v738
        %vm741 = vcmp.lt.s32.totalorder %v607, 0
        %v742 = vsub.s32 0, %v607
        %v743 = vsel %vm741, %v742, %v607
        %v744 = vshrl.u32 %v743, 4
        %v745 = vand.u32 %v743, 15
        %v746 = vsub.s32 0, %v745
        %v747 = vsel %vm741, %v746, %v745
        %vm748 = vcmp.lt.s32.totalorder %v608, 0
        %v749 = vsub.s32 0, %v608
        %v750 = vsel %vm748, %v749, %v608
        %v751 = vshrl.u32 %v750, 4
        %v752 = vand.u32 %v750, 15
        %v753 = vsub.s32 0, %v752
        %v754 = vsel %vm748, %v753, %v752
        %vm755 = vcmp.lt.s32.totalorder %v609, 0
        %v756 = vsub.s32 0, %v609
        %v757 = vsel %vm755, %v756, %v609
        %v758 = vshrl.u32 %v757, 4
        %v759 = vand.u32 %v757, 15
        %v760 = vsub.s32 0, %v759
        %v761 = vsel %vm755, %v760, %v759
        %vm762 = vcmp.lt.s32.totalorder %v610, 0
        %v763 = vsub.s32 0, %v610
        %v764 = vsel %vm762, %v763, %v610
        %v765 = vshrl.u32 %v764, 4
        %v766 = vand.u32 %v764, 15
        %v767 = vsub.s32 0, %v766
        %v768 = vsel %vm762, %v767, %v766
        %vm769 = vcmp.lt.s32.totalorder %v611, 0
        %v770 = vsub.s32 0, %v611
        %v771 = vsel %vm769, %v770, %v611
        %v772 = vshrl.u32 %v771, 4
        %v773 = vand.u32 %v771, 15
        %v774 = vsub.s32 0, %v773
        %v775 = vsel %vm769, %v774, %v773
        %vm776 = vcmp.lt.s32.totalorder %v612, 0
        %v777 = vsub.s32 0, %v612
        %v778 = vsel %vm776, %v777, %v612
        %v779 = vshrl.u32 %v778, 4
        %v780 = vand.u32 %v778, 15
        %v781 = vsub.s32 0, %v780
        %v782 = vsel %vm776, %v781, %v780
        %vm783 = vcmp.lt.s32.totalorder %v613, 0
        %v784 = vsub.s32 0, %v613
        %v785 = vsel %vm783, %v784, %v613
        %v786 = vshrl.u32 %v785, 4
        %v787 = vand.u32 %v785, 15
        %v788 = vsub.s32 0, %v787
        %v789 = vsel %vm783, %v788, %v787
        %vm790 = vcmp.lt.s32.totalorder %v614, 0
        %v791 = vsub.s32 0, %v614
        %v792 = vsel %vm790, %v791, %v614
        %v793 = vshrl.u32 %v792, 4
        %v794 = vand.u32 %v792, 15
        %v795 = vsub.s32 0, %v794
        %v796 = vsel %vm790, %v795, %v794
        %vm797 = vcmp.lt.s32.totalorder %v615, 0
        %v798 = vsub.s32 0, %v615
        %v799 = vsel %vm797, %v798, %v615
        %v800 = vshrl.u32 %v799, 4
        %v801 = vand.u32 %v799, 15
        %v802 = vsub.s32 0, %v801
        %v803 = vsel %vm797, %v802, %v801
        %vm804 = vcmp.lt.s32.totalorder %v616, 0
        %v805 = vsub.s32 0, %v616
        %v806 = vsel %vm804, %v805, %v616
        %v807 = vshrl.u32 %v806, 4
        %v808 = vand.u32 %v806, 15
        %v809 = vsub.s32 0, %v808
        %v810 = vsel %vm804, %v809, %v808
        %vm811 = vcmp.lt.s32.totalorder %v617, 0
        %v812 = vsub.s32 0, %v617
        %v813 = vsel %vm811, %v812, %v617
        %v814 = vshrl.u32 %v813, 4
        %v815 = vand.u32 %v813, 15
        %v816 = vsub.s32 0, %v815
        %v817 = vsel %vm811, %v816, %v815
        %vm818 = vcmp.lt.s32.totalorder %v618, 0
        %v819 = vsub.s32 0, %v618
        %v820 = vsel %vm818, %v819, %v618
        %v821 = vshrl.u32 %v820, 4
        %v822 = vand.u32 %v820, 15
        %v823 = vsub.s32 0, %v822
        %v824 = vsel %vm818, %v823, %v822
        %vm825 = vcmp.lt.s32.totalorder %v619, 0
        %v826 = vsub.s32 0, %v619
        %v827 = vsel %vm825, %v826, %v619
        %v828 = vshrl.u32 %v827, 4
        %v829 = vand.u32 %v827, 15
        %v830 = vsub.s32 0, %v829
        %v831 = vsel %vm825, %v830, %v829
        %vm832 = vcmp.lt.s32.totalorder %v620, 0
        %v833 = vsub.s32 0, %v620
        %v834 = vsel %vm832, %v833, %v620
        %v835 = vshrl.u32 %v834, 4
        %v836 = vand.u32 %v834, 15
        %v837 = vsub.s32 0, %v836
        %v838 = vsel %vm832, %v837, %v836
        %vm839 = vcmp.lt.s32.totalorder %v621, 0
        %v840 = vsub.s32 0, %v621
        %v841 = vsel %vm839, %v840, %v621
        %v842 = vshrl.u32 %v841, 4
        %v843 = vand.u32 %v841, 15
        %v844 = vsub.s32 0, %v843
        %v845 = vsel %vm839, %v844, %v843
        %vm846 = vcmp.ne.s32.totalorder %v628, 0
        %vm847 = vcmp.ne.s32.totalorder %v635, 0
        %vm848 = vcmp.ne.s32.totalorder %v642, 0
        %vm849 = vcmp.ne.s32.totalorder %v649, 0
        %vm850 = vcmp.ne.s32.totalorder %v656, 0
        %vm851 = vcmp.ne.s32.totalorder %v663, 0
        %vm852 = vcmp.ne.s32.totalorder %v670, 0
        %vm853 = vcmp.ne.s32.totalorder %v677, 0
        %vm854 = vcmp.ne.s32.totalorder %v684, 0
        %vm855 = vcmp.ne.s32.totalorder %v691, 0
        %vm856 = vcmp.ne.s32.totalorder %v698, 0
        %vm857 = vcmp.ne.s32.totalorder %v705, 0
        %vm858 = vcmp.ne.s32.totalorder %v712, 0
        %vm859 = vcmp.ne.s32.totalorder %v719, 0
        %vm860 = vcmp.ne.s32.totalorder %v726, 0
        %vm861 = vcmp.ne.s32.totalorder %v733, 0
        %vm862 = vcmp.ne.s32.totalorder %v740, 0
        %vm863 = vcmp.ne.s32.totalorder %v747, 0
        %vm864 = vcmp.ne.s32.totalorder %v754, 0
        %vm865 = vcmp.ne.s32.totalorder %v761, 0
        %vm866 = vcmp.ne.s32.totalorder %v768, 0
        %vm867 = vcmp.ne.s32.totalorder %v775, 0
        %vm868 = vcmp.ne.s32.totalorder %v782, 0
        %vm869 = vcmp.ne.s32.totalorder %v789, 0
        %vm870 = vcmp.ne.s32.totalorder %v796, 0
        %vm871 = vcmp.ne.s32.totalorder %v803, 0
        %vm872 = vcmp.ne.s32.totalorder %v810, 0
        %vm873 = vcmp.ne.s32.totalorder %v817, 0
        %vm874 = vcmp.ne.s32.totalorder %v824, 0
        %vm875 = vcmp.ne.s32.totalorder %v831, 0
        %vm876 = vcmp.ne.s32.totalorder %v838, 0
        %vm877 = vcmp.ne.s32.totalorder %v845, 0
        %vm878 = vcmp.lt.s32.totalorder %v628, 0
        %vm879 = vcmp.lt.s32.totalorder %v635, 0
        %vm880 = vcmp.lt.s32.totalorder %v642, 0
        %vm881 = vcmp.lt.s32.totalorder %v649, 0
        %vm882 = vcmp.lt.s32.totalorder %v656, 0
        %vm883 = vcmp.lt.s32.totalorder %v663, 0
        %vm884 = vcmp.lt.s32.totalorder %v670, 0
        %vm885 = vcmp.lt.s32.totalorder %v677, 0
        %vm886 = vcmp.lt.s32.totalorder %v684, 0
        %vm887 = vcmp.lt.s32.totalorder %v691, 0
        %vm888 = vcmp.lt.s32.totalorder %v698, 0
        %vm889 = vcmp.lt.s32.totalorder %v705, 0
        %vm890 = vcmp.lt.s32.totalorder %v712, 0
        %vm891 = vcmp.lt.s32.totalorder %v719, 0
        %vm892 = vcmp.lt.s32.totalorder %v726, 0
        %vm893 = vcmp.lt.s32.totalorder %v733, 0
        %vm894 = vcmp.lt.s32.totalorder %v740, 0
        %vm895 = vcmp.lt.s32.totalorder %v747, 0
        %vm896 = vcmp.lt.s32.totalorder %v754, 0
        %vm897 = vcmp.lt.s32.totalorder %v761, 0
        %vm898 = vcmp.lt.s32.totalorder %v768, 0
        %vm899 = vcmp.lt.s32.totalorder %v775, 0
        %vm900 = vcmp.lt.s32.totalorder %v782, 0
        %vm901 = vcmp.lt.s32.totalorder %v789, 0
        %vm902 = vcmp.lt.s32.totalorder %v796, 0
        %vm903 = vcmp.lt.s32.totalorder %v803, 0
        %vm904 = vcmp.lt.s32.totalorder %v810, 0
        %vm905 = vcmp.lt.s32.totalorder %v817, 0
        %vm906 = vcmp.lt.s32.totalorder %v824, 0
        %vm907 = vcmp.lt.s32.totalorder %v831, 0
        %vm908 = vcmp.lt.s32.totalorder %v838, 0
        %vm909 = vcmp.lt.s32.totalorder %v845, 0
        %vm910 = vmand %vm878, %vm846
        %vm911 = vmand %vm879, %vm847
        %vm912 = vmand %vm880, %vm848
        %vm913 = vmand %vm881, %vm849
        %vm914 = vmand %vm882, %vm850
        %vm915 = vmand %vm883, %vm851
        %vm916 = vmand %vm884, %vm852
        %vm917 = vmand %vm885, %vm853
        %vm918 = vmand %vm886, %vm854
        %vm919 = vmand %vm887, %vm855
        %vm920 = vmand %vm888, %vm856
        %vm921 = vmand %vm889, %vm857
        %vm922 = vmand %vm890, %vm858
        %vm923 = vmand %vm891, %vm859
        %vm924 = vmand %vm892, %vm860
        %vm925 = vmand %vm893, %vm861
        %vm926 = vmand %vm894, %vm862
        %vm927 = vmand %vm895, %vm863
        %vm928 = vmand %vm896, %vm864
        %vm929 = vmand %vm897, %vm865
        %vm930 = vmand %vm898, %vm866
        %vm931 = vmand %vm899, %vm867
        %vm932 = vmand %vm900, %vm868
        %vm933 = vmand %vm901, %vm869
        %vm934 = vmand %vm902, %vm870
        %vm935 = vmand %vm903, %vm871
        %vm936 = vmand %vm904, %vm872
        %vm937 = vmand %vm905, %vm873
        %vm938 = vmand %vm906, %vm874
        %vm939 = vmand %vm907, %vm875
        %vm940 = vmand %vm908, %vm876
        %vm941 = vmand %vm909, %vm877
        %v942 = vadd.s32 %v628, 16
        %v943 = vadd.s32 %v635, 16
        %v944 = vadd.s32 %v642, 16
        %v945 = vadd.s32 %v649, 16
        %v946 = vadd.s32 %v656, 16
        %v947 = vadd.s32 %v663, 16
        %v948 = vadd.s32 %v670, 16
        %v949 = vadd.s32 %v677, 16
        %v950 = vadd.s32 %v684, 16
        %v951 = vadd.s32 %v691, 16
        %v952 = vadd.s32 %v698, 16
        %v953 = vadd.s32 %v705, 16
        %v954 = vadd.s32 %v712, 16
        %v955 = vadd.s32 %v719, 16
        %v956 = vadd.s32 %v726, 16
        %v957 = vadd.s32 %v733, 16
        %v958 = vadd.s32 %v740, 16
        %v959 = vadd.s32 %v747, 16
        %v960 = vadd.s32 %v754, 16
        %v961 = vadd.s32 %v761, 16
        %v962 = vadd.s32 %v768, 16
        %v963 = vadd.s32 %v775, 16
        %v964 = vadd.s32 %v782, 16
        %v965 = vadd.s32 %v789, 16
        %v966 = vadd.s32 %v796, 16
        %v967 = vadd.s32 %v803, 16
        %v968 = vadd.s32 %v810, 16
        %v969 = vadd.s32 %v817, 16
        %v970 = vadd.s32 %v824, 16
        %v971 = vadd.s32 %v831, 16
        %v972 = vadd.s32 %v838, 16
        %v973 = vadd.s32 %v845, 16
        %v974 = vsel %vm910, %v942, %v628
        %v975 = vsel %vm911, %v943, %v635
        %v976 = vsel %vm912, %v944, %v642
        %v977 = vsel %vm913, %v945, %v649
        %v978 = vsel %vm914, %v946, %v656
        %v979 = vsel %vm915, %v947, %v663
        %v980 = vsel %vm916, %v948, %v670
        %v981 = vsel %vm917, %v949, %v677
        %v982 = vsel %vm918, %v950, %v684
        %v983 = vsel %vm919, %v951, %v691
        %v984 = vsel %vm920, %v952, %v698
        %v985 = vsel %vm921, %v953, %v705
        %v986 = vsel %vm922, %v954, %v712
        %v987 = vsel %vm923, %v955, %v719
        %v988 = vsel %vm924, %v956, %v726
        %v989 = vsel %vm925, %v957, %v733
        %v990 = vsel %vm926, %v958, %v740
        %v991 = vsel %vm927, %v959, %v747
        %v992 = vsel %vm928, %v960, %v754
        %v993 = vsel %vm929, %v961, %v761
        %v994 = vsel %vm930, %v962, %v768
        %v995 = vsel %vm931, %v963, %v775
        %v996 = vsel %vm932, %v964, %v782
        %v997 = vsel %vm933, %v965, %v789
        %v998 = vsel %vm934, %v966, %v796
        %v999 = vsel %vm935, %v967, %v803
        %v1000 = vsel %vm936, %v968, %v810
        %v1001 = vsel %vm937, %v969, %v817
        %v1002 = vsel %vm938, %v970, %v824
        %v1003 = vsel %vm939, %v971, %v831
        %v1004 = vsel %vm940, %v972, %v838
        %v1005 = vsel %vm941, %v973, %v845
        %vm1006 = vcmp.lt.s32.totalorder %v974, 15
        %vm1007 = vcmp.lt.s32.totalorder %v975, 15
        %vm1008 = vcmp.lt.s32.totalorder %v976, 15
        %vm1009 = vcmp.lt.s32.totalorder %v977, 15
        %vm1010 = vcmp.lt.s32.totalorder %v978, 15
        %vm1011 = vcmp.lt.s32.totalorder %v979, 15
        %vm1012 = vcmp.lt.s32.totalorder %v980, 15
        %vm1013 = vcmp.lt.s32.totalorder %v981, 15
        %vm1014 = vcmp.lt.s32.totalorder %v982, 15
        %vm1015 = vcmp.lt.s32.totalorder %v983, 15
        %vm1016 = vcmp.lt.s32.totalorder %v984, 15
        %vm1017 = vcmp.lt.s32.totalorder %v985, 15
        %vm1018 = vcmp.lt.s32.totalorder %v986, 15
        %vm1019 = vcmp.lt.s32.totalorder %v987, 15
        %vm1020 = vcmp.lt.s32.totalorder %v988, 15
        %vm1021 = vcmp.lt.s32.totalorder %v989, 15
        %vm1022 = vcmp.lt.s32.totalorder %v990, 15
        %vm1023 = vcmp.lt.s32.totalorder %v991, 15
        %vm1024 = vcmp.lt.s32.totalorder %v992, 15
        %vm1025 = vcmp.lt.s32.totalorder %v993, 15
        %vm1026 = vcmp.lt.s32.totalorder %v994, 15
        %vm1027 = vcmp.lt.s32.totalorder %v995, 15
        %vm1028 = vcmp.lt.s32.totalorder %v996, 15
        %vm1029 = vcmp.lt.s32.totalorder %v997, 15
        %vm1030 = vcmp.lt.s32.totalorder %v998, 15
        %vm1031 = vcmp.lt.s32.totalorder %v999, 15
        %vm1032 = vcmp.lt.s32.totalorder %v1000, 15
        %vm1033 = vcmp.lt.s32.totalorder %v1001, 15
        %vm1034 = vcmp.lt.s32.totalorder %v1002, 15
        %vm1035 = vcmp.lt.s32.totalorder %v1003, 15
        %vm1036 = vcmp.lt.s32.totalorder %v1004, 15
        %vm1037 = vcmp.lt.s32.totalorder %v1005, 15
        %v1038 = vsel %vm1006, 1, 0
        %v1039 = vsel %vm1007, 1, 0
        %v1040 = vsel %vm1008, 1, 0
        %v1041 = vsel %vm1009, 1, 0
        %v1042 = vsel %vm1010, 1, 0
        %v1043 = vsel %vm1011, 1, 0
        %v1044 = vsel %vm1012, 1, 0
        %v1045 = vsel %vm1013, 1, 0
        %v1046 = vsel %vm1014, 1, 0
        %v1047 = vsel %vm1015, 1, 0
        %v1048 = vsel %vm1016, 1, 0
        %v1049 = vsel %vm1017, 1, 0
        %v1050 = vsel %vm1018, 1, 0
        %v1051 = vsel %vm1019, 1, 0
        %v1052 = vsel %vm1020, 1, 0
        %v1053 = vsel %vm1021, 1, 0
        %v1054 = vsel %vm1022, 1, 0
        %v1055 = vsel %vm1023, 1, 0
        %v1056 = vsel %vm1024, 1, 0
        %v1057 = vsel %vm1025, 1, 0
        %v1058 = vsel %vm1026, 1, 0
        %v1059 = vsel %vm1027, 1, 0
        %v1060 = vsel %vm1028, 1, 0
        %v1061 = vsel %vm1029, 1, 0
        %v1062 = vsel %vm1030, 1, 0
        %v1063 = vsel %vm1031, 1, 0
        %v1064 = vsel %vm1032, 1, 0
        %v1065 = vsel %vm1033, 1, 0
        %v1066 = vsel %vm1034, 1, 0
        %v1067 = vsel %vm1035, 1, 0
        %v1068 = vsel %vm1036, 1, 0
        %v1069 = vsel %vm1037, 1, 0
        %v1070 = vcvt.s32.f32 %v1038
        %v1071 = vcvt.s32.f32 %v1039
        %v1072 = vcvt.s32.f32 %v1040
        %v1073 = vcvt.s32.f32 %v1041
        %v1074 = vcvt.s32.f32 %v1042
        %v1075 = vcvt.s32.f32 %v1043
        %v1076 = vcvt.s32.f32 %v1044
        %v1077 = vcvt.s32.f32 %v1045
        %v1078 = vcvt.s32.f32 %v1046
        %v1079 = vcvt.s32.f32 %v1047
        %v1080 = vcvt.s32.f32 %v1048
        %v1081 = vcvt.s32.f32 %v1049
        %v1082 = vcvt.s32.f32 %v1050
        %v1083 = vcvt.s32.f32 %v1051
        %v1084 = vcvt.s32.f32 %v1052
        %v1085 = vcvt.s32.f32 %v1053
        %v1086 = vcvt.s32.f32 %v1054
        %v1087 = vcvt.s32.f32 %v1055
        %v1088 = vcvt.s32.f32 %v1056
        %v1089 = vcvt.s32.f32 %v1057
        %v1090 = vcvt.s32.f32 %v1058
        %v1091 = vcvt.s32.f32 %v1059
        %v1092 = vcvt.s32.f32 %v1060
        %v1093 = vcvt.s32.f32 %v1061
        %v1094 = vcvt.s32.f32 %v1062
        %v1095 = vcvt.s32.f32 %v1063
        %v1096 = vcvt.s32.f32 %v1064
        %v1097 = vcvt.s32.f32 %v1065
        %v1098 = vcvt.s32.f32 %v1066
        %v1099 = vcvt.s32.f32 %v1067
        %v1100 = vcvt.s32.f32 %v1068
        %v1101 = vcvt.s32.f32 %v1069
        %v1102 = vmul.f32 %v557, %v1070
        %v1103 = vmul.f32 %v558, %v1071
        %v1104 = vmul.f32 %v559, %v1072
        %v1105 = vmul.f32 %v560, %v1073
        %v1106 = vmul.f32 %v561, %v1074
        %v1107 = vmul.f32 %v562, %v1075
        %v1108 = vmul.f32 %v563, %v1076
        %v1109 = vmul.f32 %v564, %v1077
        %v1110 = vmul.f32 %v565, %v1078
        %v1111 = vmul.f32 %v566, %v1079
        %v1112 = vmul.f32 %v567, %v1080
        %v1113 = vmul.f32 %v568, %v1081
        %v1114 = vmul.f32 %v569, %v1082
        %v1115 = vmul.f32 %v570, %v1083
        %v1116 = vmul.f32 %v571, %v1084
        %v1117 = vmul.f32 %v572, %v1085
        %v1118 = vmul.f32 %v573, %v1086
        %v1119 = vmul.f32 %v574, %v1087
        %v1120 = vmul.f32 %v575, %v1088
        %v1121 = vmul.f32 %v576, %v1089
        %v1122 = vmul.f32 %v577, %v1090
        %v1123 = vmul.f32 %v578, %v1091
        %v1124 = vmul.f32 %v579, %v1092
        %v1125 = vmul.f32 %v580, %v1093
        %v1126 = vmul.f32 %v581, %v1094
        %v1127 = vmul.f32 %v582, %v1095
        %v1128 = vmul.f32 %v583, %v1096
        %v1129 = vmul.f32 %v584, %v1097
        %v1130 = vmul.f32 %v585, %v1098
        %v1131 = vmul.f32 %v586, %v1099
        %v1132 = vmul.f32 %v587, %v1100
        %v1133 = vmul.f32 %v588, %v1101
        %vm1134 = vcmp.gt.s32.totalorder %v974, 0
        %vm1135 = vcmp.gt.s32.totalorder %v975, 0
        %vm1136 = vcmp.gt.s32.totalorder %v976, 0
        %vm1137 = vcmp.gt.s32.totalorder %v977, 0
        %vm1138 = vcmp.gt.s32.totalorder %v978, 0
        %vm1139 = vcmp.gt.s32.totalorder %v979, 0
        %vm1140 = vcmp.gt.s32.totalorder %v980, 0
        %vm1141 = vcmp.gt.s32.totalorder %v981, 0
        %vm1142 = vcmp.gt.s32.totalorder %v982, 0
        %vm1143 = vcmp.gt.s32.totalorder %v983, 0
        %vm1144 = vcmp.gt.s32.totalorder %v984, 0
        %vm1145 = vcmp.gt.s32.totalorder %v985, 0
        %vm1146 = vcmp.gt.s32.totalorder %v986, 0
        %vm1147 = vcmp.gt.s32.totalorder %v987, 0
        %vm1148 = vcmp.gt.s32.totalorder %v988, 0
        %vm1149 = vcmp.gt.s32.totalorder %v989, 0
        %vm1150 = vcmp.gt.s32.totalorder %v990, 0
        %vm1151 = vcmp.gt.s32.totalorder %v991, 0
        %vm1152 = vcmp.gt.s32.totalorder %v992, 0
        %vm1153 = vcmp.gt.s32.totalorder %v993, 0
        %vm1154 = vcmp.gt.s32.totalorder %v994, 0
        %vm1155 = vcmp.gt.s32.totalorder %v995, 0
        %vm1156 = vcmp.gt.s32.totalorder %v996, 0
        %vm1157 = vcmp.gt.s32.totalorder %v997, 0
        %vm1158 = vcmp.gt.s32.totalorder %v998, 0
        %vm1159 = vcmp.gt.s32.totalorder %v999, 0
        %vm1160 = vcmp.gt.s32.totalorder %v1000, 0
        %vm1161 = vcmp.gt.s32.totalorder %v1001, 0
        %vm1162 = vcmp.gt.s32.totalorder %v1002, 0
        %vm1163 = vcmp.gt.s32.totalorder %v1003, 0
        %vm1164 = vcmp.gt.s32.totalorder %v1004, 0
        %vm1165 = vcmp.gt.s32.totalorder %v1005, 0
        %v1166 = vsel %vm1134, 1, 0
        %v1167 = vsel %vm1135, 1, 0
        %v1168 = vsel %vm1136, 1, 0
        %v1169 = vsel %vm1137, 1, 0
        %v1170 = vsel %vm1138, 1, 0
        %v1171 = vsel %vm1139, 1, 0
        %v1172 = vsel %vm1140, 1, 0
        %v1173 = vsel %vm1141, 1, 0
        %v1174 = vsel %vm1142, 1, 0
        %v1175 = vsel %vm1143, 1, 0
        %v1176 = vsel %vm1144, 1, 0
        %v1177 = vsel %vm1145, 1, 0
        %v1178 = vsel %vm1146, 1, 0
        %v1179 = vsel %vm1147, 1, 0
        %v1180 = vsel %vm1148, 1, 0
        %v1181 = vsel %vm1149, 1, 0
        %v1182 = vsel %vm1150, 1, 0
        %v1183 = vsel %vm1151, 1, 0
        %v1184 = vsel %vm1152, 1, 0
        %v1185 = vsel %vm1153, 1, 0
        %v1186 = vsel %vm1154, 1, 0
        %v1187 = vsel %vm1155, 1, 0
        %v1188 = vsel %vm1156, 1, 0
        %v1189 = vsel %vm1157, 1, 0
        %v1190 = vsel %vm1158, 1, 0
        %v1191 = vsel %vm1159, 1, 0
        %v1192 = vsel %vm1160, 1, 0
        %v1193 = vsel %vm1161, 1, 0
        %v1194 = vsel %vm1162, 1, 0
        %v1195 = vsel %vm1163, 1, 0
        %v1196 = vsel %vm1164, 1, 0
        %v1197 = vsel %vm1165, 1, 0
        %v1198 = vcvt.s32.f32 %v1166
        %v1199 = vcvt.s32.f32 %v1167
        %v1200 = vcvt.s32.f32 %v1168
        %v1201 = vcvt.s32.f32 %v1169
        %v1202 = vcvt.s32.f32 %v1170
        %v1203 = vcvt.s32.f32 %v1171
        %v1204 = vcvt.s32.f32 %v1172
        %v1205 = vcvt.s32.f32 %v1173
        %v1206 = vcvt.s32.f32 %v1174
        %v1207 = vcvt.s32.f32 %v1175
        %v1208 = vcvt.s32.f32 %v1176
        %v1209 = vcvt.s32.f32 %v1177
        %v1210 = vcvt.s32.f32 %v1178
        %v1211 = vcvt.s32.f32 %v1179
        %v1212 = vcvt.s32.f32 %v1180
        %v1213 = vcvt.s32.f32 %v1181
        %v1214 = vcvt.s32.f32 %v1182
        %v1215 = vcvt.s32.f32 %v1183
        %v1216 = vcvt.s32.f32 %v1184
        %v1217 = vcvt.s32.f32 %v1185
        %v1218 = vcvt.s32.f32 %v1186
        %v1219 = vcvt.s32.f32 %v1187
        %v1220 = vcvt.s32.f32 %v1188
        %v1221 = vcvt.s32.f32 %v1189
        %v1222 = vcvt.s32.f32 %v1190
        %v1223 = vcvt.s32.f32 %v1191
        %v1224 = vcvt.s32.f32 %v1192
        %v1225 = vcvt.s32.f32 %v1193
        %v1226 = vcvt.s32.f32 %v1194
        %v1227 = vcvt.s32.f32 %v1195
        %v1228 = vcvt.s32.f32 %v1196
        %v1229 = vcvt.s32.f32 %v1197
        %v1230 = vmul.f32 %v557, %v1198
        %v1231 = vmul.f32 %v558, %v1199
        %v1232 = vmul.f32 %v559, %v1200
        %v1233 = vmul.f32 %v560, %v1201
        %v1234 = vmul.f32 %v561, %v1202
        %v1235 = vmul.f32 %v562, %v1203
        %v1236 = vmul.f32 %v563, %v1204
        %v1237 = vmul.f32 %v564, %v1205
        %v1238 = vmul.f32 %v565, %v1206
        %v1239 = vmul.f32 %v566, %v1207
        %v1240 = vmul.f32 %v567, %v1208
        %v1241 = vmul.f32 %v568, %v1209
        %v1242 = vmul.f32 %v569, %v1210
        %v1243 = vmul.f32 %v570, %v1211
        %v1244 = vmul.f32 %v571, %v1212
        %v1245 = vmul.f32 %v572, %v1213
        %v1246 = vmul.f32 %v573, %v1214
        %v1247 = vmul.f32 %v574, %v1215
        %v1248 = vmul.f32 %v575, %v1216
        %v1249 = vmul.f32 %v576, %v1217
        %v1250 = vmul.f32 %v577, %v1218
        %v1251 = vmul.f32 %v578, %v1219
        %v1252 = vmul.f32 %v579, %v1220
        %v1253 = vmul.f32 %v580, %v1221
        %v1254 = vmul.f32 %v581, %v1222
        %v1255 = vmul.f32 %v582, %v1223
        %v1256 = vmul.f32 %v583, %v1224
        %v1257 = vmul.f32 %v584, %v1225
        %v1258 = vmul.f32 %v585, %v1226
        %v1259 = vmul.f32 %v586, %v1227
        %v1260 = vmul.f32 %v587, %v1228
        %v1261 = vmul.f32 %v588, %v1229
        %1262 = vst [vmem:[#allocation2 + $0x60] sm:$0xff] 0.0
        %1263 = vst [vmem:[#allocation2 + $0x68] sm:$0xff] 0.0
        %vm1264 = vcmask 261120
        %1265 = vst.msk [vmem:[#allocation2 + $0x70] sm:$0xff] %vm1264, 0.0
        %1266 = vst [vmem:[#allocation2 + $0x78] sm:$0xff] 0.0
        %1267 = vst [vmem:[#allocation2 + $0x80] sm:$0xff] 0.0
        %1268 = vst.msk [vmem:[#allocation2 + $0x88] sm:$0xff] %vm1264, 0.0
        %1269 = vst [vmem:[#allocation2 + $0x90] sm:$0x1] 0.0
        %1270 = vst [vmem:[#allocation2 + $0x98] sm:$0x1] 0.0
        %vm1271 = vcmask 253952
        %1272 = vst.msk [vmem:[#allocation2 + $0xa0] sm:$0x1] %vm1271, 0.0
        %1273 = vst [vmem:[#allocation2 + $0x318] sm:$0x80] 0.0
        %1274 = vst [vmem:[#allocation2 + $0x320] sm:$0x80] 0.0
        %vm1275 = vcmask 261127
        %1276 = vst.msk [vmem:[#allocation2 + $0x328] sm:$0x80] %vm1275, 0.0
        %1277 = vst [vmem:[#allocation2 + $0x330] sm:$0xff] 0.0
        %1278 = vst [vmem:[#allocation2 + $0x338] sm:$0xff] 0.0
        %1279 = vst.msk [vmem:[#allocation2 + $0x340] sm:$0xff] %vm1264, 0.0
        %1280 = vst [vmem:[#allocation2 + $0x348] sm:$0xff] 0.0
        %1281 = vst [vmem:[#allocation2 + $0x350] sm:$0xff] 0.0
        %1282 = vst.msk [vmem:[#allocation2 + $0x358] sm:$0xff] %vm1264, 0.0
        %vm1315 = vcmask 1040384
        %v1316 = vrot.slane %v1102, 7
        %v1317 = vrot.slane %v1103, 7
        %v1318 = vsel %vm1315, %v1316, %v1317
        %v1319 = vrot.slane %v1104, 7
        %v1320 = vsel %vm1315, %v1317, %v1319
        %v1321 = vrot.slane %v1105, 7
        %v1322 = vsel %vm1315, %v1319, %v1321
        %v1323 = vrot.slane %v1106, 7
        %v1324 = vsel %vm1315, %v1321, %v1323
        %v1325 = vrot.slane %v1107, 7
        %v1326 = vsel %vm1315, %v1323, %v1325
        %v1327 = vrot.slane %v1108, 7
        %v1328 = vsel %vm1315, %v1325, %v1327
        %v1329 = vrot.slane %v1109, 7
        %v1330 = vsel %vm1315, %v1327, %v1329
        %v1331 = vrot.slane %v1110, 7
        %v1332 = vsel %vm1315, %v1329, %v1331
        %v1333 = vrot.slane %v1111, 7
        %v1334 = vsel %vm1315, %v1331, %v1333
        %v1335 = vrot.slane %v1112, 7
        %v1336 = vsel %vm1315, %v1333, %v1335
        %v1337 = vrot.slane %v1113, 7
        %v1338 = vsel %vm1315, %v1335, %v1337
        %v1339 = vrot.slane %v1114, 7
        %v1340 = vsel %vm1315, %v1337, %v1339
        %v1341 = vrot.slane %v1115, 7
        %v1342 = vsel %vm1315, %v1339, %v1341
        %v1343 = vrot.slane %v1116, 7
        %v1344 = vsel %vm1315, %v1341, %v1343
        %v1345 = vrot.slane %v1117, 7
        %v1346 = vsel %vm1315, %v1343, %v1345
        %v1347 = vrot.slane %v1118, 7
        %v1348 = vsel %vm1315, %v1345, %v1347
        %v1349 = vrot.slane %v1119, 7
        %v1350 = vsel %vm1315, %v1347, %v1349
        %v1351 = vrot.slane %v1120, 7
        %v1352 = vsel %vm1315, %v1349, %v1351
        %v1353 = vrot.slane %v1121, 7
        %v1354 = vsel %vm1315, %v1351, %v1353
        %v1355 = vrot.slane %v1122, 7
        %v1356 = vsel %vm1315, %v1353, %v1355
        %v1357 = vrot.slane %v1123, 7
        %v1358 = vsel %vm1315, %v1355, %v1357
        %v1359 = vrot.slane %v1124, 7
        %v1360 = vsel %vm1315, %v1357, %v1359
        %v1361 = vrot.slane %v1125, 7
        %v1362 = vsel %vm1315, %v1359, %v1361
        %v1363 = vrot.slane %v1126, 7
        %v1364 = vsel %vm1315, %v1361, %v1363
        %v1365 = vrot.slane %v1127, 7
        %v1366 = vsel %vm1315, %v1363, %v1365
        %v1367 = vrot.slane %v1128, 7
        %v1368 = vsel %vm1315, %v1365, %v1367
        %v1369 = vrot.slane %v1129, 7
        %v1370 = vsel %vm1315, %v1367, %v1369
        %v1371 = vrot.slane %v1130, 7
        %v1372 = vsel %vm1315, %v1369, %v1371
        %v1373 = vrot.slane %v1131, 7
        %v1374 = vsel %vm1315, %v1371, %v1373
        %v1375 = vrot.slane %v1132, 7
        %v1376 = vsel %vm1315, %v1373, %v1375
        %v1377 = vrot.slane %v1133, 7
        %v1378 = vsel %vm1315, %v1375, %v1377
        %vm1412 = vcmask 261121
        %1413 = vst.msk [vmem:[#allocation2 + $0x90] sm:$0xfe] %vm1412, %v1316
        %1414 = vst.msk [vmem:[#allocation2 + $0xa8] sm:$0xff] %vm1264, %v1318
        %1415 = vst.msk [vmem:[#allocation2 + $0xc0] sm:$0xff] %vm1264, %v1320
        %1416 = vst.msk [vmem:[#allocation2 + $0xd8] sm:$0xff] %vm1264, %v1322
        %1417 = vst.msk [vmem:[#allocation2 + $0xf0] sm:$0xff] %vm1264, %v1324
        %1418 = vst.msk [vmem:[#allocation2 + $0x108] sm:$0xff] %vm1264, %v1326
        %1419 = vst.msk [vmem:[#allocation2 + $0x120] sm:$0xff] %vm1264, %v1328
        %1420 = vst.msk [vmem:[#allocation2 + $0x138] sm:$0xff] %vm1264, %v1330
        %1421 = vst.msk [vmem:[#allocation2 + $0x150] sm:$0xff] %vm1264, %v1332
        %1422 = vst.msk [vmem:[#allocation2 + $0x168] sm:$0xff] %vm1264, %v1334
        %1423 = vst.msk [vmem:[#allocation2 + $0x180] sm:$0xff] %vm1264, %v1336
        %1424 = vst.msk [vmem:[#allocation2 + $0x198] sm:$0xff] %vm1264, %v1338
        %1425 = vst.msk [vmem:[#allocation2 + $0x1b0] sm:$0xff] %vm1264, %v1340
        %1426 = vst.msk [vmem:[#allocation2 + $0x1c8] sm:$0xff] %vm1264, %v1342
        %1427 = vst.msk [vmem:[#allocation2 + $0x1e0] sm:$0xff] %vm1264, %v1344
        %1428 = vst.msk [vmem:[#allocation2 + $0x1f8] sm:$0xff] %vm1264, %v1346
        %1429 = vst.msk [vmem:[#allocation2 + $0x210] sm:$0xff] %vm1264, %v1348
        %1430 = vst.msk [vmem:[#allocation2 + $0x228] sm:$0xff] %vm1264, %v1350
        %1431 = vst.msk [vmem:[#allocation2 + $0x240] sm:$0xff] %vm1264, %v1352
        %1432 = vst.msk [vmem:[#allocation2 + $0x258] sm:$0xff] %vm1264, %v1354
        %1433 = vst.msk [vmem:[#allocation2 + $0x270] sm:$0xff] %vm1264, %v1356
        %1434 = vst.msk [vmem:[#allocation2 + $0x288] sm:$0xff] %vm1264, %v1358
        %1435 = vst.msk [vmem:[#allocation2 + $0x2a0] sm:$0xff] %vm1264, %v1360
        %1436 = vst.msk [vmem:[#allocation2 + $0x2b8] sm:$0xff] %vm1264, %v1362
        %1437 = vst.msk [vmem:[#allocation2 + $0x2d0] sm:$0xff] %vm1264, %v1364
        %1438 = vst.msk [vmem:[#allocation2 + $0x2e8] sm:$0xff] %vm1264, %v1366
        %1439 = vst.msk [vmem:[#allocation2 + $0x300] sm:$0xff] %vm1264, %v1368
        %1440 = vst.msk [vmem:[#allocation2 + $0x318] sm:$0xff] %vm1264, %v1370
        %1441 = vst.msk [vmem:[#allocation2 + $0x330] sm:$0xff] %vm1264, %v1372
        %1442 = vst.msk [vmem:[#allocation2 + $0x348] sm:$0xff] %vm1264, %v1374
        %1443 = vst.msk [vmem:[#allocation2 + $0x360] sm:$0xff] %vm1264, %v1376
        %1444 = vst.msk [vmem:[#allocation2 + $0x378] sm:$0xff] %vm1264, %v1378
        %1445 = vst.msk [vmem:[#allocation2 + $0x390] sm:$0x1] %vm1271, %v1377
        %1478 = vrot.lane.b32.xlu0 %v557, 32
        %v1479 = vpop.permute.xlu0 %1478
        %1480 = vrot.lane.b32.xlu0 %v558, 32
        %v1481 = vpop.permute.xlu0 %1480
        %1482 = vrot.lane.b32.xlu0 %v559, 32
        %v1483 = vpop.permute.xlu0 %1482
        %1484 = vrot.lane.b32.xlu0 %v560, 32
        %v1485 = vpop.permute.xlu0 %1484
        %1486 = vrot.lane.b32.xlu0 %v561, 32
        %v1487 = vpop.permute.xlu0 %1486
        %1488 = vrot.lane.b32.xlu0 %v562, 32
        %v1489 = vpop.permute.xlu0 %1488
        %1490 = vrot.lane.b32.xlu0 %v563, 32
        %v1491 = vpop.permute.xlu0 %1490
        %1492 = vrot.lane.b32.xlu0 %v564, 32
        %v1493 = vpop.permute.xlu0 %1492
        %1494 = vrot.lane.b32.xlu0 %v565, 32
        %v1495 = vpop.permute.xlu0 %1494
        %1496 = vrot.lane.b32.xlu0 %v566, 32
        %v1497 = vpop.permute.xlu0 %1496
        %1498 = vrot.lane.b32.xlu0 %v567, 32
        %v1499 = vpop.permute.xlu0 %1498
        %1500 = vrot.lane.b32.xlu0 %v568, 32
        %v1501 = vpop.permute.xlu0 %1500
        %1502 = vrot.lane.b32.xlu0 %v569, 32
        %v1503 = vpop.permute.xlu0 %1502
        %1504 = vrot.lane.b32.xlu0 %v570, 32
        %v1505 = vpop.permute.xlu0 %1504
        %1506 = vrot.lane.b32.xlu0 %v571, 32
        %v1507 = vpop.permute.xlu0 %1506
        %1508 = vrot.lane.b32.xlu0 %v572, 32
        %v1509 = vpop.permute.xlu0 %1508
        %1510 = vrot.lane.b32.xlu0 %v573, 32
        %v1511 = vpop.permute.xlu0 %1510
        %1512 = vrot.lane.b32.xlu0 %v574, 32
        %v1513 = vpop.permute.xlu0 %1512
        %1514 = vrot.lane.b32.xlu0 %v575, 32
        %v1515 = vpop.permute.xlu0 %1514
        %1516 = vrot.lane.b32.xlu0 %v576, 32
        %v1517 = vpop.permute.xlu0 %1516
        %1518 = vrot.lane.b32.xlu0 %v577, 32
        %v1519 = vpop.permute.xlu0 %1518
        %1520 = vrot.lane.b32.xlu0 %v578, 32
        %v1521 = vpop.permute.xlu0 %1520
        %1522 = vrot.lane.b32.xlu0 %v579, 32
        %v1523 = vpop.permute.xlu0 %1522
        %1524 = vrot.lane.b32.xlu0 %v580, 32
        %v1525 = vpop.permute.xlu0 %1524
        %1526 = vrot.lane.b32.xlu0 %v581, 32
        %v1527 = vpop.permute.xlu0 %1526
        %1528 = vrot.lane.b32.xlu0 %v582, 32
        %v1529 = vpop.permute.xlu0 %1528
        %1530 = vrot.lane.b32.xlu0 %v583, 32
        %v1531 = vpop.permute.xlu0 %1530
        %1532 = vrot.lane.b32.xlu0 %v584, 32
        %v1533 = vpop.permute.xlu0 %1532
        %1534 = vrot.lane.b32.xlu0 %v585, 32
        %v1535 = vpop.permute.xlu0 %1534
        %1536 = vrot.lane.b32.xlu0 %v586, 32
        %v1537 = vpop.permute.xlu0 %1536
        %1538 = vrot.lane.b32.xlu0 %v587, 32
        %v1539 = vpop.permute.xlu0 %1538
        %1540 = vrot.lane.b32.xlu0 %v588, 32
        %v1541 = vpop.permute.xlu0 %1540
        %vm1574 = vcmask 523520
        %1575 = vst.msk [vmem:[#allocation2 + $0x90] sm:$0xff] %vm1574, %v1479
        %1576 = vst.msk [vmem:[#allocation2 + $0xa8] sm:$0xff] %vm1574, %v1481
        %1577 = vst.msk [vmem:[#allocation2 + $0xc0] sm:$0xff] %vm1574, %v1483
        %1578 = vst.msk [vmem:[#allocation2 + $0xd8] sm:$0xff] %vm1574, %v1485
        %1579 = vst.msk [vmem:[#allocation2 + $0xf0] sm:$0xff] %vm1574, %v1487
        %1580 = vst.msk [vmem:[#allocation2 + $0x108] sm:$0xff] %vm1574, %v1489
        %1581 = vst.msk [vmem:[#allocation2 + $0x120] sm:$0xff] %vm1574, %v1491
        %1582 = vst.msk [vmem:[#allocation2 + $0x138] sm:$0xff] %vm1574, %v1493
        %1583 = vst.msk [vmem:[#allocation2 + $0x150] sm:$0xff] %vm1574, %v1495
        %1584 = vst.msk [vmem:[#allocation2 + $0x168] sm:$0xff] %vm1574, %v1497
        %1585 = vst.msk [vmem:[#allocation2 + $0x180] sm:$0xff] %vm1574, %v1499
        %1586 = vst.msk [vmem:[#allocation2 + $0x198] sm:$0xff] %vm1574, %v1501
        %1587 = vst.msk [vmem:[#allocation2 + $0x1b0] sm:$0xff] %vm1574, %v1503
        %1588 = vst.msk [vmem:[#allocation2 + $0x1c8] sm:$0xff] %vm1574, %v1505
        %1589 = vst.msk [vmem:[#allocation2 + $0x1e0] sm:$0xff] %vm1574, %v1507
        %1590 = vst.msk [vmem:[#allocation2 + $0x1f8] sm:$0xff] %vm1574, %v1509
        %1591 = vst.msk [vmem:[#allocation2 + $0x210] sm:$0xff] %vm1574, %v1511
        %1592 = vst.msk [vmem:[#allocation2 + $0x228] sm:$0xff] %vm1574, %v1513
        %1593 = vst.msk [vmem:[#allocation2 + $0x240] sm:$0xff] %vm1574, %v1515
        %1594 = vst.msk [vmem:[#allocation2 + $0x258] sm:$0xff] %vm1574, %v1517
        %1595 = vst.msk [vmem:[#allocation2 + $0x270] sm:$0xff] %vm1574, %v1519
        %1596 = vst.msk [vmem:[#allocation2 + $0x288] sm:$0xff] %vm1574, %v1521
        %1597 = vst.msk [vmem:[#allocation2 + $0x2a0] sm:$0xff] %vm1574, %v1523
        %1598 = vst.msk [vmem:[#allocation2 + $0x2b8] sm:$0xff] %vm1574, %v1525
        %1599 = vst.msk [vmem:[#allocation2 + $0x2d0] sm:$0xff] %vm1574, %v1527
        %1600 = vst.msk [vmem:[#allocation2 + $0x2e8] sm:$0xff] %vm1574, %v1529
        %1601 = vst.msk [vmem:[#allocation2 + $0x300] sm:$0xff] %vm1574, %v1531
        %1602 = vst.msk [vmem:[#allocation2 + $0x318] sm:$0xff] %vm1574, %v1533
        %1603 = vst.msk [vmem:[#allocation2 + $0x330] sm:$0xff] %vm1574, %v1535
        %1604 = vst.msk [vmem:[#allocation2 + $0x348] sm:$0xff] %vm1574, %v1537
        %1605 = vst.msk [vmem:[#allocation2 + $0x360] sm:$0xff] %vm1574, %v1539
        %1606 = vst.msk [vmem:[#allocation2 + $0x378] sm:$0xff] %vm1574, %v1541
        %vm1639 = vcmask 1046528
        %v1640 = vrot.slane %v1230, 1
        %v1641 = vrot.slane %v1231, 1
        %v1642 = vsel %vm1639, %v1640, %v1641
        %v1643 = vrot.slane %v1232, 1
        %v1644 = vsel %vm1639, %v1641, %v1643
        %v1645 = vrot.slane %v1233, 1
        %v1646 = vsel %vm1639, %v1643, %v1645
        %v1647 = vrot.slane %v1234, 1
        %v1648 = vsel %vm1639, %v1645, %v1647
        %v1649 = vrot.slane %v1235, 1
        %v1650 = vsel %vm1639, %v1647, %v1649
        %v1651 = vrot.slane %v1236, 1
        %v1652 = vsel %vm1639, %v1649, %v1651
        %v1653 = vrot.slane %v1237, 1
        %v1654 = vsel %vm1639, %v1651, %v1653
        %v1655 = vrot.slane %v1238, 1
        %v1656 = vsel %vm1639, %v1653, %v1655
        %v1657 = vrot.slane %v1239, 1
        %v1658 = vsel %vm1639, %v1655, %v1657
        %v1659 = vrot.slane %v1240, 1
        %v1660 = vsel %vm1639, %v1657, %v1659
        %v1661 = vrot.slane %v1241, 1
        %v1662 = vsel %vm1639, %v1659, %v1661
        %v1663 = vrot.slane %v1242, 1
        %v1664 = vsel %vm1639, %v1661, %v1663
        %v1665 = vrot.slane %v1243, 1
        %v1666 = vsel %vm1639, %v1663, %v1665
        %v1667 = vrot.slane %v1244, 1
        %v1668 = vsel %vm1639, %v1665, %v1667
        %v1669 = vrot.slane %v1245, 1
        %v1670 = vsel %vm1639, %v1667, %v1669
        %v1671 = vrot.slane %v1246, 1
        %v1672 = vsel %vm1639, %v1669, %v1671
        %v1673 = vrot.slane %v1247, 1
        %v1674 = vsel %vm1639, %v1671, %v1673
        %v1675 = vrot.slane %v1248, 1
        %v1676 = vsel %vm1639, %v1673, %v1675
        %v1677 = vrot.slane %v1249, 1
        %v1678 = vsel %vm1639, %v1675, %v1677
        %v1679 = vrot.slane %v1250, 1
        %v1680 = vsel %vm1639, %v1677, %v1679
        %v1681 = vrot.slane %v1251, 1
        %v1682 = vsel %vm1639, %v1679, %v1681
        %v1683 = vrot.slane %v1252, 1
        %v1684 = vsel %vm1639, %v1681, %v1683
        %v1685 = vrot.slane %v1253, 1
        %v1686 = vsel %vm1639, %v1683, %v1685
        %v1687 = vrot.slane %v1254, 1
        %v1688 = vsel %vm1639, %v1685, %v1687
        %v1689 = vrot.slane %v1255, 1
        %v1690 = vsel %vm1639, %v1687, %v1689
        %v1691 = vrot.slane %v1256, 1
        %v1692 = vsel %vm1639, %v1689, %v1691
        %v1693 = vrot.slane %v1257, 1
        %v1694 = vsel %vm1639, %v1691, %v1693
        %v1695 = vrot.slane %v1258, 1
        %v1696 = vsel %vm1639, %v1693, %v1695
        %v1697 = vrot.slane %v1259, 1
        %v1698 = vsel %vm1639, %v1695, %v1697
        %v1699 = vrot.slane %v1260, 1
        %v1700 = vsel %vm1639, %v1697, %v1699
        %v1701 = vrot.slane %v1261, 1
        %v1702 = vsel %vm1639, %v1699, %v1701
        %1703 = vrot.lane.b32.xlu0 %v1640, 64
        %v1704 = vpop.permute.xlu0 %1703
        %1705 = vrot.lane.b32.xlu0 %v1642, 64
        %v1706 = vpop.permute.xlu0 %1705
        %1707 = vrot.lane.b32.xlu0 %v1644, 64
        %v1708 = vpop.permute.xlu0 %1707
        %1709 = vrot.lane.b32.xlu0 %v1646, 64
        %v1710 = vpop.permute.xlu0 %1709
        %1711 = vrot.lane.b32.xlu0 %v1648, 64
        %v1712 = vpop.permute.xlu0 %1711
        %1713 = vrot.lane.b32.xlu0 %v1650, 64
        %v1714 = vpop.permute.xlu0 %1713
        %1715 = vrot.lane.b32.xlu0 %v1652, 64
        %v1716 = vpop.permute.xlu0 %1715
        %1717 = vrot.lane.b32.xlu0 %v1654, 64
        %v1718 = vpop.permute.xlu0 %1717
        %1719 = vrot.lane.b32.xlu0 %v1656, 64
        %v1720 = vpop.permute.xlu0 %1719
        %1721 = vrot.lane.b32.xlu0 %v1658, 64
        %v1722 = vpop.permute.xlu0 %1721
        %1723 = vrot.lane.b32.xlu0 %v1660, 64
        %v1724 = vpop.permute.xlu0 %1723
        %1725 = vrot.lane.b32.xlu0 %v1662, 64
        %v1726 = vpop.permute.xlu0 %1725
        %1727 = vrot.lane.b32.xlu0 %v1664, 64
        %v1728 = vpop.permute.xlu0 %1727
        %1729 = vrot.lane.b32.xlu0 %v1666, 64
        %v1730 = vpop.permute.xlu0 %1729
        %1731 = vrot.lane.b32.xlu0 %v1668, 64
        %v1732 = vpop.permute.xlu0 %1731
        %1733 = vrot.lane.b32.xlu0 %v1670, 64
        %v1734 = vpop.permute.xlu0 %1733
        %1735 = vrot.lane.b32.xlu0 %v1672, 64
        %v1736 = vpop.permute.xlu0 %1735
        %1737 = vrot.lane.b32.xlu0 %v1674, 64
        %v1738 = vpop.permute.xlu0 %1737
        %1739 = vrot.lane.b32.xlu0 %v1676, 64
        %v1740 = vpop.permute.xlu0 %1739
        %1741 = vrot.lane.b32.xlu0 %v1678, 64
        %v1742 = vpop.permute.xlu0 %1741
        %1743 = vrot.lane.b32.xlu0 %v1680, 64
        %v1744 = vpop.permute.xlu0 %1743
        %1745 = vrot.lane.b32.xlu0 %v1682, 64
        %v1746 = vpop.permute.xlu0 %1745
        %1747 = vrot.lane.b32.xlu0 %v1684, 64
        %v1748 = vpop.permute.xlu0 %1747
        %1749 = vrot.lane.b32.xlu0 %v1686, 64
        %v1750 = vpop.permute.xlu0 %1749
        %1751 = vrot.lane.b32.xlu0 %v1688, 64
        %v1752 = vpop.permute.xlu0 %1751
        %1753 = vrot.lane.b32.xlu0 %v1690, 64
        %v1754 = vpop.permute.xlu0 %1753
        %1755 = vrot.lane.b32.xlu0 %v1692, 64
        %v1756 = vpop.permute.xlu0 %1755
        %1757 = vrot.lane.b32.xlu0 %v1694, 64
        %v1758 = vpop.permute.xlu0 %1757
        %1759 = vrot.lane.b32.xlu0 %v1696, 64
        %v1760 = vpop.permute.xlu0 %1759
        %1761 = vrot.lane.b32.xlu0 %v1698, 64
        %v1762 = vpop.permute.xlu0 %1761
        %1763 = vrot.lane.b32.xlu0 %v1700, 64
        %v1764 = vpop.permute.xlu0 %1763
        %1765 = vrot.lane.b32.xlu0 %v1702, 64
        %v1766 = vpop.permute.xlu0 %1765
        %1767 = vrot.lane.b32.xlu0 %v1701, 64
        %v1768 = vpop.permute.xlu0 %1767
        %vm1802 = vcmask 785927
        %1803 = vst.msk [vmem:[#allocation2 + $0x78] sm:$0x80] %vm1802, %v1704
        %vm1804 = vcmask 785920
        %1805 = vst.msk [vmem:[#allocation2 + $0x90] sm:$0xff] %vm1804, %v1706
        %1806 = vst.msk [vmem:[#allocation2 + $0xa8] sm:$0xff] %vm1804, %v1708
        %1807 = vst.msk [vmem:[#allocation2 + $0xc0] sm:$0xff] %vm1804, %v1710
        %1808 = vst.msk [vmem:[#allocation2 + $0xd8] sm:$0xff] %vm1804, %v1712
        %1809 = vst.msk [vmem:[#allocation2 + $0xf0] sm:$0xff] %vm1804, %v1714
        %1810 = vst.msk [vmem:[#allocation2 + $0x108] sm:$0xff] %vm1804, %v1716
        %1811 = vst.msk [vmem:[#allocation2 + $0x120] sm:$0xff] %vm1804, %v1718
        %1812 = vst.msk [vmem:[#allocation2 + $0x138] sm:$0xff] %vm1804, %v1720
        %1813 = vst.msk [vmem:[#allocation2 + $0x150] sm:$0xff] %vm1804, %v1722
        %1814 = vst.msk [vmem:[#allocation2 + $0x168] sm:$0xff] %vm1804, %v1724
        %1815 = vst.msk [vmem:[#allocation2 + $0x180] sm:$0xff] %vm1804, %v1726
        %1816 = vst.msk [vmem:[#allocation2 + $0x198] sm:$0xff] %vm1804, %v1728
        %1817 = vst.msk [vmem:[#allocation2 + $0x1b0] sm:$0xff] %vm1804, %v1730
        %1818 = vst.msk [vmem:[#allocation2 + $0x1c8] sm:$0xff] %vm1804, %v1732
        %1819 = vst.msk [vmem:[#allocation2 + $0x1e0] sm:$0xff] %vm1804, %v1734
        %1820 = vst.msk [vmem:[#allocation2 + $0x1f8] sm:$0xff] %vm1804, %v1736
        %1821 = vst.msk [vmem:[#allocation2 + $0x210] sm:$0xff] %vm1804, %v1738
        %1822 = vst.msk [vmem:[#allocation2 + $0x228] sm:$0xff] %vm1804, %v1740
        %1823 = vst.msk [vmem:[#allocation2 + $0x240] sm:$0xff] %vm1804, %v1742
        %1824 = vst.msk [vmem:[#allocation2 + $0x258] sm:$0xff] %vm1804, %v1744
        %1825 = vst.msk [vmem:[#allocation2 + $0x270] sm:$0xff] %vm1804, %v1746
        %1826 = vst.msk [vmem:[#allocation2 + $0x288] sm:$0xff] %vm1804, %v1748
        %1827 = vst.msk [vmem:[#allocation2 + $0x2a0] sm:$0xff] %vm1804, %v1750
        %1828 = vst.msk [vmem:[#allocation2 + $0x2b8] sm:$0xff] %vm1804, %v1752
        %1829 = vst.msk [vmem:[#allocation2 + $0x2d0] sm:$0xff] %vm1804, %v1754
        %1830 = vst.msk [vmem:[#allocation2 + $0x2e8] sm:$0xff] %vm1804, %v1756
        %1831 = vst.msk [vmem:[#allocation2 + $0x300] sm:$0xff] %vm1804, %v1758
        %1832 = vst.msk [vmem:[#allocation2 + $0x318] sm:$0xff] %vm1804, %v1760
        %1833 = vst.msk [vmem:[#allocation2 + $0x330] sm:$0xff] %vm1804, %v1762
        %1834 = vst.msk [vmem:[#allocation2 + $0x348] sm:$0xff] %vm1804, %v1764
        %1835 = vst.msk [vmem:[#allocation2 + $0x360] sm:$0xff] %vm1804, %v1766
        %vm1836 = vcmask 784896
        %1837 = vst.msk [vmem:[#allocation2 + $0x378] sm:$0x7f] %vm1836, %v1768
        %1838 = vrot.lane.b32.xlu0 %v1316, 96
        %v1839 = vpop.permute.xlu0 %1838
        %1840 = vrot.lane.b32.xlu0 %v1318, 96
        %v1841 = vpop.permute.xlu0 %1840
        %1842 = vrot.lane.b32.xlu0 %v1320, 96
        %v1843 = vpop.permute.xlu0 %1842
        %1844 = vrot.lane.b32.xlu0 %v1322, 96
        %v1845 = vpop.permute.xlu0 %1844
        %1846 = vrot.lane.b32.xlu0 %v1324, 96
        %v1847 = vpop.permute.xlu0 %1846
        %1848 = vrot.lane.b32.xlu0 %v1326, 96
        %v1849 = vpop.permute.xlu0 %1848
        %1850 = vrot.lane.b32.xlu0 %v1328, 96
        %v1851 = vpop.permute.xlu0 %1850
        %1852 = vrot.lane.b32.xlu0 %v1330, 96
        %v1853 = vpop.permute.xlu0 %1852
        %1854 = vrot.lane.b32.xlu0 %v1332, 96
        %v1855 = vpop.permute.xlu0 %1854
        %1856 = vrot.lane.b32.xlu0 %v1334, 96
        %v1857 = vpop.permute.xlu0 %1856
        %1858 = vrot.lane.b32.xlu0 %v1336, 96
        %v1859 = vpop.permute.xlu0 %1858
        %1860 = vrot.lane.b32.xlu0 %v1338, 96
        %v1861 = vpop.permute.xlu0 %1860
        %1862 = vrot.lane.b32.xlu0 %v1340, 96
        %v1863 = vpop.permute.xlu0 %1862
        %1864 = vrot.lane.b32.xlu0 %v1342, 96
        %v1865 = vpop.permute.xlu0 %1864
        %1866 = vrot.lane.b32.xlu0 %v1344, 96
        %v1867 = vpop.permute.xlu0 %1866
        %1868 = vrot.lane.b32.xlu0 %v1346, 96
        %v1869 = vpop.permute.xlu0 %1868
        %1870 = vrot.lane.b32.xlu0 %v1348, 96
        %v1871 = vpop.permute.xlu0 %1870
        %1872 = vrot.lane.b32.xlu0 %v1350, 96
        %v1873 = vpop.permute.xlu0 %1872
        %1874 = vrot.lane.b32.xlu0 %v1352, 96
        %v1875 = vpop.permute.xlu0 %1874
        %1876 = vrot.lane.b32.xlu0 %v1354, 96
        %v1877 = vpop.permute.xlu0 %1876
        %1878 = vrot.lane.b32.xlu0 %v1356, 96
        %v1879 = vpop.permute.xlu0 %1878
        %1880 = vrot.lane.b32.xlu0 %v1358, 96
        %v1881 = vpop.permute.xlu0 %1880
        %1882 = vrot.lane.b32.xlu0 %v1360, 96
        %v1883 = vpop.permute.xlu0 %1882
        %1884 = vrot.lane.b32.xlu0 %v1362, 96
        %v1885 = vpop.permute.xlu0 %1884
        %1886 = vrot.lane.b32.xlu0 %v1364, 96
        %v1887 = vpop.permute.xlu0 %1886
        %1888 = vrot.lane.b32.xlu0 %v1366, 96
        %v1889 = vpop.permute.xlu0 %1888
        %1890 = vrot.lane.b32.xlu0 %v1368, 96
        %v1891 = vpop.permute.xlu0 %1890
        %1892 = vrot.lane.b32.xlu0 %v1370, 96
        %v1893 = vpop.permute.xlu0 %1892
        %1894 = vrot.lane.b32.xlu0 %v1372, 96
        %v1895 = vpop.permute.xlu0 %1894
        %1896 = vrot.lane.b32.xlu0 %v1374, 96
        %v1897 = vpop.permute.xlu0 %1896
        %1898 = vrot.lane.b32.xlu0 %v1376, 96
        %v1899 = vpop.permute.xlu0 %1898
        %1900 = vrot.lane.b32.xlu0 %v1378, 96
        %v1901 = vpop.permute.xlu0 %1900
        %1902 = vrot.lane.b32.xlu0 %v1377, 96
        %v1903 = vpop.permute.xlu0 %1902
        %vm1937 = vcmask 1048321
        %1938 = vst.msk [vmem:[#allocation2 + $0x60] sm:$0xfe] %vm1937, %v1839
        %vm1939 = vcmask 1048320
        %1940 = vst.msk [vmem:[#allocation2 + $0x78] sm:$0xff] %vm1939, %v1841
        %1941 = vst.msk [vmem:[#allocation2 + $0x90] sm:$0xff] %vm1939, %v1843
        %1942 = vst.msk [vmem:[#allocation2 + $0xa8] sm:$0xff] %vm1939, %v1845
        %1943 = vst.msk [vmem:[#allocation2 + $0xc0] sm:$0xff] %vm1939, %v1847
        %1944 = vst.msk [vmem:[#allocation2 + $0xd8] sm:$0xff] %vm1939, %v1849
        %1945 = vst.msk [vmem:[#allocation2 + $0xf0] sm:$0xff] %vm1939, %v1851
        %1946 = vst.msk [vmem:[#allocation2 + $0x108] sm:$0xff] %vm1939, %v1853
        %1947 = vst.msk [vmem:[#allocation2 + $0x120] sm:$0xff] %vm1939, %v1855
        %1948 = vst.msk [vmem:[#allocation2 + $0x138] sm:$0xff] %vm1939, %v1857
        %1949 = vst.msk [vmem:[#allocation2 + $0x150] sm:$0xff] %vm1939, %v1859
        %1950 = vst.msk [vmem:[#allocation2 + $0x168] sm:$0xff] %vm1939, %v1861
        %1951 = vst.msk [vmem:[#allocation2 + $0x180] sm:$0xff] %vm1939, %v1863
        %1952 = vst.msk [vmem:[#allocation2 + $0x198] sm:$0xff] %vm1939, %v1865
        %1953 = vst.msk [vmem:[#allocation2 + $0x1b0] sm:$0xff] %vm1939, %v1867
        %1954 = vst.msk [vmem:[#allocation2 + $0x1c8] sm:$0xff] %vm1939, %v1869
        %1955 = vst.msk [vmem:[#allocation2 + $0x1e0] sm:$0xff] %vm1939, %v1871
        %1956 = vst.msk [vmem:[#allocation2 + $0x1f8] sm:$0xff] %vm1939, %v1873
        %1957 = vst.msk [vmem:[#allocation2 + $0x210] sm:$0xff] %vm1939, %v1875
        %1958 = vst.msk [vmem:[#allocation2 + $0x228] sm:$0xff] %vm1939, %v1877
        %1959 = vst.msk [vmem:[#allocation2 + $0x240] sm:$0xff] %vm1939, %v1879
        %1960 = vst.msk [vmem:[#allocation2 + $0x258] sm:$0xff] %vm1939, %v1881
        %1961 = vst.msk [vmem:[#allocation2 + $0x270] sm:$0xff] %vm1939, %v1883
        %1962 = vst.msk [vmem:[#allocation2 + $0x288] sm:$0xff] %vm1939, %v1885
        %1963 = vst.msk [vmem:[#allocation2 + $0x2a0] sm:$0xff] %vm1939, %v1887
        %1964 = vst.msk [vmem:[#allocation2 + $0x2b8] sm:$0xff] %vm1939, %v1889
        %1965 = vst.msk [vmem:[#allocation2 + $0x2d0] sm:$0xff] %vm1939, %v1891
        %1966 = vst.msk [vmem:[#allocation2 + $0x2e8] sm:$0xff] %vm1939, %v1893
        %1967 = vst.msk [vmem:[#allocation2 + $0x300] sm:$0xff] %vm1939, %v1895
        %1968 = vst.msk [vmem:[#allocation2 + $0x318] sm:$0xff] %vm1939, %v1897
        %1969 = vst.msk [vmem:[#allocation2 + $0x330] sm:$0xff] %vm1939, %v1899
        %1970 = vst.msk [vmem:[#allocation2 + $0x348] sm:$0xff] %vm1939, %v1901
        %vm1971 = vcmask 1041152
        %1972 = vst.msk [vmem:[#allocation2 + $0x360] sm:$0x1] %vm1971, %v1903
        %1973 = vst.msk [vmem:[#allocation2 + $0x68] sm:$0xff] %vm1264, %v557
        %1974 = vst.msk [vmem:[#allocation2 + $0x80] sm:$0xff] %vm1264, %v558
        %1975 = vst.msk [vmem:[#allocation2 + $0x98] sm:$0xff] %vm1264, %v559
        %1976 = vst.msk [vmem:[#allocation2 + $0xb0] sm:$0xff] %vm1264, %v560
        %1977 = vst.msk [vmem:[#allocation2 + $0xc8] sm:$0xff] %vm1264, %v561
        %1978 = vst.msk [vmem:[#allocation2 + $0xe0] sm:$0xff] %vm1264, %v562
        %1979 = vst.msk [vmem:[#allocation2 + $0xf8] sm:$0xff] %vm1264, %v563
        %1980 = vst.msk [vmem:[#allocation2 + $0x110] sm:$0xff] %vm1264, %v564
        %1981 = vst.msk [vmem:[#allocation2 + $0x128] sm:$0xff] %vm1264, %v565
        %1982 = vst.msk [vmem:[#allocation2 + $0x140] sm:$0xff] %vm1264, %v566
        %1983 = vst.msk [vmem:[#allocation2 + $0x158] sm:$0xff] %vm1264, %v567
        %1984 = vst.msk [vmem:[#allocation2 + $0x170] sm:$0xff] %vm1264, %v568
        %1985 = vst.msk [vmem:[#allocation2 + $0x188] sm:$0xff] %vm1264, %v569
        %1986 = vst.msk [vmem:[#allocation2 + $0x1a0] sm:$0xff] %vm1264, %v570
        %1987 = vst.msk [vmem:[#allocation2 + $0x1b8] sm:$0xff] %vm1264, %v571
        %1988 = vst.msk [vmem:[#allocation2 + $0x1d0] sm:$0xff] %vm1264, %v572
        %1989 = vst.msk [vmem:[#allocation2 + $0x1e8] sm:$0xff] %vm1264, %v573
        %1990 = vst.msk [vmem:[#allocation2 + $0x200] sm:$0xff] %vm1264, %v574
        %1991 = vst.msk [vmem:[#allocation2 + $0x218] sm:$0xff] %vm1264, %v575
        %1992 = vst.msk [vmem:[#allocation2 + $0x230] sm:$0xff] %vm1264, %v576
        %1993 = vst.msk [vmem:[#allocation2 + $0x248] sm:$0xff] %vm1264, %v577
        %1994 = vst.msk [vmem:[#allocation2 + $0x260] sm:$0xff] %vm1264, %v578
        %1995 = vst.msk [vmem:[#allocation2 + $0x278] sm:$0xff] %vm1264, %v579
        %1996 = vst.msk [vmem:[#allocation2 + $0x290] sm:$0xff] %vm1264, %v580
        %1997 = vst.msk [vmem:[#allocation2 + $0x2a8] sm:$0xff] %vm1264, %v581
        %1998 = vst.msk [vmem:[#allocation2 + $0x2c0] sm:$0xff] %vm1264, %v582
        %1999 = vst.msk [vmem:[#allocation2 + $0x2d8] sm:$0xff] %vm1264, %v583
        %2000 = vst.msk [vmem:[#allocation2 + $0x2f0] sm:$0xff] %vm1264, %v584
        %2001 = vst.msk [vmem:[#allocation2 + $0x308] sm:$0xff] %vm1264, %v585
        %2002 = vst.msk [vmem:[#allocation2 + $0x320] sm:$0xff] %vm1264, %v586
        %2003 = vst.msk [vmem:[#allocation2 + $0x338] sm:$0xff] %vm1264, %v587
        %2004 = vst.msk [vmem:[#allocation2 + $0x350] sm:$0xff] %vm1264, %v588
        %2005 = vrot.lane.b32.xlu0 %v1640, 32
        %v2006 = vpop.permute.xlu0 %2005
        %2007 = vrot.lane.b32.xlu0 %v1642, 32
        %v2008 = vpop.permute.xlu0 %2007
        %2009 = vrot.lane.b32.xlu0 %v1644, 32
        %v2010 = vpop.permute.xlu0 %2009
        %2011 = vrot.lane.b32.xlu0 %v1646, 32
        %v2012 = vpop.permute.xlu0 %2011
        %2013 = vrot.lane.b32.xlu0 %v1648, 32
        %v2014 = vpop.permute.xlu0 %2013
        %2015 = vrot.lane.b32.xlu0 %v1650, 32
        %v2016 = vpop.permute.xlu0 %2015
        %2017 = vrot.lane.b32.xlu0 %v1652, 32
        %v2018 = vpop.permute.xlu0 %2017
        %2019 = vrot.lane.b32.xlu0 %v1654, 32
        %v2020 = vpop.permute.xlu0 %2019
        %2021 = vrot.lane.b32.xlu0 %v1656, 32
        %v2022 = vpop.permute.xlu0 %2021
        %2023 = vrot.lane.b32.xlu0 %v1658, 32
        %v2024 = vpop.permute.xlu0 %2023
        %2025 = vrot.lane.b32.xlu0 %v1660, 32
        %v2026 = vpop.permute.xlu0 %2025
        %2027 = vrot.lane.b32.xlu0 %v1662, 32
        %v2028 = vpop.permute.xlu0 %2027
        %2029 = vrot.lane.b32.xlu0 %v1664, 32
        %v2030 = vpop.permute.xlu0 %2029
        %2031 = vrot.lane.b32.xlu0 %v1666, 32
        %v2032 = vpop.permute.xlu0 %2031
        %2033 = vrot.lane.b32.xlu0 %v1668, 32
        %v2034 = vpop.permute.xlu0 %2033
        %2035 = vrot.lane.b32.xlu0 %v1670, 32
        %v2036 = vpop.permute.xlu0 %2035
        %2037 = vrot.lane.b32.xlu0 %v1672, 32
        %v2038 = vpop.permute.xlu0 %2037
        %2039 = vrot.lane.b32.xlu0 %v1674, 32
        %v2040 = vpop.permute.xlu0 %2039
        %2041 = vrot.lane.b32.xlu0 %v1676, 32
        %v2042 = vpop.permute.xlu0 %2041
        %2043 = vrot.lane.b32.xlu0 %v1678, 32
        %v2044 = vpop.permute.xlu0 %2043
        %2045 = vrot.lane.b32.xlu0 %v1680, 32
        %v2046 = vpop.permute.xlu0 %2045
        %2047 = vrot.lane.b32.xlu0 %v1682, 32
        %v2048 = vpop.permute.xlu0 %2047
        %2049 = vrot.lane.b32.xlu0 %v1684, 32
        %v2050 = vpop.permute.xlu0 %2049
        %2051 = vrot.lane.b32.xlu0 %v1686, 32
        %v2052 = vpop.permute.xlu0 %2051
        %2053 = vrot.lane.b32.xlu0 %v1688, 32
        %v2054 = vpop.permute.xlu0 %2053
        %2055 = vrot.lane.b32.xlu0 %v1690, 32
        %v2056 = vpop.permute.xlu0 %2055
        %2057 = vrot.lane.b32.xlu0 %v1692, 32
        %v2058 = vpop.permute.xlu0 %2057
        %2059 = vrot.lane.b32.xlu0 %v1694, 32
        %v2060 = vpop.permute.xlu0 %2059
        %2061 = vrot.lane.b32.xlu0 %v1696, 32
        %v2062 = vpop.permute.xlu0 %2061
        %2063 = vrot.lane.b32.xlu0 %v1698, 32
        %v2064 = vpop.permute.xlu0 %2063
        %2065 = vrot.lane.b32.xlu0 %v1700, 32
        %v2066 = vpop.permute.xlu0 %2065
        %2067 = vrot.lane.b32.xlu0 %v1702, 32
        %v2068 = vpop.permute.xlu0 %2067
        %2069 = vrot.lane.b32.xlu0 %v1701, 32
        %v2070 = vpop.permute.xlu0 %2069
        %vm2104 = vcmask 523527
        %2105 = vst.msk [vmem:[#allocation2 + $0x50] sm:$0x80] %vm2104, %v2006
        %2106 = vst.msk [vmem:[#allocation2 + $0x68] sm:$0xff] %vm1574, %v2008
        %2107 = vst.msk [vmem:[#allocation2 + $0x80] sm:$0xff] %vm1574, %v2010
        %2108 = vst.msk [vmem:[#allocation2 + $0x98] sm:$0xff] %vm1574, %v2012
        %2109 = vst.msk [vmem:[#allocation2 + $0xb0] sm:$0xff] %vm1574, %v2014
        %2110 = vst.msk [vmem:[#allocation2 + $0xc8] sm:$0xff] %vm1574, %v2016
        %2111 = vst.msk [vmem:[#allocation2 + $0xe0] sm:$0xff] %vm1574, %v2018
        %2112 = vst.msk [vmem:[#allocation2 + $0xf8] sm:$0xff] %vm1574, %v2020
        %2113 = vst.msk [vmem:[#allocation2 + $0x110] sm:$0xff] %vm1574, %v2022
        %2114 = vst.msk [vmem:[#allocation2 + $0x128] sm:$0xff] %vm1574, %v2024
        %2115 = vst.msk [vmem:[#allocation2 + $0x140] sm:$0xff] %vm1574, %v2026
        %2116 = vst.msk [vmem:[#allocation2 + $0x158] sm:$0xff] %vm1574, %v2028
        %2117 = vst.msk [vmem:[#allocation2 + $0x170] sm:$0xff] %vm1574, %v2030
        %2118 = vst.msk [vmem:[#allocation2 + $0x188] sm:$0xff] %vm1574, %v2032
        %2119 = vst.msk [vmem:[#allocation2 + $0x1a0] sm:$0xff] %vm1574, %v2034
        %2120 = vst.msk [vmem:[#allocation2 + $0x1b8] sm:$0xff] %vm1574, %v2036
        %2121 = vst.msk [vmem:[#allocation2 + $0x1d0] sm:$0xff] %vm1574, %v2038
        %2122 = vst.msk [vmem:[#allocation2 + $0x1e8] sm:$0xff] %vm1574, %v2040
        %2123 = vst.msk [vmem:[#allocation2 + $0x200] sm:$0xff] %vm1574, %v2042
        %2124 = vst.msk [vmem:[#allocation2 + $0x218] sm:$0xff] %vm1574, %v2044
        %2125 = vst.msk [vmem:[#allocation2 + $0x230] sm:$0xff] %vm1574, %v2046
        %2126 = vst.msk [vmem:[#allocation2 + $0x248] sm:$0xff] %vm1574, %v2048
        %2127 = vst.msk [vmem:[#allocation2 + $0x260] sm:$0xff] %vm1574, %v2050
        %2128 = vst.msk [vmem:[#allocation2 + $0x278] sm:$0xff] %vm1574, %v2052
        %2129 = vst.msk [vmem:[#allocation2 + $0x290] sm:$0xff] %vm1574, %v2054
        %2130 = vst.msk [vmem:[#allocation2 + $0x2a8] sm:$0xff] %vm1574, %v2056
        %2131 = vst.msk [vmem:[#allocation2 + $0x2c0] sm:$0xff] %vm1574, %v2058
        %2132 = vst.msk [vmem:[#allocation2 + $0x2d8] sm:$0xff] %vm1574, %v2060
        %2133 = vst.msk [vmem:[#allocation2 + $0x2f0] sm:$0xff] %vm1574, %v2062
        %2134 = vst.msk [vmem:[#allocation2 + $0x308] sm:$0xff] %vm1574, %v2064
        %2135 = vst.msk [vmem:[#allocation2 + $0x320] sm:$0xff] %vm1574, %v2066
        %2136 = vst.msk [vmem:[#allocation2 + $0x338] sm:$0xff] %vm1574, %v2068
        %vm2137 = vcmask 522496
        %2138 = vst.msk [vmem:[#allocation2 + $0x350] sm:$0x7f] %vm2137, %v2070
        %2139 = vrot.lane.b32.xlu0 %v1316, 64
        %v2140 = vpop.permute.xlu0 %2139
        %2141 = vrot.lane.b32.xlu0 %v1318, 64
        %v2142 = vpop.permute.xlu0 %2141
        %2143 = vrot.lane.b32.xlu0 %v1320, 64
        %v2144 = vpop.permute.xlu0 %2143
        %2145 = vrot.lane.b32.xlu0 %v1322, 64
        %v2146 = vpop.permute.xlu0 %2145
        %2147 = vrot.lane.b32.xlu0 %v1324, 64
        %v2148 = vpop.permute.xlu0 %2147
        %2149 = vrot.lane.b32.xlu0 %v1326, 64
        %v2150 = vpop.permute.xlu0 %2149
        %2151 = vrot.lane.b32.xlu0 %v1328, 64
        %v2152 = vpop.permute.xlu0 %2151
        %2153 = vrot.lane.b32.xlu0 %v1330, 64
        %v2154 = vpop.permute.xlu0 %2153
        %2155 = vrot.lane.b32.xlu0 %v1332, 64
        %v2156 = vpop.permute.xlu0 %2155
        %2157 = vrot.lane.b32.xlu0 %v1334, 64
        %v2158 = vpop.permute.xlu0 %2157
        %2159 = vrot.lane.b32.xlu0 %v1336, 64
        %v2160 = vpop.permute.xlu0 %2159
        %2161 = vrot.lane.b32.xlu0 %v1338, 64
        %v2162 = vpop.permute.xlu0 %2161
        %2163 = vrot.lane.b32.xlu0 %v1340, 64
        %v2164 = vpop.permute.xlu0 %2163
        %2165 = vrot.lane.b32.xlu0 %v1342, 64
        %v2166 = vpop.permute.xlu0 %2165
        %2167 = vrot.lane.b32.xlu0 %v1344, 64
        %v2168 = vpop.permute.xlu0 %2167
        %2169 = vrot.lane.b32.xlu0 %v1346, 64
        %v2170 = vpop.permute.xlu0 %2169
        %2171 = vrot.lane.b32.xlu0 %v1348, 64
        %v2172 = vpop.permute.xlu0 %2171
        %2173 = vrot.lane.b32.xlu0 %v1350, 64
        %v2174 = vpop.permute.xlu0 %2173
        %2175 = vrot.lane.b32.xlu0 %v1352, 64
        %v2176 = vpop.permute.xlu0 %2175
        %2177 = vrot.lane.b32.xlu0 %v1354, 64
        %v2178 = vpop.permute.xlu0 %2177
        %2179 = vrot.lane.b32.xlu0 %v1356, 64
        %v2180 = vpop.permute.xlu0 %2179
        %2181 = vrot.lane.b32.xlu0 %v1358, 64
        %v2182 = vpop.permute.xlu0 %2181
        %2183 = vrot.lane.b32.xlu0 %v1360, 64
        %v2184 = vpop.permute.xlu0 %2183
        %2185 = vrot.lane.b32.xlu0 %v1362, 64
        %v2186 = vpop.permute.xlu0 %2185
        %2187 = vrot.lane.b32.xlu0 %v1364, 64
        %v2188 = vpop.permute.xlu0 %2187
        %2189 = vrot.lane.b32.xlu0 %v1366, 64
        %v2190 = vpop.permute.xlu0 %2189
        %2191 = vrot.lane.b32.xlu0 %v1368, 64
        %v2192 = vpop.permute.xlu0 %2191
        %2193 = vrot.lane.b32.xlu0 %v1370, 64
        %v2194 = vpop.permute.xlu0 %2193
        %2195 = vrot.lane.b32.xlu0 %v1372, 64
        %v2196 = vpop.permute.xlu0 %2195
        %2197 = vrot.lane.b32.xlu0 %v1374, 64
        %v2198 = vpop.permute.xlu0 %2197
        %2199 = vrot.lane.b32.xlu0 %v1376, 64
        %v2200 = vpop.permute.xlu0 %2199
        %2201 = vrot.lane.b32.xlu0 %v1378, 64
        %v2202 = vpop.permute.xlu0 %2201
        %2203 = vrot.lane.b32.xlu0 %v1377, 64
        %v2204 = vpop.permute.xlu0 %2203
        %vm2238 = vcmask 785921
        %2239 = vst.msk [vmem:[#allocation2 + $0x38] sm:$0xfe] %vm2238, %v2140
        %2240 = vst.msk [vmem:[#allocation2 + $0x50] sm:$0xff] %vm1804, %v2142
        %2241 = vst.msk [vmem:[#allocation2 + $0x68] sm:$0xff] %vm1804, %v2144
        %2242 = vst.msk [vmem:[#allocation2 + $0x80] sm:$0xff] %vm1804, %v2146
        %2243 = vst.msk [vmem:[#allocation2 + $0x98] sm:$0xff] %vm1804, %v2148
        %2244 = vst.msk [vmem:[#allocation2 + $0xb0] sm:$0xff] %vm1804, %v2150
        %2245 = vst.msk [vmem:[#allocation2 + $0xc8] sm:$0xff] %vm1804, %v2152
        %2246 = vst.msk [vmem:[#allocation2 + $0xe0] sm:$0xff] %vm1804, %v2154
        %2247 = vst.msk [vmem:[#allocation2 + $0xf8] sm:$0xff] %vm1804, %v2156
        %2248 = vst.msk [vmem:[#allocation2 + $0x110] sm:$0xff] %vm1804, %v2158
        %2249 = vst.msk [vmem:[#allocation2 + $0x128] sm:$0xff] %vm1804, %v2160
        %2250 = vst.msk [vmem:[#allocation2 + $0x140] sm:$0xff] %vm1804, %v2162
        %2251 = vst.msk [vmem:[#allocation2 + $0x158] sm:$0xff] %vm1804, %v2164
        %2252 = vst.msk [vmem:[#allocation2 + $0x170] sm:$0xff] %vm1804, %v2166
        %2253 = vst.msk [vmem:[#allocation2 + $0x188] sm:$0xff] %vm1804, %v2168
        %2254 = vst.msk [vmem:[#allocation2 + $0x1a0] sm:$0xff] %vm1804, %v2170
        %2255 = vst.msk [vmem:[#allocation2 + $0x1b8] sm:$0xff] %vm1804, %v2172
        %2256 = vst.msk [vmem:[#allocation2 + $0x1d0] sm:$0xff] %vm1804, %v2174
        %2257 = vst.msk [vmem:[#allocation2 + $0x1e8] sm:$0xff] %vm1804, %v2176
        %2258 = vst.msk [vmem:[#allocation2 + $0x200] sm:$0xff] %vm1804, %v2178
        %2259 = vst.msk [vmem:[#allocation2 + $0x218] sm:$0xff] %vm1804, %v2180
        %2260 = vst.msk [vmem:[#allocation2 + $0x230] sm:$0xff] %vm1804, %v2182
        %2261 = vst.msk [vmem:[#allocation2 + $0x248] sm:$0xff] %vm1804, %v2184
        %2262 = vst.msk [vmem:[#allocation2 + $0x260] sm:$0xff] %vm1804, %v2186
        %2263 = vst.msk [vmem:[#allocation2 + $0x278] sm:$0xff] %vm1804, %v2188
        %2264 = vst.msk [vmem:[#allocation2 + $0x290] sm:$0xff] %vm1804, %v2190
        %2265 = vst.msk [vmem:[#allocation2 + $0x2a8] sm:$0xff] %vm1804, %v2192
        %2266 = vst.msk [vmem:[#allocation2 + $0x2c0] sm:$0xff] %vm1804, %v2194
        %2267 = vst.msk [vmem:[#allocation2 + $0x2d8] sm:$0xff] %vm1804, %v2196
        %2268 = vst.msk [vmem:[#allocation2 + $0x2f0] sm:$0xff] %vm1804, %v2198
        %2269 = vst.msk [vmem:[#allocation2 + $0x308] sm:$0xff] %vm1804, %v2200
        %2270 = vst.msk [vmem:[#allocation2 + $0x320] sm:$0xff] %vm1804, %v2202
        %vm2271 = vcmask 778752
        %2272 = vst.msk [vmem:[#allocation2 + $0x338] sm:$0x1] %vm2271, %v2204
        %2273 = vrot.lane.b32.xlu0 %v557, 96
        %v2274 = vpop.permute.xlu0 %2273
        %2275 = vrot.lane.b32.xlu0 %v558, 96
        %v2276 = vpop.permute.xlu0 %2275
        %2277 = vrot.lane.b32.xlu0 %v559, 96
        %v2278 = vpop.permute.xlu0 %2277
        %2279 = vrot.lane.b32.xlu0 %v560, 96
        %v2280 = vpop.permute.xlu0 %2279
        %2281 = vrot.lane.b32.xlu0 %v561, 96
        %v2282 = vpop.permute.xlu0 %2281
        %2283 = vrot.lane.b32.xlu0 %v562, 96
        %v2284 = vpop.permute.xlu0 %2283
        %2285 = vrot.lane.b32.xlu0 %v563, 96
        %v2286 = vpop.permute.xlu0 %2285
        %2287 = vrot.lane.b32.xlu0 %v564, 96
        %v2288 = vpop.permute.xlu0 %2287
        %2289 = vrot.lane.b32.xlu0 %v565, 96
        %v2290 = vpop.permute.xlu0 %2289
        %2291 = vrot.lane.b32.xlu0 %v566, 96
        %v2292 = vpop.permute.xlu0 %2291
        %2293 = vrot.lane.b32.xlu0 %v567, 96
        %v2294 = vpop.permute.xlu0 %2293
        %2295 = vrot.lane.b32.xlu0 %v568, 96
        %v2296 = vpop.permute.xlu0 %2295
        %2297 = vrot.lane.b32.xlu0 %v569, 96
        %v2298 = vpop.permute.xlu0 %2297
        %2299 = vrot.lane.b32.xlu0 %v570, 96
        %v2300 = vpop.permute.xlu0 %2299
        %2301 = vrot.lane.b32.xlu0 %v571, 96
        %v2302 = vpop.permute.xlu0 %2301
        %2303 = vrot.lane.b32.xlu0 %v572, 96
        %v2304 = vpop.permute.xlu0 %2303
        %2305 = vrot.lane.b32.xlu0 %v573, 96
        %v2306 = vpop.permute.xlu0 %2305
        %2307 = vrot.lane.b32.xlu0 %v574, 96
        %v2308 = vpop.permute.xlu0 %2307
        %2309 = vrot.lane.b32.xlu0 %v575, 96
        %v2310 = vpop.permute.xlu0 %2309
        %2311 = vrot.lane.b32.xlu0 %v576, 96
        %v2312 = vpop.permute.xlu0 %2311
        %2313 = vrot.lane.b32.xlu0 %v577, 96
        %v2314 = vpop.permute.xlu0 %2313
        %2315 = vrot.lane.b32.xlu0 %v578, 96
        %v2316 = vpop.permute.xlu0 %2315
        %2317 = vrot.lane.b32.xlu0 %v579, 96
        %v2318 = vpop.permute.xlu0 %2317
        %2319 = vrot.lane.b32.xlu0 %v580, 96
        %v2320 = vpop.permute.xlu0 %2319
        %2321 = vrot.lane.b32.xlu0 %v581, 96
        %v2322 = vpop.permute.xlu0 %2321
        %2323 = vrot.lane.b32.xlu0 %v582, 96
        %v2324 = vpop.permute.xlu0 %2323
        %2325 = vrot.lane.b32.xlu0 %v583, 96
        %v2326 = vpop.permute.xlu0 %2325
        %2327 = vrot.lane.b32.xlu0 %v584, 96
        %v2328 = vpop.permute.xlu0 %2327
        %2329 = vrot.lane.b32.xlu0 %v585, 96
        %v2330 = vpop.permute.xlu0 %2329
        %2331 = vrot.lane.b32.xlu0 %v586, 96
        %v2332 = vpop.permute.xlu0 %2331
        %2333 = vrot.lane.b32.xlu0 %v587, 96
        %v2334 = vpop.permute.xlu0 %2333
        %2335 = vrot.lane.b32.xlu0 %v588, 96
        %v2336 = vpop.permute.xlu0 %2335
        %2369 = vst.msk [vmem:[#allocation2 + $0x38] sm:$0xff] %vm1939, %v2274
        %2370 = vst.msk [vmem:[#allocation2 + $0x50] sm:$0xff] %vm1939, %v2276
        %2371 = vst.msk [vmem:[#allocation2 + $0x68] sm:$0xff] %vm1939, %v2278
        %2372 = vst.msk [vmem:[#allocation2 + $0x80] sm:$0xff] %vm1939, %v2280
        %2373 = vst.msk [vmem:[#allocation2 + $0x98] sm:$0xff] %vm1939, %v2282
        %2374 = vst.msk [vmem:[#allocation2 + $0xb0] sm:$0xff] %vm1939, %v2284
        %2375 = vst.msk [vmem:[#allocation2 + $0xc8] sm:$0xff] %vm1939, %v2286
        %2376 = vst.msk [vmem:[#allocation2 + $0xe0] sm:$0xff] %vm1939, %v2288
        %2377 = vst.msk [vmem:[#allocation2 + $0xf8] sm:$0xff] %vm1939, %v2290
        %2378 = vst.msk [vmem:[#allocation2 + $0x110] sm:$0xff] %vm1939, %v2292
        %2379 = vst.msk [vmem:[#allocation2 + $0x128] sm:$0xff] %vm1939, %v2294
        %2380 = vst.msk [vmem:[#allocation2 + $0x140] sm:$0xff] %vm1939, %v2296
        %2381 = vst.msk [vmem:[#allocation2 + $0x158] sm:$0xff] %vm1939, %v2298
        %2382 = vst.msk [vmem:[#allocation2 + $0x170] sm:$0xff] %vm1939, %v2300
        %2383 = vst.msk [vmem:[#allocation2 + $0x188] sm:$0xff] %vm1939, %v2302
        %2384 = vst.msk [vmem:[#allocation2 + $0x1a0] sm:$0xff] %vm1939, %v2304
        %2385 = vst.msk [vmem:[#allocation2 + $0x1b8] sm:$0xff] %vm1939, %v2306
        %2386 = vst.msk [vmem:[#allocation2 + $0x1d0] sm:$0xff] %vm1939, %v2308
        %2387 = vst.msk [vmem:[#allocation2 + $0x1e8] sm:$0xff] %vm1939, %v2310
        %2388 = vst.msk [vmem:[#allocation2 + $0x200] sm:$0xff] %vm1939, %v2312
        %2389 = vst.msk [vmem:[#allocation2 + $0x218] sm:$0xff] %vm1939, %v2314
        %2390 = vst.msk [vmem:[#allocation2 + $0x230] sm:$0xff] %vm1939, %v2316
        %2391 = vst.msk [vmem:[#allocation2 + $0x248] sm:$0xff] %vm1939, %v2318
        %2392 = vst.msk [vmem:[#allocation2 + $0x260] sm:$0xff] %vm1939, %v2320
        %2393 = vst.msk [vmem:[#allocation2 + $0x278] sm:$0xff] %vm1939, %v2322
        %2394 = vst.msk [vmem:[#allocation2 + $0x290] sm:$0xff] %vm1939, %v2324
        %2395 = vst.msk [vmem:[#allocation2 + $0x2a8] sm:$0xff] %vm1939, %v2326
        %2396 = vst.msk [vmem:[#allocation2 + $0x2c0] sm:$0xff] %vm1939, %v2328
        %2397 = vst.msk [vmem:[#allocation2 + $0x2d8] sm:$0xff] %vm1939, %v2330
        %2398 = vst.msk [vmem:[#allocation2 + $0x2f0] sm:$0xff] %vm1939, %v2332
        %2399 = vst.msk [vmem:[#allocation2 + $0x308] sm:$0xff] %vm1939, %v2334
        %2400 = vst.msk [vmem:[#allocation2 + $0x320] sm:$0xff] %vm1939, %v2336
        %2434 = vst.msk [vmem:[#allocation2 + $0x28] sm:$0x80] %vm1275, %v1640
        %2435 = vst.msk [vmem:[#allocation2 + $0x40] sm:$0xff] %vm1264, %v1642
        %2436 = vst.msk [vmem:[#allocation2 + $0x58] sm:$0xff] %vm1264, %v1644
        %2437 = vst.msk [vmem:[#allocation2 + $0x70] sm:$0xff] %vm1264, %v1646
        %2438 = vst.msk [vmem:[#allocation2 + $0x88] sm:$0xff] %vm1264, %v1648
        %2439 = vst.msk [vmem:[#allocation2 + $0xa0] sm:$0xff] %vm1264, %v1650
        %2440 = vst.msk [vmem:[#allocation2 + $0xb8] sm:$0xff] %vm1264, %v1652
        %2441 = vst.msk [vmem:[#allocation2 + $0xd0] sm:$0xff] %vm1264, %v1654
        %2442 = vst.msk [vmem:[#allocation2 + $0xe8] sm:$0xff] %vm1264, %v1656
        %2443 = vst.msk [vmem:[#allocation2 + $0x100] sm:$0xff] %vm1264, %v1658
        %2444 = vst.msk [vmem:[#allocation2 + $0x118] sm:$0xff] %vm1264, %v1660
        %2445 = vst.msk [vmem:[#allocation2 + $0x130] sm:$0xff] %vm1264, %v1662
        %2446 = vst.msk [vmem:[#allocation2 + $0x148] sm:$0xff] %vm1264, %v1664
        %2447 = vst.msk [vmem:[#allocation2 + $0x160] sm:$0xff] %vm1264, %v1666
        %2448 = vst.msk [vmem:[#allocation2 + $0x178] sm:$0xff] %vm1264, %v1668
        %2449 = vst.msk [vmem:[#allocation2 + $0x190] sm:$0xff] %vm1264, %v1670
        %2450 = vst.msk [vmem:[#allocation2 + $0x1a8] sm:$0xff] %vm1264, %v1672
        %2451 = vst.msk [vmem:[#allocation2 + $0x1c0] sm:$0xff] %vm1264, %v1674
        %2452 = vst.msk [vmem:[#allocation2 + $0x1d8] sm:$0xff] %vm1264, %v1676
        %2453 = vst.msk [vmem:[#allocation2 + $0x1f0] sm:$0xff] %vm1264, %v1678
        %2454 = vst.msk [vmem:[#allocation2 + $0x208] sm:$0xff] %vm1264, %v1680
        %2455 = vst.msk [vmem:[#allocation2 + $0x220] sm:$0xff] %vm1264, %v1682
        %2456 = vst.msk [vmem:[#allocation2 + $0x238] sm:$0xff] %vm1264, %v1684
        %2457 = vst.msk [vmem:[#allocation2 + $0x250] sm:$0xff] %vm1264, %v1686
        %2458 = vst.msk [vmem:[#allocation2 + $0x268] sm:$0xff] %vm1264, %v1688
        %2459 = vst.msk [vmem:[#allocation2 + $0x280] sm:$0xff] %vm1264, %v1690
        %2460 = vst.msk [vmem:[#allocation2 + $0x298] sm:$0xff] %vm1264, %v1692
        %2461 = vst.msk [vmem:[#allocation2 + $0x2b0] sm:$0xff] %vm1264, %v1694
        %2462 = vst.msk [vmem:[#allocation2 + $0x2c8] sm:$0xff] %vm1264, %v1696
        %2463 = vst.msk [vmem:[#allocation2 + $0x2e0] sm:$0xff] %vm1264, %v1698
        %2464 = vst.msk [vmem:[#allocation2 + $0x2f8] sm:$0xff] %vm1264, %v1700
        %2465 = vst.msk [vmem:[#allocation2 + $0x310] sm:$0xff] %vm1264, %v1702
        %vm2466 = vcmask 260096
        %2467 = vst.msk [vmem:[#allocation2 + $0x328] sm:$0x7f] %vm2466, %v1701
        %v2468 = vld [vmem:[#allocation2 + $0x60] sm:$0xff]
        %v2469 = vld [vmem:[#allocation2 + $0x68] sm:$0xff]
        %v2470 = vld [vmem:[#allocation2 + $0x70] sm:$0xff]
        %v2471 = vld [vmem:[#allocation2 + $0x78] sm:$0xff]
        %v2472 = vld [vmem:[#allocation2 + $0x80] sm:$0xff]
        %v2473 = vld [vmem:[#allocation2 + $0x88] sm:$0xff]
        %v2474 = vld [vmem:[#allocation2 + $0x90] sm:$0xff]
        %v2475 = vld [vmem:[#allocation2 + $0x98] sm:$0xff]
        %v2476 = vld [vmem:[#allocation2 + $0xa0] sm:$0xff]
        %v2477 = vld [vmem:[#allocation2 + $0xa8] sm:$0xff]
        %v2478 = vld [vmem:[#allocation2 + $0xb0] sm:$0xff]
        %v2479 = vld [vmem:[#allocation2 + $0xb8] sm:$0xff]
        %v2480 = vld [vmem:[#allocation2 + $0xc0] sm:$0xff]
        %v2481 = vld [vmem:[#allocation2 + $0xc8] sm:$0xff]
        %v2482 = vld [vmem:[#allocation2 + $0xd0] sm:$0xff]
        %v2483 = vld [vmem:[#allocation2 + $0xd8] sm:$0xff]
        %v2484 = vld [vmem:[#allocation2 + $0xe0] sm:$0xff]
        %v2485 = vld [vmem:[#allocation2 + $0xe8] sm:$0xff]
        %v2486 = vld [vmem:[#allocation2 + $0xf0] sm:$0xff]
        %v2487 = vld [vmem:[#allocation2 + $0xf8] sm:$0xff]
        %v2488 = vld [vmem:[#allocation2 + $0x100] sm:$0xff]
        %v2489 = vld [vmem:[#allocation2 + $0x108] sm:$0xff]
        %v2490 = vld [vmem:[#allocation2 + $0x110] sm:$0xff]
        %v2491 = vld [vmem:[#allocation2 + $0x118] sm:$0xff]
        %v2492 = vld [vmem:[#allocation2 + $0x120] sm:$0xff]
        %v2493 = vld [vmem:[#allocation2 + $0x128] sm:$0xff]
        %v2494 = vld [vmem:[#allocation2 + $0x130] sm:$0xff]
        %v2495 = vld [vmem:[#allocation2 + $0x138] sm:$0xff]
        %v2496 = vld [vmem:[#allocation2 + $0x140] sm:$0xff]
        %v2497 = vld [vmem:[#allocation2 + $0x148] sm:$0xff]
        %v2498 = vld [vmem:[#allocation2 + $0x150] sm:$0xff]
        %v2499 = vld [vmem:[#allocation2 + $0x158] sm:$0xff]
        %v2500 = vld [vmem:[#allocation2 + $0x160] sm:$0xff]
        %v2501 = vld [vmem:[#allocation2 + $0x168] sm:$0xff]
        %v2502 = vld [vmem:[#allocation2 + $0x170] sm:$0xff]
        %v2503 = vld [vmem:[#allocation2 + $0x178] sm:$0xff]
        %v2504 = vld [vmem:[#allocation2 + $0x180] sm:$0xff]
        %v2505 = vld [vmem:[#allocation2 + $0x188] sm:$0xff]
        %v2506 = vld [vmem:[#allocation2 + $0x190] sm:$0xff]
        %v2507 = vld [vmem:[#allocation2 + $0x198] sm:$0xff]
        %v2508 = vld [vmem:[#allocation2 + $0x1a0] sm:$0xff]
        %v2509 = vld [vmem:[#allocation2 + $0x1a8] sm:$0xff]
        %v2510 = vld [vmem:[#allocation2 + $0x1b0] sm:$0xff]
        %v2511 = vld [vmem:[#allocation2 + $0x1b8] sm:$0xff]
        %v2512 = vld [vmem:[#allocation2 + $0x1c0] sm:$0xff]
        %v2513 = vld [vmem:[#allocation2 + $0x1c8] sm:$0xff]
        %v2514 = vld [vmem:[#allocation2 + $0x1d0] sm:$0xff]
        %v2515 = vld [vmem:[#allocation2 + $0x1d8] sm:$0xff]
        %v2516 = vld [vmem:[#allocation2 + $0x1e0] sm:$0xff]
        %v2517 = vld [vmem:[#allocation2 + $0x1e8] sm:$0xff]
        %v2518 = vld [vmem:[#allocation2 + $0x1f0] sm:$0xff]
        %v2519 = vld [vmem:[#allocation2 + $0x1f8] sm:$0xff]
        %v2520 = vld [vmem:[#allocation2 + $0x200] sm:$0xff]
        %v2521 = vld [vmem:[#allocation2 + $0x208] sm:$0xff]
        %v2522 = vld [vmem:[#allocation2 + $0x210] sm:$0xff]
        %v2523 = vld [vmem:[#allocation2 + $0x218] sm:$0xff]
        %v2524 = vld [vmem:[#allocation2 + $0x220] sm:$0xff]
        %v2525 = vld [vmem:[#allocation2 + $0x228] sm:$0xff]
        %v2526 = vld [vmem:[#allocation2 + $0x230] sm:$0xff]
        %v2527 = vld [vmem:[#allocation2 + $0x238] sm:$0xff]
        %v2528 = vld [vmem:[#allocation2 + $0x240] sm:$0xff]
        %v2529 = vld [vmem:[#allocation2 + $0x248] sm:$0xff]
        %v2530 = vld [vmem:[#allocation2 + $0x250] sm:$0xff]
        %v2531 = vld [vmem:[#allocation2 + $0x258] sm:$0xff]
        %v2532 = vld [vmem:[#allocation2 + $0x260] sm:$0xff]
        %v2533 = vld [vmem:[#allocation2 + $0x268] sm:$0xff]
        %v2534 = vld [vmem:[#allocation2 + $0x270] sm:$0xff]
        %v2535 = vld [vmem:[#allocation2 + $0x278] sm:$0xff]
        %v2536 = vld [vmem:[#allocation2 + $0x280] sm:$0xff]
        %v2537 = vld [vmem:[#allocation2 + $0x288] sm:$0xff]
        %v2538 = vld [vmem:[#allocation2 + $0x290] sm:$0xff]
        %v2539 = vld [vmem:[#allocation2 + $0x298] sm:$0xff]
        %v2540 = vld [vmem:[#allocation2 + $0x2a0] sm:$0xff]
        %v2541 = vld [vmem:[#allocation2 + $0x2a8] sm:$0xff]
        %v2542 = vld [vmem:[#allocation2 + $0x2b0] sm:$0xff]
        %v2543 = vld [vmem:[#allocation2 + $0x2b8] sm:$0xff]
        %v2544 = vld [vmem:[#allocation2 + $0x2c0] sm:$0xff]
        %v2545 = vld [vmem:[#allocation2 + $0x2c8] sm:$0xff]
        %v2546 = vld [vmem:[#allocation2 + $0x2d0] sm:$0xff]
        %v2547 = vld [vmem:[#allocation2 + $0x2d8] sm:$0xff]
        %v2548 = vld [vmem:[#allocation2 + $0x2e0] sm:$0xff]
        %v2549 = vld [vmem:[#allocation2 + $0x2e8] sm:$0xff]
        %v2550 = vld [vmem:[#allocation2 + $0x2f0] sm:$0xff]
        %v2551 = vld [vmem:[#allocation2 + $0x2f8] sm:$0xff]
        %v2552 = vld [vmem:[#allocation2 + $0x300] sm:$0xff]
        %v2553 = vld [vmem:[#allocation2 + $0x308] sm:$0xff]
        %v2554 = vld [vmem:[#allocation2 + $0x310] sm:$0xff]
        %v2555 = vld [vmem:[#allocation2 + $0x318] sm:$0xff]
        %v2556 = vld [vmem:[#allocation2 + $0x320] sm:$0xff]
        %v2557 = vld [vmem:[#allocation2 + $0x328] sm:$0xff]
        %v2558 = vld [vmem:[#allocation2 + $0x330] sm:$0xff]
        %v2559 = vld [vmem:[#allocation2 + $0x338] sm:$0xff]
        %v2560 = vld [vmem:[#allocation2 + $0x340] sm:$0xff]
        %v2561 = vld [vmem:[#allocation2 + $0x348] sm:$0xff]
        %v2562 = vld [vmem:[#allocation2 + $0x350] sm:$0xff]
        %v2563 = vld [vmem:[#allocation2 + $0x358] sm:$0xff]
        %v2564 = vld [vmem:[%s2] sm:$0xff]
        %v2565 = vld [vmem:[%s2 + $0x8] sm:$0xff]
        %v2566 = vld [vmem:[%s2 + $0x10] sm:$0xff]
        %v2567 = vld [vmem:[%s2 + $0x18] sm:$0xff]
        %v2568 = vld [vmem:[%s2 + $0x20] sm:$0xff]
        %v2569 = vld [vmem:[%s2 + $0x28] sm:$0xff]
        %v2570 = vld [vmem:[%s2 + $0x30] sm:$0xff]
        %v2571 = vld [vmem:[%s2 + $0x38] sm:$0xff]
        %v2572 = vld [vmem:[%s2 + $0x40] sm:$0xff]
        %v2573 = vld [vmem:[%s2 + $0x48] sm:$0xff]
        %v2574 = vld [vmem:[%s2 + $0x50] sm:$0xff]
        %v2575 = vld [vmem:[%s2 + $0x58] sm:$0xff]
        %v2576 = vld [vmem:[%s2 + $0x60] sm:$0xff]
        %v2577 = vld [vmem:[%s2 + $0x68] sm:$0xff]
        %v2578 = vld [vmem:[%s2 + $0x70] sm:$0xff]
        %v2579 = vld [vmem:[%s2 + $0x78] sm:$0xff]
        %v2580 = vld [vmem:[%s2 + $0x80] sm:$0xff]
        %v2581 = vld [vmem:[%s2 + $0x88] sm:$0xff]
        %v2582 = vld [vmem:[%s2 + $0x90] sm:$0xff]
        %v2583 = vld [vmem:[%s2 + $0x98] sm:$0xff]
        %v2584 = vld [vmem:[%s2 + $0xa0] sm:$0xff]
        %v2585 = vld [vmem:[%s2 + $0xa8] sm:$0xff]
        %v2586 = vld [vmem:[%s2 + $0xb0] sm:$0xff]
        %v2587 = vld [vmem:[%s2 + $0xb8] sm:$0xff]
        %v2588 = vld [vmem:[%s2 + $0xc0] sm:$0xff]
        %v2589 = vld [vmem:[%s2 + $0xc8] sm:$0xff]
        %v2590 = vld [vmem:[%s2 + $0xd0] sm:$0xff]
        %v2591 = vld [vmem:[%s2 + $0xd8] sm:$0xff]
        %v2592 = vld [vmem:[%s2 + $0xe0] sm:$0xff]
        %v2593 = vld [vmem:[%s2 + $0xe8] sm:$0xff]
        %v2594 = vld [vmem:[%s2 + $0xf0] sm:$0xff]
        %v2595 = vld [vmem:[%s2 + $0xf8] sm:$0xff]
        %v2596 = vld [vmem:[%s2 + $0x100] sm:$0xff]
        %v2597 = vld [vmem:[%s2 + $0x108] sm:$0xff]
        %v2598 = vld [vmem:[%s2 + $0x110] sm:$0xff]
        %v2599 = vld [vmem:[%s2 + $0x118] sm:$0xff]
        %v2600 = vld [vmem:[%s5] sm:$0x1]
        %v2602 = vlaneseq
        %v2603 = vshrl.u32 %v2602, 7
        %v2604 = vsub.s32 0, %v2603
        %v2605 = vrot.slane %v2600, %v2604
        %v2608 = vsel %vm1264, %v2470, 0
        %v2611 = vsel %vm1264, %v2473, 0
        %v2614 = vsel %vm1264, %v2476, 0
        %v2617 = vsel %vm1264, %v2479, 0
        %v2620 = vsel %vm1264, %v2482, 0
        %v2623 = vsel %vm1264, %v2485, 0
        %v2626 = vsel %vm1264, %v2488, 0
        %v2629 = vsel %vm1264, %v2491, 0
        %v2632 = vsel %vm1264, %v2494, 0
        %v2635 = vsel %vm1264, %v2497, 0
        %v2638 = vsel %vm1264, %v2500, 0
        %v2641 = vsel %vm1264, %v2503, 0
        %v2644 = vsel %vm1264, %v2506, 0
        %v2647 = vsel %vm1264, %v2509, 0
        %v2650 = vsel %vm1264, %v2512, 0
        %v2653 = vsel %vm1264, %v2515, 0
        %v2656 = vsel %vm1264, %v2518, 0
        %v2659 = vsel %vm1264, %v2521, 0
        %v2662 = vsel %vm1264, %v2524, 0
        %v2665 = vsel %vm1264, %v2527, 0
        %v2668 = vsel %vm1264, %v2530, 0
        %v2671 = vsel %vm1264, %v2533, 0
        %v2674 = vsel %vm1264, %v2536, 0
        %v2677 = vsel %vm1264, %v2539, 0
        %v2680 = vsel %vm1264, %v2542, 0
        %v2683 = vsel %vm1264, %v2545, 0
        %v2686 = vsel %vm1264, %v2548, 0
        %v2689 = vsel %vm1264, %v2551, 0
        %v2692 = vsel %vm1264, %v2554, 0
        %v2695 = vsel %vm1264, %v2557, 0
        %v2698 = vsel %vm1264, %v2560, 0
        %v2701 = vsel %vm1264, %v2563, 0
        %2703 = vmatprep.subr.mxu0 0.0
        %2704 = vmatpush1.msra.mxu0 %v2564
        %2705 = vmatprep.subr.mxu0 0.0
        %2706 = vmatpush1.msra.mxu0 %v2565
        %2707 = vmatprep.subr.mxu0 0.0
        %2708 = vmatpush1.msra.mxu0 %v2566
        %2709 = vmatprep.subr.mxu0 0.0
        %2710 = vmatpush1.msra.mxu0 %v2567
        %2711 = vmatprep.subr.mxu0 0.0
        %2712 = vmatpush1.msra.mxu0 %v2568
        %2713 = vmatprep.subr.mxu0 0.0
        %2714 = vmatpush1.msra.mxu0 %v2569
        %2715 = vmatprep.subr.mxu0 0.0
        %2716 = vmatpush1.msra.mxu0 %v2570
        %2717 = vmatprep.subr.mxu0 0.0
        %2718 = vmatpush1.msra.mxu0 %v2571
        %2719 = vmatprep.subr.mxu0 0.0
        %2720 = vmatpush1.msra.mxu0 %v2572
        %2721 = vmatprep.subr.mxu0 0.0
        %2722 = vmatpush1.msra.mxu0 %v2573
        %2723 = vmatprep.subr.mxu0 0.0
        %2724 = vmatpush1.msra.mxu0 %v2574
        %2725 = vmatprep.subr.mxu0 0.0
        %2726 = vmatpush1.msra.mxu0 %v2575
        %2727 = vmatprep.subr.mxu0 0.0
        %2728 = vmatpush1.msra.mxu0 %v2576
        %2729 = vmatprep.subr.mxu0 0.0
        %2730 = vmatpush1.msra.mxu0 %v2577
        %2731 = vmatprep.subr.mxu0 0.0
        %2732 = vmatpush1.msra.mxu0 %v2578
        %2733 = vmatprep.subr.mxu0 0.0
        %2734 = vmatpush1.msra.mxu0 %v2579
        %2735 = vmatprep.subr.mxu0 0.0
        %2736 = vmatpush1.msra.mxu0 %v2580
        %2737 = vmatprep.subr.mxu0 0.0
        %2738 = vmatpush1.msra.mxu0 %v2581
        %2739 = vmatprep.subr.mxu0 0.0
        %2740 = vmatpush1.msra.mxu0 %v2582
        %2741 = vmatprep.subr.mxu0 0.0
        %2742 = vmatpush1.msra.mxu0 %v2583
        %2743 = vmatprep.subr.mxu0 0.0
        %2744 = vmatpush1.msra.mxu0 %v2584
        %2745 = vmatprep.subr.mxu0 0.0
        %2746 = vmatpush1.msra.mxu0 %v2585
        %2747 = vmatprep.subr.mxu0 0.0
        %2748 = vmatpush1.msra.mxu0 %v2586
        %2749 = vmatprep.subr.mxu0 0.0
        %2750 = vmatpush1.msra.mxu0 %v2587
        %2751 = vmatprep.subr.mxu0 0.0
        %2752 = vmatpush1.msra.mxu0 %v2588
        %2753 = vmatprep.subr.mxu0 0.0
        %2754 = vmatpush1.msra.mxu0 %v2589
        %2755 = vmatprep.subr.mxu0 0.0
        %2756 = vmatpush1.msra.mxu0 %v2590
        %2757 = vmatprep.subr.mxu0 0.0
        %2758 = vmatpush1.msra.mxu0 %v2591
        %2759 = vmatprep.subr.mxu0 0.0
        %2760 = vmatpush1.msra.mxu0 %v2592
        %2761 = vmatprep.subr.mxu0 0.0
        %2762 = vmatpush1.msra.mxu0 %v2593
        %2763 = vmatprep.subr.mxu0 0.0
        %2764 = vmatpush1.msra.mxu0 %v2594
        %2765 = vmatprep.subr.mxu0 0.0
        %2766 = vmatpush1.msra.mxu0 %v2595
        %2767 = vmatprep.mubr.f32.mxu0 %v2469
        %2768 = vmatmul.mubr.f32.gmra.mrb[0].mxu0 %v2468
        %v2769 = vpop.f32.mrb[0].mxu0
        %v2770 = vadd.f32 %v2605, %v2769
        %v2771 = vpop.f32.mrb[0].mxu0
        %2772 = vmatprep.mubr.f32.mxu0 %v2472
        %2773 = vmatmul.mubr.f32.gmra.mrb[0].mxu0 %v2471
        %v2774 = vpop.f32.mrb[0].mxu0
        %v2775 = vadd.f32 %v2605, %v2774
        %v2776 = vpop.f32.mrb[0].mxu0
        %2777 = vmatprep.mubr.f32.mxu0 %v2475
        %2778 = vmatmul.mubr.f32.gmra.mrb[0].mxu0 %v2474
        %v2779 = vpop.f32.mrb[0].mxu0
        %v2780 = vadd.f32 %v2605, %v2779
        %v2781 = vpop.f32.mrb[0].mxu0
        %2782 = vmatprep.mubr.f32.mxu0 %v2478
        %2783 = vmatmul.mubr.f32.gmra.mrb[0].mxu0 %v2477
        %v2784 = vpop.f32.mrb[0].mxu0
        %v2785 = vadd.f32 %v2605, %v2784
        %v2786 = vpop.f32.mrb[0].mxu0
        %2787 = vmatprep.mubr.f32.mxu0 %v2481
        %2788 = vmatmul.mubr.f32.gmra.mrb[0].mxu0 %v2480
        %v2789 = vpop.f32.mrb[0].mxu0
        %v2790 = vadd.f32 %v2605, %v2789
        %v2791 = vpop.f32.mrb[0].mxu0
        %2792 = vmatprep.mubr.f32.mxu0 %v2484
        %2793 = vmatmul.mubr.f32.gmra.mrb[0].mxu0 %v2483
        %v2794 = vpop.f32.mrb[0].mxu0
        %v2795 = vadd.f32 %v2605, %v2794
        %v2796 = vpop.f32.mrb[0].mxu0
        %2797 = vmatprep.mubr.f32.mxu0 %v2487
        %2798 = vmatmul.mubr.f32.gmra.mrb[0].mxu0 %v2486
        %v2799 = vpop.f32.mrb[0].mxu0
        %v2800 = vadd.f32 %v2605, %v2799
        %v2801 = vpop.f32.mrb[0].mxu0
        %2802 = vmatprep.mubr.f32.mxu0 %v2490
        %2803 = vmatmul.mubr.f32.gmra.mrb[0].mxu0 %v2489
        %v2804 = vpop.f32.mrb[0].mxu0
        %v2805 = vadd.f32 %v2605, %v2804
        %v2806 = vpop.f32.mrb[0].mxu0
        %2807 = vmatprep.mubr.f32.mxu0 %v2493
        %2808 = vmatmul.mubr.f32.gmra.mrb[0].mxu0 %v2492
        %v2809 = vpop.f32.mrb[0].mxu0
        %v2810 = vadd.f32 %v2605, %v2809
        %v2811 = vpop.f32.mrb[0].mxu0
        %2812 = vmatprep.mubr.f32.mxu0 %v2496
        %2813 = vmatmul.mubr.f32.gmra.mrb[0].mxu0 %v2495
        %v2814 = vpop.f32.mrb[0].mxu0
        %v2815 = vadd.f32 %v2605, %v2814
        %v2816 = vpop.f32.mrb[0].mxu0
        %2817 = vmatprep.mubr.f32.mxu0 %v2499
        %2818 = vmatmul.mubr.f32.gmra.mrb[0].mxu0 %v2498
        %v2819 = vpop.f32.mrb[0].mxu0
        %v2820 = vadd.f32 %v2605, %v2819
        %v2821 = vpop.f32.mrb[0].mxu0
        %2822 = vmatprep.mubr.f32.mxu0 %v2502
        %2823 = vmatmul.mubr.f32.gmra.mrb[0].mxu0 %v2501
        %v2824 = vpop.f32.mrb[0].mxu0
        %v2825 = vadd.f32 %v2605, %v2824
        %v2826 = vpop.f32.mrb[0].mxu0
        %2827 = vmatprep.mubr.f32.mxu0 %v2505
        %2828 = vmatmul.mubr.f32.gmra.mrb[0].mxu0 %v2504
        %v2829 = vpop.f32.mrb[0].mxu0
        %v2830 = vadd.f32 %v2605, %v2829
        %v2831 = vpop.f32.mrb[0].mxu0
        %2832 = vmatprep.mubr.f32.mxu0 %v2508
        %2833 = vmatmul.mubr.f32.gmra.mrb[0].mxu0 %v2507
        %v2834 = vpop.f32.mrb[0].mxu0
        %v2835 = vadd.f32 %v2605, %v2834
        %v2836 = vpop.f32.mrb[0].mxu0
        %2837 = vmatprep.mubr.f32.mxu0 %v2511
        %2838 = vmatmul.mubr.f32.gmra.mrb[0].mxu0 %v2510
        %v2839 = vpop.f32.mrb[0].mxu0
        %v2840 = vadd.f32 %v2605, %v2839
        %v2841 = vpop.f32.mrb[0].mxu0
        %2842 = vmatprep.mubr.f32.mxu0 %v2514
        %2843 = vmatmul.mubr.f32.gmra.mrb[0].mxu0 %v2513
        %v2844 = vpop.f32.mrb[0].mxu0
        %v2845 = vadd.f32 %v2605, %v2844
        %v2846 = vpop.f32.mrb[0].mxu0
        %2847 = vmatprep.mubr.f32.mxu0 %v2517
        %2848 = vmatmul.mubr.f32.gmra.mrb[0].mxu0 %v2516
        %v2849 = vpop.f32.mrb[0].mxu0
        %v2850 = vadd.f32 %v2605, %v2849
        %v2851 = vpop.f32.mrb[0].mxu0
        %2852 = vmatprep.mubr.f32.mxu0 %v2520
        %2853 = vmatmul.mubr.f32.gmra.mrb[0].mxu0 %v2519
        %v2854 = vpop.f32.mrb[0].mxu0
        %v2855 = vadd.f32 %v2605, %v2854
        %v2856 = vpop.f32.mrb[0].mxu0
        %2857 = vmatprep.mubr.f32.mxu0 %v2523
        %2858 = vmatmul.mubr.f32.gmra.mrb[0].mxu0 %v2522
        %v2859 = vpop.f32.mrb[0].mxu0
        %v2860 = vadd.f32 %v2605, %v2859
        %v2861 = vpop.f32.mrb[0].mxu0
        %2862 = vmatprep.mubr.f32.mxu0 %v2526
        %2863 = vmatmul.mubr.f32.gmra.mrb[0].mxu0 %v2525
        %v2864 = vpop.f32.mrb[0].mxu0
        %v2865 = vadd.f32 %v2605, %v2864
        %v2866 = vpop.f32.mrb[0].mxu0
        %2867 = vmatprep.mubr.f32.mxu0 %v2529
        %2868 = vmatmul.mubr.f32.gmra.mrb[0].mxu0 %v2528
        %v2869 = vpop.f32.mrb[0].mxu0
        %v2870 = vadd.f32 %v2605, %v2869
        %v2871 = vpop.f32.mrb[0].mxu0
        %2872 = vmatprep.mubr.f32.mxu0 %v2532
        %2873 = vmatmul.mubr.f32.gmra.mrb[0].mxu0 %v2531
        %v2874 = vpop.f32.mrb[0].mxu0
        %v2875 = vadd.f32 %v2605, %v2874
        %v2876 = vpop.f32.mrb[0].mxu0
        %2877 = vmatprep.mubr.f32.mxu0 %v2535
        %2878 = vmatmul.mubr.f32.gmra.mrb[0].mxu0 %v2534
        %v2879 = vpop.f32.mrb[0].mxu0
        %v2880 = vadd.f32 %v2605, %v2879
        %v2881 = vpop.f32.mrb[0].mxu0
        %2882 = vmatprep.mubr.f32.mxu0 %v2538
        %2883 = vmatmul.mubr.f32.gmra.mrb[0].mxu0 %v2537
        %v2884 = vpop.f32.mrb[0].mxu0
        %v2885 = vadd.f32 %v2605, %v2884
        %v2886 = vpop.f32.mrb[0].mxu0
        %2887 = vmatprep.mubr.f32.mxu0 %v2541
        %2888 = vmatmul.mubr.f32.gmra.mrb[0].mxu0 %v2540
        %v2889 = vpop.f32.mrb[0].mxu0
        %v2890 = vadd.f32 %v2605, %v2889
        %v2891 = vpop.f32.mrb[0].mxu0
        %2892 = vmatprep.mubr.f32.mxu0 %v2544
        %2893 = vmatmul.mubr.f32.gmra.mrb[0].mxu0 %v2543
        %v2894 = vpop.f32.mrb[0].mxu0
        %v2895 = vadd.f32 %v2605, %v2894
        %v2896 = vpop.f32.mrb[0].mxu0
        %2897 = vmatprep.mubr.f32.mxu0 %v2547
        %2898 = vmatmul.mubr.f32.gmra.mrb[0].mxu0 %v2546
        %v2899 = vpop.f32.mrb[0].mxu0
        %v2900 = vadd.f32 %v2605, %v2899
        %v2901 = vpop.f32.mrb[0].mxu0
        %2902 = vmatprep.mubr.f32.mxu0 %v2550
        %2903 = vmatmul.mubr.f32.gmra.mrb[0].mxu0 %v2549
        %v2904 = vpop.f32.mrb[0].mxu0
        %v2905 = vadd.f32 %v2605, %v2904
        %v2906 = vpop.f32.mrb[0].mxu0
        %2907 = vmatprep.mubr.f32.mxu0 %v2553
        %2908 = vmatmul.mubr.f32.gmra.mrb[0].mxu0 %v2552
        %v2909 = vpop.f32.mrb[0].mxu0
        %v2910 = vadd.f32 %v2605, %v2909
        %v2911 = vpop.f32.mrb[0].mxu0
        %2912 = vmatprep.mubr.f32.mxu0 %v2556
        %2913 = vmatmul.mubr.f32.gmra.mrb[0].mxu0 %v2555
        %v2914 = vpop.f32.mrb[0].mxu0
        %v2915 = vadd.f32 %v2605, %v2914
        %v2916 = vpop.f32.mrb[0].mxu0
        %2917 = vmatprep.mubr.f32.mxu0 %v2559
        %2918 = vmatmul.mubr.f32.gmra.mrb[0].mxu0 %v2558
        %v2919 = vpop.f32.mrb[0].mxu0
        %v2920 = vadd.f32 %v2605, %v2919
        %v2921 = vpop.f32.mrb[0].mxu0
        %2922 = vmatprep.mubr.f32.mxu0 %v2562
        %2923 = vmatmul.mubr.f32.gmra.mrb[0].mxu0 %v2561
        %v2924 = vpop.f32.mrb[0].mxu0
        %v2925 = vadd.f32 %v2605, %v2924
        %v2926 = vpop.f32.mrb[0].mxu0
        %2927 = vdwg.mxu0
        %2928 = vmatprep.subr.mxu0 0.0
        %2929 = vmatpush1.msra.mxu0 %v2596
        %2930 = vmatprep.subr.mxu0 0.0
        %2931 = vmatpush1.msra.mxu0 %v2597
        %2932 = vmatprep.subr.mxu0 0.0
        %2933 = vmatpush1.msra.mxu0 %v2598
        %2934 = vmatprep.subr.mxu0 0.0
        %2935 = vmatpush1.msra.mxu0 %v2599
        %2936 = vmatprep.subr.mxu0 0.0
        %2937 = vmatpush1.msra.mxu0 0.0
        %2938 = vmatprep.subr.mxu0 0.0
        %2939 = vmatpush1.msra.mxu0 0.0
        %2940 = vmatprep.subr.mxu0 0.0
        %2941 = vmatpush1.msra.mxu0 0.0
        %2942 = vmatprep.subr.mxu0 0.0
        %2943 = vmatpush1.msra.mxu0 0.0
        %2944 = vmatprep.subr.mxu0 0.0
        %2945 = vmatpush1.msra.mxu0 0.0
        %2946 = vmatprep.subr.mxu0 0.0
        %2947 = vmatpush1.msra.mxu0 0.0
        %2948 = vmatprep.subr.mxu0 0.0
        %2949 = vmatpush1.msra.mxu0 0.0
        %2950 = vmatprep.subr.mxu0 0.0
        %2951 = vmatpush1.msra.mxu0 0.0
        %2952 = vmatprep.subr.mxu0 0.0
        %2953 = vmatpush1.msra.mxu0 0.0
        %2954 = vmatprep.subr.mxu0 0.0
        %2955 = vmatpush1.msra.mxu0 0.0
        %2956 = vmatprep.subr.mxu0 0.0
        %2957 = vmatpush1.msra.mxu0 0.0
        %2958 = vmatprep.subr.mxu0 0.0
        %2959 = vmatpush1.msra.mxu0 0.0
        %2960 = vmatprep.subr.mxu0 0.0
        %2961 = vmatpush1.msra.mxu0 0.0
        %2962 = vmatprep.subr.mxu0 0.0
        %2963 = vmatpush1.msra.mxu0 0.0
        %2964 = vmatprep.subr.mxu0 0.0
        %2965 = vmatpush1.msra.mxu0 0.0
        %2966 = vmatprep.subr.mxu0 0.0
        %2967 = vmatpush1.msra.mxu0 0.0
        %2968 = vmatprep.subr.mxu0 0.0
        %2969 = vmatpush1.msra.mxu0 0.0
        %2970 = vmatprep.subr.mxu0 0.0
        %2971 = vmatpush1.msra.mxu0 0.0
        %2972 = vmatprep.subr.mxu0 0.0
        %2973 = vmatpush1.msra.mxu0 0.0
        %2974 = vmatprep.subr.mxu0 0.0
        %2975 = vmatpush1.msra.mxu0 0.0
        %2976 = vmatprep.subr.mxu0 0.0
        %2977 = vmatpush1.msra.mxu0 0.0
        %2978 = vmatprep.subr.mxu0 0.0
        %2979 = vmatpush1.msra.mxu0 0.0
        %2980 = vmatprep.subr.mxu0 0.0
        %2981 = vmatpush1.msra.mxu0 0.0
        %2982 = vmatprep.subr.mxu0 0.0
        %2983 = vmatpush1.msra.mxu0 0.0
        %2984 = vmatprep.subr.mxu0 0.0
        %2985 = vmatpush1.msra.mxu0 0.0
        %2986 = vmatprep.subr.mxu0 0.0
        %2987 = vmatpush1.msra.mxu0 0.0
        %2988 = vmatprep.subr.mxu0 0.0
        %2989 = vmatpush1.msra.mxu0 0.0
        %2990 = vmatprep.subr.mxu0 0.0
        %2991 = vmatpush1.msra.mxu0 0.0
        %2992 = vmatprep.mubr.f32.mxu0 0.0
        %2993 = vmatmul.mubr.f32.gmra.mrb[0].mxu0 %v2608
        %v2994 = vpop.f32.mrb[0].mxu0
        %v2995 = vadd.f32 %v2770, %v2994
        %v2996 = vpop.f32.mrb[0].mxu0
        %2997 = vmatprep.mubr.f32.mxu0 0.0
        %2998 = vmatmul.mubr.f32.gmra.mrb[0].mxu0 %v2611
        %v2999 = vpop.f32.mrb[0].mxu0
        %v3000 = vadd.f32 %v2775, %v2999
        %v3001 = vpop.f32.mrb[0].mxu0
        %3002 = vmatprep.mubr.f32.mxu0 0.0
        %3003 = vmatmul.mubr.f32.gmra.mrb[0].mxu0 %v2614
        %v3004 = vpop.f32.mrb[0].mxu0
        %v3005 = vadd.f32 %v2780, %v3004
        %v3006 = vpop.f32.mrb[0].mxu0
        %3007 = vmatprep.mubr.f32.mxu0 0.0
        %3008 = vmatmul.mubr.f32.gmra.mrb[0].mxu0 %v2617
        %v3009 = vpop.f32.mrb[0].mxu0
        %v3010 = vadd.f32 %v2785, %v3009
        %v3011 = vpop.f32.mrb[0].mxu0
        %3012 = vmatprep.mubr.f32.mxu0 0.0
        %3013 = vmatmul.mubr.f32.gmra.mrb[0].mxu0 %v2620
        %v3014 = vpop.f32.mrb[0].mxu0
        %v3015 = vadd.f32 %v2790, %v3014
        %v3016 = vpop.f32.mrb[0].mxu0
        %3017 = vmatprep.mubr.f32.mxu0 0.0
        %3018 = vmatmul.mubr.f32.gmra.mrb[0].mxu0 %v2623
        %v3019 = vpop.f32.mrb[0].mxu0
        %v3020 = vadd.f32 %v2795, %v3019
        %v3021 = vpop.f32.mrb[0].mxu0
        %3022 = vmatprep.mubr.f32.mxu0 0.0
        %3023 = vmatmul.mubr.f32.gmra.mrb[0].mxu0 %v2626
        %v3024 = vpop.f32.mrb[0].mxu0
        %v3025 = vadd.f32 %v2800, %v3024
        %v3026 = vpop.f32.mrb[0].mxu0
        %3027 = vmatprep.mubr.f32.mxu0 0.0
        %3028 = vmatmul.mubr.f32.gmra.mrb[0].mxu0 %v2629
        %v3029 = vpop.f32.mrb[0].mxu0
        %v3030 = vadd.f32 %v2805, %v3029
        %v3031 = vpop.f32.mrb[0].mxu0
        %3032 = vmatprep.mubr.f32.mxu0 0.0
        %3033 = vmatmul.mubr.f32.gmra.mrb[0].mxu0 %v2632
        %v3034 = vpop.f32.mrb[0].mxu0
        %v3035 = vadd.f32 %v2810, %v3034
        %v3036 = vpop.f32.mrb[0].mxu0
        %3037 = vmatprep.mubr.f32.mxu0 0.0
        %3038 = vmatmul.mubr.f32.gmra.mrb[0].mxu0 %v2635
        %v3039 = vpop.f32.mrb[0].mxu0
        %v3040 = vadd.f32 %v2815, %v3039
        %v3041 = vpop.f32.mrb[0].mxu0
        %3042 = vmatprep.mubr.f32.mxu0 0.0
        %3043 = vmatmul.mubr.f32.gmra.mrb[0].mxu0 %v2638
        %v3044 = vpop.f32.mrb[0].mxu0
        %v3045 = vadd.f32 %v2820, %v3044
        %v3046 = vpop.f32.mrb[0].mxu0
        %3047 = vmatprep.mubr.f32.mxu0 0.0
        %3048 = vmatmul.mubr.f32.gmra.mrb[0].mxu0 %v2641
        %v3049 = vpop.f32.mrb[0].mxu0
        %v3050 = vadd.f32 %v2825, %v3049
        %v3051 = vpop.f32.mrb[0].mxu0
        %3052 = vmatprep.mubr.f32.mxu0 0.0
        %3053 = vmatmul.mubr.f32.gmra.mrb[0].mxu0 %v2644
        %v3054 = vpop.f32.mrb[0].mxu0
        %v3055 = vadd.f32 %v2830, %v3054
        %v3056 = vpop.f32.mrb[0].mxu0
        %3057 = vmatprep.mubr.f32.mxu0 0.0
        %3058 = vmatmul.mubr.f32.gmra.mrb[0].mxu0 %v2647
        %v3059 = vpop.f32.mrb[0].mxu0
        %v3060 = vadd.f32 %v2835, %v3059
        %v3061 = vpop.f32.mrb[0].mxu0
        %3062 = vmatprep.mubr.f32.mxu0 0.0
        %3063 = vmatmul.mubr.f32.gmra.mrb[0].mxu0 %v2650
        %v3064 = vpop.f32.mrb[0].mxu0
        %v3065 = vadd.f32 %v2840, %v3064
        %v3066 = vpop.f32.mrb[0].mxu0
        %3067 = vmatprep.mubr.f32.mxu0 0.0
        %3068 = vmatmul.mubr.f32.gmra.mrb[0].mxu0 %v2653
        %v3069 = vpop.f32.mrb[0].mxu0
        %v3070 = vadd.f32 %v2845, %v3069
        %v3071 = vpop.f32.mrb[0].mxu0
        %3072 = vmatprep.mubr.f32.mxu0 0.0
        %3073 = vmatmul.mubr.f32.gmra.mrb[0].mxu0 %v2656
        %v3074 = vpop.f32.mrb[0].mxu0
        %v3075 = vadd.f32 %v2850, %v3074
        %v3076 = vpop.f32.mrb[0].mxu0
        %3077 = vmatprep.mubr.f32.mxu0 0.0
        %3078 = vmatmul.mubr.f32.gmra.mrb[0].mxu0 %v2659
        %v3079 = vpop.f32.mrb[0].mxu0
        %v3080 = vadd.f32 %v2855, %v3079
        %v3081 = vpop.f32.mrb[0].mxu0
        %3082 = vmatprep.mubr.f32.mxu0 0.0
        %3083 = vmatmul.mubr.f32.gmra.mrb[0].mxu0 %v2662
        %v3084 = vpop.f32.mrb[0].mxu0
        %v3085 = vadd.f32 %v2860, %v3084
        %v3086 = vpop.f32.mrb[0].mxu0
        %3087 = vmatprep.mubr.f32.mxu0 0.0
        %3088 = vmatmul.mubr.f32.gmra.mrb[0].mxu0 %v2665
        %v3089 = vpop.f32.mrb[0].mxu0
        %v3090 = vadd.f32 %v2865, %v3089
        %v3091 = vpop.f32.mrb[0].mxu0
        %3092 = vmatprep.mubr.f32.mxu0 0.0
        %3093 = vmatmul.mubr.f32.gmra.mrb[0].mxu0 %v2668
        %v3094 = vpop.f32.mrb[0].mxu0
        %v3095 = vadd.f32 %v2870, %v3094
        %v3096 = vpop.f32.mrb[0].mxu0
        %3097 = vmatprep.mubr.f32.mxu0 0.0
        %3098 = vmatmul.mubr.f32.gmra.mrb[0].mxu0 %v2671
        %v3099 = vpop.f32.mrb[0].mxu0
        %v3100 = vadd.f32 %v2875, %v3099
        %v3101 = vpop.f32.mrb[0].mxu0
        %3102 = vmatprep.mubr.f32.mxu0 0.0
        %3103 = vmatmul.mubr.f32.gmra.mrb[0].mxu0 %v2674
        %v3104 = vpop.f32.mrb[0].mxu0
        %v3105 = vadd.f32 %v2880, %v3104
        %v3106 = vpop.f32.mrb[0].mxu0
        %3107 = vmatprep.mubr.f32.mxu0 0.0
        %3108 = vmatmul.mubr.f32.gmra.mrb[0].mxu0 %v2677
        %v3109 = vpop.f32.mrb[0].mxu0
        %v3110 = vadd.f32 %v2885, %v3109
        %v3111 = vpop.f32.mrb[0].mxu0
        %3112 = vmatprep.mubr.f32.mxu0 0.0
        %3113 = vmatmul.mubr.f32.gmra.mrb[0].mxu0 %v2680
        %v3114 = vpop.f32.mrb[0].mxu0
        %v3115 = vadd.f32 %v2890, %v3114
        %v3116 = vpop.f32.mrb[0].mxu0
        %3117 = vmatprep.mubr.f32.mxu0 0.0
        %3118 = vmatmul.mubr.f32.gmra.mrb[0].mxu0 %v2683
        %v3119 = vpop.f32.mrb[0].mxu0
        %v3120 = vadd.f32 %v2895, %v3119
        %v3121 = vpop.f32.mrb[0].mxu0
        %3122 = vmatprep.mubr.f32.mxu0 0.0
        %3123 = vmatmul.mubr.f32.gmra.mrb[0].mxu0 %v2686
        %v3124 = vpop.f32.mrb[0].mxu0
        %v3125 = vadd.f32 %v2900, %v3124
        %v3126 = vpop.f32.mrb[0].mxu0
        %3127 = vmatprep.mubr.f32.mxu0 0.0
        %3128 = vmatmul.mubr.f32.gmra.mrb[0].mxu0 %v2689
        %v3129 = vpop.f32.mrb[0].mxu0
        %v3130 = vadd.f32 %v2905, %v3129
        %v3131 = vpop.f32.mrb[0].mxu0
        %3132 = vmatprep.mubr.f32.mxu0 0.0
        %3133 = vmatmul.mubr.f32.gmra.mrb[0].mxu0 %v2692
        %v3134 = vpop.f32.mrb[0].mxu0
        %v3135 = vadd.f32 %v2910, %v3134
        %v3136 = vpop.f32.mrb[0].mxu0
        %3137 = vmatprep.mubr.f32.mxu0 0.0
        %3138 = vmatmul.mubr.f32.gmra.mrb[0].mxu0 %v2695
        %v3139 = vpop.f32.mrb[0].mxu0
        %v3140 = vadd.f32 %v2915, %v3139
        %v3141 = vpop.f32.mrb[0].mxu0
        %3142 = vmatprep.mubr.f32.mxu0 0.0
        %3143 = vmatmul.mubr.f32.gmra.mrb[0].mxu0 %v2698
        %v3144 = vpop.f32.mrb[0].mxu0
        %v3145 = vadd.f32 %v2920, %v3144
        %v3146 = vpop.f32.mrb[0].mxu0
        %3147 = vmatprep.mubr.f32.mxu0 0.0
        %3148 = vmatmul.mubr.f32.gmra.mrb[0].mxu0 %v2701
        %v3149 = vpop.f32.mrb[0].mxu0
        %v3150 = vadd.f32 %v2925, %v3149
        %v3151 = vpop.f32.mrb[0].mxu0
        %3152 = vdwg.mxu0
        %v3153 = vmax.f32 %v2995, 0.0
        %v3154 = vmax.f32 %v3000, 0.0
        %v3155 = vmax.f32 %v3005, 0.0
        %v3156 = vmax.f32 %v3010, 0.0
        %v3157 = vmax.f32 %v3015, 0.0
        %v3158 = vmax.f32 %v3020, 0.0
        %v3159 = vmax.f32 %v3025, 0.0
        %v3160 = vmax.f32 %v3030, 0.0
        %v3161 = vmax.f32 %v3035, 0.0
        %v3162 = vmax.f32 %v3040, 0.0
        %v3163 = vmax.f32 %v3045, 0.0
        %v3164 = vmax.f32 %v3050, 0.0
        %v3165 = vmax.f32 %v3055, 0.0
        %v3166 = vmax.f32 %v3060, 0.0
        %v3167 = vmax.f32 %v3065, 0.0
        %v3168 = vmax.f32 %v3070, 0.0
        %v3169 = vmax.f32 %v3075, 0.0
        %v3170 = vmax.f32 %v3080, 0.0
        %v3171 = vmax.f32 %v3085, 0.0
        %v3172 = vmax.f32 %v3090, 0.0
        %v3173 = vmax.f32 %v3095, 0.0
        %v3174 = vmax.f32 %v3100, 0.0
        %v3175 = vmax.f32 %v3105, 0.0
        %v3176 = vmax.f32 %v3110, 0.0
        %v3177 = vmax.f32 %v3115, 0.0
        %v3178 = vmax.f32 %v3120, 0.0
        %v3179 = vmax.f32 %v3125, 0.0
        %v3180 = vmax.f32 %v3130, 0.0
        %v3181 = vmax.f32 %v3135, 0.0
        %v3182 = vmax.f32 %v3140, 0.0
        %v3183 = vmax.f32 %v3145, 0.0
        %v3184 = vmax.f32 %v3150, 0.0
        %v3185 = vld [vmem:[%s3] sm:$0xff]
        %v3186 = vld [vmem:[%s3 + $0x8] sm:$0xff]
        %v3187 = vld [vmem:[%s3 + $0x10] sm:$0xff]
        %v3188 = vld [vmem:[%s3 + $0x18] sm:$0xff]
        %v3189 = vld [vmem:[%s276] sm:$0xff]
        %v3190 = vld [vmem:[%s276 + $0x8] sm:$0xff]
        %v3191 = vld [vmem:[%s276 + $0x10] sm:$0xff]
        %v3192 = vld [vmem:[%s276 + $0x18] sm:$0xff]
        %v3193 = vld [vmem:[%s276 + $0x20] sm:$0xff]
        %v3194 = vld [vmem:[%s276 + $0x28] sm:$0xff]
        %v3195 = vld [vmem:[%s276 + $0x30] sm:$0xff]
        %v3196 = vld [vmem:[%s276 + $0x38] sm:$0xff]
        %v3197 = vld [vmem:[%s276 + $0x40] sm:$0xff]
        %v3198 = vld [vmem:[%s276 + $0x48] sm:$0xff]
        %v3199 = vld [vmem:[%s276 + $0x50] sm:$0xff]
        %v3200 = vld [vmem:[%s276 + $0x58] sm:$0xff]
        %v3201 = vld [vmem:[%s276 + $0x60] sm:$0xff]
        %v3202 = vld [vmem:[%s276 + $0x68] sm:$0xff]
        %v3203 = vld [vmem:[%s276 + $0x70] sm:$0xff]
        %v3204 = vld [vmem:[%s276 + $0x78] sm:$0xff]
        %v3205 = vld [vmem:[%s276 + $0x80] sm:$0xff]
        %v3206 = vld [vmem:[%s276 + $0x88] sm:$0xff]
        %v3207 = vld [vmem:[%s276 + $0x90] sm:$0xff]
        %v3208 = vld [vmem:[%s276 + $0x98] sm:$0xff]
        %v3209 = vld [vmem:[%s276 + $0xa0] sm:$0xff]
        %v3210 = vld [vmem:[%s276 + $0xa8] sm:$0xff]
        %v3211 = vld [vmem:[%s276 + $0xb0] sm:$0xff]
        %v3212 = vld [vmem:[%s276 + $0xb8] sm:$0xff]
        %v3213 = vld [vmem:[%s276 + $0xc0] sm:$0xff]
        %v3214 = vld [vmem:[%s276 + $0xc8] sm:$0xff]
        %v3215 = vld [vmem:[%s276 + $0xd0] sm:$0xff]
        %v3216 = vld [vmem:[%s276 + $0xd8] sm:$0xff]
        %v3217 = vld [vmem:[%s276 + $0xe0] sm:$0xff]
        %v3218 = vld [vmem:[%s276 + $0xe8] sm:$0xff]
        %v3219 = vld [vmem:[%s276 + $0xf0] sm:$0xff]
        %v3220 = vld [vmem:[%s276 + $0xf8] sm:$0xff]
        %v3221 = vld [vmem:[%s6] sm:$0x1]
        %v3223 = vlaneseq
        %v3224 = vshrl.u32 %v3223, 7
        %v3225 = vsub.s32 0, %v3224
        %v3226 = vrot.slane %v3221, %v3225
        %v3229 = vsel %vm1264, %v3153, 0
        %v3232 = vsel %vm1264, %v3154, 0
        %v3235 = vsel %vm1264, %v3155, 0
        %v3238 = vsel %vm1264, %v3156, 0
        %v3241 = vsel %vm1264, %v3157, 0
        %v3244 = vsel %vm1264, %v3158, 0
        %v3247 = vsel %vm1264, %v3159, 0
        %v3250 = vsel %vm1264, %v3160, 0
        %v3253 = vsel %vm1264, %v3161, 0
        %v3256 = vsel %vm1264, %v3162, 0
        %v3259 = vsel %vm1264, %v3163, 0
        %v3262 = vsel %vm1264, %v3164, 0
        %v3265 = vsel %vm1264, %v3165, 0
        %v3268 = vsel %vm1264, %v3166, 0
        %v3271 = vsel %vm1264, %v3167, 0
        %v3274 = vsel %vm1264, %v3168, 0
        %v3277 = vsel %vm1264, %v3169, 0
        %v3280 = vsel %vm1264, %v3170, 0
        %v3283 = vsel %vm1264, %v3171, 0
        %v3286 = vsel %vm1264, %v3172, 0
        %v3289 = vsel %vm1264, %v3173, 0
        %v3292 = vsel %vm1264, %v3174, 0
        %v3295 = vsel %vm1264, %v3175, 0
        %v3298 = vsel %vm1264, %v3176, 0
        %v3301 = vsel %vm1264, %v3177, 0
        %v3304 = vsel %vm1264, %v3178, 0
        %v3307 = vsel %vm1264, %v3179, 0
        %v3310 = vsel %vm1264, %v3180, 0
        %v3313 = vsel %vm1264, %v3181, 0
        %v3316 = vsel %vm1264, %v3182, 0
        %v3319 = vsel %vm1264, %v3183, 0
        %v3322 = vsel %vm1264, %v3184, 0
        %3324 = vmatprep.subr.mxu0 0.0
        %3325 = vmatpush1.msra.mxu0 %v3185
        %3326 = vmatprep.subr.mxu0 0.0
        %3327 = vmatpush1.msra.mxu0 %v3186
        %3328 = vmatprep.subr.mxu0 0.0
        %3329 = vmatpush1.msra.mxu0 %v3187
        %3330 = vmatprep.subr.mxu0 0.0
        %3331 = vmatpush1.msra.mxu0 %v3188
        %3332 = vmatprep.subr.mxu0 0.0
        %3333 = vmatpush1.msra.mxu0 0.0
        %3334 = vmatprep.subr.mxu0 0.0
        %3335 = vmatpush1.msra.mxu0 0.0
        %3336 = vmatprep.subr.mxu0 0.0
        %3337 = vmatpush1.msra.mxu0 0.0
        %3338 = vmatprep.subr.mxu0 0.0
        %3339 = vmatpush1.msra.mxu0 0.0
        %3340 = vmatprep.subr.mxu0 0.0
        %3341 = vmatpush1.msra.mxu0 0.0
        %3342 = vmatprep.subr.mxu0 0.0
        %3343 = vmatpush1.msra.mxu0 0.0
        %3344 = vmatprep.subr.mxu0 0.0
        %3345 = vmatpush1.msra.mxu0 0.0
        %3346 = vmatprep.subr.mxu0 0.0
        %3347 = vmatpush1.msra.mxu0 0.0
        %3348 = vmatprep.subr.mxu0 0.0
        %3349 = vmatpush1.msra.mxu0 0.0
        %3350 = vmatprep.subr.mxu0 0.0
        %3351 = vmatpush1.msra.mxu0 0.0
        %3352 = vmatprep.subr.mxu0 0.0
        %3353 = vmatpush1.msra.mxu0 0.0
        %3354 = vmatprep.subr.mxu0 0.0
        %3355 = vmatpush1.msra.mxu0 0.0
        %3356 = vmatprep.subr.mxu0 0.0
        %3357 = vmatpush1.msra.mxu0 0.0
        %3358 = vmatprep.subr.mxu0 0.0
        %3359 = vmatpush1.msra.mxu0 0.0
        %3360 = vmatprep.subr.mxu0 0.0
        %3361 = vmatpush1.msra.mxu0 0.0
        %3362 = vmatprep.subr.mxu0 0.0
        %3363 = vmatpush1.msra.mxu0 0.0
        %3364 = vmatprep.subr.mxu0 0.0
        %3365 = vmatpush1.msra.mxu0 0.0
        %3366 = vmatprep.subr.mxu0 0.0
        %3367 = vmatpush1.msra.mxu0 0.0
        %3368 = vmatprep.subr.mxu0 0.0
        %3369 = vmatpush1.msra.mxu0 0.0
        %3370 = vmatprep.subr.mxu0 0.0
        %3371 = vmatpush1.msra.mxu0 0.0
        %3372 = vmatprep.subr.mxu0 0.0
        %3373 = vmatpush1.msra.mxu0 0.0
        %3374 = vmatprep.subr.mxu0 0.0
        %3375 = vmatpush1.msra.mxu0 0.0
        %3376 = vmatprep.subr.mxu0 0.0
        %3377 = vmatpush1.msra.mxu0 0.0
        %3378 = vmatprep.subr.mxu0 0.0
        %3379 = vmatpush1.msra.mxu0 0.0
        %3380 = vmatprep.subr.mxu0 0.0
        %3381 = vmatpush1.msra.mxu0 0.0
        %3382 = vmatprep.subr.mxu0 0.0
        %3383 = vmatpush1.msra.mxu0 0.0
        %3384 = vmatprep.subr.mxu0 0.0
        %3385 = vmatpush1.msra.mxu0 0.0
        %3386 = vmatprep.subr.mxu0 0.0
        %3387 = vmatpush1.msra.mxu0 0.0
        %3388 = vmatprep.mubr.f32.mxu0 0.0
        %3389 = vmatmul.mubr.f32.gmra.mrb[0].mxu0 %v3229
        %v3390 = vpop.f32.mrb[0].mxu0
        %v3391 = vadd.f32 %v3226, %v3390
        %v3392 = vpop.f32.mrb[0].mxu0
        %3393 = vmatprep.mubr.f32.mxu0 0.0
        %3394 = vmatmul.mubr.f32.gmra.mrb[0].mxu0 %v3232
        %v3395 = vpop.f32.mrb[0].mxu0
        %v3396 = vadd.f32 %v3226, %v3395
        %v3397 = vpop.f32.mrb[0].mxu0
        %3398 = vmatprep.mubr.f32.mxu0 0.0
        %3399 = vmatmul.mubr.f32.gmra.mrb[0].mxu0 %v3235
        %v3400 = vpop.f32.mrb[0].mxu0
        %v3401 = vadd.f32 %v3226, %v3400
        %v3402 = vpop.f32.mrb[0].mxu0
        %3403 = vmatprep.mubr.f32.mxu0 0.0
        %3404 = vmatmul.mubr.f32.gmra.mrb[0].mxu0 %v3238
        %v3405 = vpop.f32.mrb[0].mxu0
        %v3406 = vadd.f32 %v3226, %v3405
        %v3407 = vpop.f32.mrb[0].mxu0
        %3408 = vmatprep.mubr.f32.mxu0 0.0
        %3409 = vmatmul.mubr.f32.gmra.mrb[0].mxu0 %v3241
        %v3410 = vpop.f32.mrb[0].mxu0
        %v3411 = vadd.f32 %v3226, %v3410
        %v3412 = vpop.f32.mrb[0].mxu0
        %3413 = vmatprep.mubr.f32.mxu0 0.0
        %3414 = vmatmul.mubr.f32.gmra.mrb[0].mxu0 %v3244
        %v3415 = vpop.f32.mrb[0].mxu0
        %v3416 = vadd.f32 %v3226, %v3415
        %v3417 = vpop.f32.mrb[0].mxu0
        %3418 = vmatprep.mubr.f32.mxu0 0.0
        %3419 = vmatmul.mubr.f32.gmra.mrb[0].mxu0 %v3247
        %v3420 = vpop.f32.mrb[0].mxu0
        %v3421 = vadd.f32 %v3226, %v3420
        %v3422 = vpop.f32.mrb[0].mxu0
        %3423 = vmatprep.mubr.f32.mxu0 0.0
        %3424 = vmatmul.mubr.f32.gmra.mrb[0].mxu0 %v3250
        %v3425 = vpop.f32.mrb[0].mxu0
        %v3426 = vadd.f32 %v3226, %v3425
        %v3427 = vpop.f32.mrb[0].mxu0
        %3428 = vmatprep.mubr.f32.mxu0 0.0
        %3429 = vmatmul.mubr.f32.gmra.mrb[0].mxu0 %v3253
        %v3430 = vpop.f32.mrb[0].mxu0
        %v3431 = vadd.f32 %v3226, %v3430
        %v3432 = vpop.f32.mrb[0].mxu0
        %3433 = vmatprep.mubr.f32.mxu0 0.0
        %3434 = vmatmul.mubr.f32.gmra.mrb[0].mxu0 %v3256
        %v3435 = vpop.f32.mrb[0].mxu0
        %v3436 = vadd.f32 %v3226, %v3435
        %v3437 = vpop.f32.mrb[0].mxu0
        %3438 = vmatprep.mubr.f32.mxu0 0.0
        %3439 = vmatmul.mubr.f32.gmra.mrb[0].mxu0 %v3259
        %v3440 = vpop.f32.mrb[0].mxu0
        %v3441 = vadd.f32 %v3226, %v3440
        %v3442 = vpop.f32.mrb[0].mxu0
        %3443 = vmatprep.mubr.f32.mxu0 0.0
        %3444 = vmatmul.mubr.f32.gmra.mrb[0].mxu0 %v3262
        %v3445 = vpop.f32.mrb[0].mxu0
        %v3446 = vadd.f32 %v3226, %v3445
        %v3447 = vpop.f32.mrb[0].mxu0
        %3448 = vmatprep.mubr.f32.mxu0 0.0
        %3449 = vmatmul.mubr.f32.gmra.mrb[0].mxu0 %v3265
        %v3450 = vpop.f32.mrb[0].mxu0
        %v3451 = vadd.f32 %v3226, %v3450
        %v3452 = vpop.f32.mrb[0].mxu0
        %3453 = vmatprep.mubr.f32.mxu0 0.0
        %3454 = vmatmul.mubr.f32.gmra.mrb[0].mxu0 %v3268
        %v3455 = vpop.f32.mrb[0].mxu0
        %v3456 = vadd.f32 %v3226, %v3455
        %v3457 = vpop.f32.mrb[0].mxu0
        %3458 = vmatprep.mubr.f32.mxu0 0.0
        %3459 = vmatmul.mubr.f32.gmra.mrb[0].mxu0 %v3271
        %v3460 = vpop.f32.mrb[0].mxu0
        %v3461 = vadd.f32 %v3226, %v3460
        %v3462 = vpop.f32.mrb[0].mxu0
        %3463 = vmatprep.mubr.f32.mxu0 0.0
        %3464 = vmatmul.mubr.f32.gmra.mrb[0].mxu0 %v3274
        %v3465 = vpop.f32.mrb[0].mxu0
        %v3466 = vadd.f32 %v3226, %v3465
        %v3467 = vpop.f32.mrb[0].mxu0
        %3468 = vmatprep.mubr.f32.mxu0 0.0
        %3469 = vmatmul.mubr.f32.gmra.mrb[0].mxu0 %v3277
        %v3470 = vpop.f32.mrb[0].mxu0
        %v3471 = vadd.f32 %v3226, %v3470
        %v3472 = vpop.f32.mrb[0].mxu0
        %3473 = vmatprep.mubr.f32.mxu0 0.0
        %3474 = vmatmul.mubr.f32.gmra.mrb[0].mxu0 %v3280
        %v3475 = vpop.f32.mrb[0].mxu0
        %v3476 = vadd.f32 %v3226, %v3475
        %v3477 = vpop.f32.mrb[0].mxu0
        %3478 = vmatprep.mubr.f32.mxu0 0.0
        %3479 = vmatmul.mubr.f32.gmra.mrb[0].mxu0 %v3283
        %v3480 = vpop.f32.mrb[0].mxu0
        %v3481 = vadd.f32 %v3226, %v3480
        %v3482 = vpop.f32.mrb[0].mxu0
        %3483 = vmatprep.mubr.f32.mxu0 0.0
        %3484 = vmatmul.mubr.f32.gmra.mrb[0].mxu0 %v3286
        %v3485 = vpop.f32.mrb[0].mxu0
        %v3486 = vadd.f32 %v3226, %v3485
        %v3487 = vpop.f32.mrb[0].mxu0
        %3488 = vmatprep.mubr.f32.mxu0 0.0
        %3489 = vmatmul.mubr.f32.gmra.mrb[0].mxu0 %v3289
        %v3490 = vpop.f32.mrb[0].mxu0
        %v3491 = vadd.f32 %v3226, %v3490
        %v3492 = vpop.f32.mrb[0].mxu0
        %3493 = vmatprep.mubr.f32.mxu0 0.0
        %3494 = vmatmul.mubr.f32.gmra.mrb[0].mxu0 %v3292
        %v3495 = vpop.f32.mrb[0].mxu0
        %v3496 = vadd.f32 %v3226, %v3495
        %v3497 = vpop.f32.mrb[0].mxu0
        %3498 = vmatprep.mubr.f32.mxu0 0.0
        %3499 = vmatmul.mubr.f32.gmra.mrb[0].mxu0 %v3295
        %v3500 = vpop.f32.mrb[0].mxu0
        %v3501 = vadd.f32 %v3226, %v3500
        %v3502 = vpop.f32.mrb[0].mxu0
        %3503 = vmatprep.mubr.f32.mxu0 0.0
        %3504 = vmatmul.mubr.f32.gmra.mrb[0].mxu0 %v3298
        %v3505 = vpop.f32.mrb[0].mxu0
        %v3506 = vadd.f32 %v3226, %v3505
        %v3507 = vpop.f32.mrb[0].mxu0
        %3508 = vmatprep.mubr.f32.mxu0 0.0
        %3509 = vmatmul.mubr.f32.gmra.mrb[0].mxu0 %v3301
        %v3510 = vpop.f32.mrb[0].mxu0
        %v3511 = vadd.f32 %v3226, %v3510
        %v3512 = vpop.f32.mrb[0].mxu0
        %3513 = vmatprep.mubr.f32.mxu0 0.0
        %3514 = vmatmul.mubr.f32.gmra.mrb[0].mxu0 %v3304
        %v3515 = vpop.f32.mrb[0].mxu0
        %v3516 = vadd.f32 %v3226, %v3515
        %v3517 = vpop.f32.mrb[0].mxu0
        %3518 = vmatprep.mubr.f32.mxu0 0.0
        %3519 = vmatmul.mubr.f32.gmra.mrb[0].mxu0 %v3307
        %v3520 = vpop.f32.mrb[0].mxu0
        %v3521 = vadd.f32 %v3226, %v3520
        %v3522 = vpop.f32.mrb[0].mxu0
        %3523 = vmatprep.mubr.f32.mxu0 0.0
        %3524 = vmatmul.mubr.f32.gmra.mrb[0].mxu0 %v3310
        %v3525 = vpop.f32.mrb[0].mxu0
        %v3526 = vadd.f32 %v3226, %v3525
        %v3527 = vpop.f32.mrb[0].mxu0
        %3528 = vmatprep.mubr.f32.mxu0 0.0
        %3529 = vmatmul.mubr.f32.gmra.mrb[0].mxu0 %v3313
        %v3530 = vpop.f32.mrb[0].mxu0
        %v3531 = vadd.f32 %v3226, %v3530
        %v3532 = vpop.f32.mrb[0].mxu0
        %3533 = vmatprep.mubr.f32.mxu0 0.0
        %3534 = vmatmul.mubr.f32.gmra.mrb[0].mxu0 %v3316
        %v3535 = vpop.f32.mrb[0].mxu0
        %v3536 = vadd.f32 %v3226, %v3535
        %v3537 = vpop.f32.mrb[0].mxu0
        %3538 = vmatprep.mubr.f32.mxu0 0.0
        %3539 = vmatmul.mubr.f32.gmra.mrb[0].mxu0 %v3319
        %v3540 = vpop.f32.mrb[0].mxu0
        %v3541 = vadd.f32 %v3226, %v3540
        %v3542 = vpop.f32.mrb[0].mxu0
        %3543 = vmatprep.mubr.f32.mxu0 0.0
        %3544 = vmatmul.mubr.f32.gmra.mrb[0].mxu0 %v3322
        %v3545 = vpop.f32.mrb[0].mxu0
        %v3546 = vadd.f32 %v3226, %v3545
        %v3547 = vpop.f32.mrb[0].mxu0
        %3548 = vdwg.mxu0
        %v3549 = vadd.f32 %v3391, %v3189
        %v3550 = vadd.f32 %v3396, %v3190
        %v3551 = vadd.f32 %v3401, %v3191
        %v3552 = vadd.f32 %v3406, %v3192
        %v3553 = vadd.f32 %v3411, %v3193
        %v3554 = vadd.f32 %v3416, %v3194
        %v3555 = vadd.f32 %v3421, %v3195
        %v3556 = vadd.f32 %v3426, %v3196
        %v3557 = vadd.f32 %v3431, %v3197
        %v3558 = vadd.f32 %v3436, %v3198
        %v3559 = vadd.f32 %v3441, %v3199
        %v3560 = vadd.f32 %v3446, %v3200
        %v3561 = vadd.f32 %v3451, %v3201
        %v3562 = vadd.f32 %v3456, %v3202
        %v3563 = vadd.f32 %v3461, %v3203
        %v3564 = vadd.f32 %v3466, %v3204
        %v3565 = vadd.f32 %v3471, %v3205
        %v3566 = vadd.f32 %v3476, %v3206
        %v3567 = vadd.f32 %v3481, %v3207
        %v3568 = vadd.f32 %v3486, %v3208
        %v3569 = vadd.f32 %v3491, %v3209
        %v3570 = vadd.f32 %v3496, %v3210
        %v3571 = vadd.f32 %v3501, %v3211
        %v3572 = vadd.f32 %v3506, %v3212
        %v3573 = vadd.f32 %v3511, %v3213
        %v3574 = vadd.f32 %v3516, %v3214
        %v3575 = vadd.f32 %v3521, %v3215
        %v3576 = vadd.f32 %v3526, %v3216
        %v3577 = vadd.f32 %v3531, %v3217
        %v3578 = vadd.f32 %v3536, %v3218
        %v3579 = vadd.f32 %v3541, %v3219
        %v3580 = vadd.f32 %v3546, %v3220
        %v3581 = vmax.f32 %v3549, 0.0
        %v3582 = vmax.f32 %v3550, 0.0
        %v3583 = vmax.f32 %v3551, 0.0
        %v3584 = vmax.f32 %v3552, 0.0
        %v3585 = vmax.f32 %v3553, 0.0
        %v3586 = vmax.f32 %v3554, 0.0
        %v3587 = vmax.f32 %v3555, 0.0
        %v3588 = vmax.f32 %v3556, 0.0
        %v3589 = vmax.f32 %v3557, 0.0
        %v3590 = vmax.f32 %v3558, 0.0
        %v3591 = vmax.f32 %v3559, 0.0
        %v3592 = vmax.f32 %v3560, 0.0
        %v3593 = vmax.f32 %v3561, 0.0
        %v3594 = vmax.f32 %v3562, 0.0
        %v3595 = vmax.f32 %v3563, 0.0
        %v3596 = vmax.f32 %v3564, 0.0
        %v3597 = vmax.f32 %v3565, 0.0
        %v3598 = vmax.f32 %v3566, 0.0
        %v3599 = vmax.f32 %v3567, 0.0
        %v3600 = vmax.f32 %v3568, 0.0
        %v3601 = vmax.f32 %v3569, 0.0
        %v3602 = vmax.f32 %v3570, 0.0
        %v3603 = vmax.f32 %v3571, 0.0
        %v3604 = vmax.f32 %v3572, 0.0
        %v3605 = vmax.f32 %v3573, 0.0
        %v3606 = vmax.f32 %v3574, 0.0
        %v3607 = vmax.f32 %v3575, 0.0
        %v3608 = vmax.f32 %v3576, 0.0
        %v3609 = vmax.f32 %v3577, 0.0
        %v3610 = vmax.f32 %v3578, 0.0
        %v3611 = vmax.f32 %v3579, 0.0
        %v3612 = vmax.f32 %v3580, 0.0
        %3613 = vst [vmem:[%s271] sm:$0xff] %v3581
        %3614 = vst [vmem:[%s271 + $0x8] sm:$0xff] %v3582
        %3615 = vst [vmem:[%s271 + $0x10] sm:$0xff] %v3583
        %3616 = vst [vmem:[%s271 + $0x18] sm:$0xff] %v3584
        %3617 = vst [vmem:[%s271 + $0x20] sm:$0xff] %v3585
        %3618 = vst [vmem:[%s271 + $0x28] sm:$0xff] %v3586
        %3619 = vst [vmem:[%s271 + $0x30] sm:$0xff] %v3587
        %3620 = vst [vmem:[%s271 + $0x38] sm:$0xff] %v3588
        %3621 = vst [vmem:[%s271 + $0x40] sm:$0xff] %v3589
        %3622 = vst [vmem:[%s271 + $0x48] sm:$0xff] %v3590
        %3623 = vst [vmem:[%s271 + $0x50] sm:$0xff] %v3591
        %3624 = vst [vmem:[%s271 + $0x58] sm:$0xff] %v3592
        %3625 = vst [vmem:[%s271 + $0x60] sm:$0xff] %v3593
        %3626 = vst [vmem:[%s271 + $0x68] sm:$0xff] %v3594
        %3627 = vst [vmem:[%s271 + $0x70] sm:$0xff] %v3595
        %3628 = vst [vmem:[%s271 + $0x78] sm:$0xff] %v3596
        %3629 = vst [vmem:[%s271 + $0x80] sm:$0xff] %v3597
        %3630 = vst [vmem:[%s271 + $0x88] sm:$0xff] %v3598
        %3631 = vst [vmem:[%s271 + $0x90] sm:$0xff] %v3599
        %3632 = vst [vmem:[%s271 + $0x98] sm:$0xff] %v3600
        %3633 = vst [vmem:[%s271 + $0xa0] sm:$0xff] %v3601
        %3634 = vst [vmem:[%s271 + $0xa8] sm:$0xff] %v3602
        %3635 = vst [vmem:[%s271 + $0xb0] sm:$0xff] %v3603
        %3636 = vst [vmem:[%s271 + $0xb8] sm:$0xff] %v3604
        %3637 = vst [vmem:[%s271 + $0xc0] sm:$0xff] %v3605
        %3638 = vst [vmem:[%s271 + $0xc8] sm:$0xff] %v3606
        %3639 = vst [vmem:[%s271 + $0xd0] sm:$0xff] %v3607
        %3640 = vst [vmem:[%s271 + $0xd8] sm:$0xff] %v3608
        %3641 = vst [vmem:[%s271 + $0xe0] sm:$0xff] %v3609
        %3642 = vst [vmem:[%s271 + $0xe8] sm:$0xff] %v3610
        %3643 = vst [vmem:[%s271 + $0xf0] sm:$0xff] %v3611
        %3644 = vst [vmem:[%s271 + $0xf8] sm:$0xff] %v3612
        %s3645 = sand.u32 %s181, 1
        %s3646 = scalar_lea.sflag [#allocation4], %s3645
        %s3647 = sand.u32 %s181, 1
        %s3648 = smul.addr %s3647, 256
        %s3649 = scalar_lea.vmem [#allocation3], %s3648
        // Predicated region
        $region49: #{bottleneck_forward.1} parent=47 // pred_check
          %p3650 = pneg %p191
        $region50: #{bottleneck_forward.1} parent=47 // pred_check_branch
          %3652 = sbr.rel (%p3650) target = $region52
        $region51: #{bottleneck_forward.1} parent=47 // pred_region
          %s3654 = ssub.s32 4096, 4096
          %3655 = vsyncadd %s3646, %s3654
          %s3656 = smul.addr %s21, 32
          %s3657 = smul.addr %s3656, 128
          %s3658 = scalar_lea.hbm %s7, %s3657
          %s3659 = sshll.u32 %s3649, 4
          %s3660 = int_to_ptr.vmem [resolvable:$true] %s3659
          %3665 = dma.vmem_to_hbm [thread:$0]  %s3660, 4096, %s3658, %s3646, 128, 128, 8
        $region52: #{bottleneck_forward.1} parent=47 // pred_fallthru
          _
      $region48: #{bottleneck_forward.1} parent=5 // pred_fallthru
        _
      %p3666 = scmp.le.s32.totalorder 2, %s16
      // Predicated region
      $region53: #{bottleneck_forward.1} parent=5 // pred_check
        %p3667 = pneg %p3666
      $region54: #{bottleneck_forward.1} parent=5 // pred_check_branch
        %3669 = sbr.rel (%p3667) target = $region56
      $region55: #{bottleneck_forward.1} parent=5 // pred_region
        %s3670 = ssub.s32 %s16, 2
        // Predicated region
        $region57: #{bottleneck_forward.1} parent=55 // pred_check
          %p3671 = pneg %p197
        $region58: #{bottleneck_forward.1} parent=55 // pred_check_branch
          %3673 = sbr.rel (%p3671) target = $region60
        $region59: #{bottleneck_forward.1} parent=55 // pred_region
          %s3674 = sand.u32 %s182, 1
          %s3675 = scalar_lea.sflag [#allocation4], %s3674
          %s3676 = sand.u32 %s182, 1
          %s3677 = smul.addr %s3676, 256
          %s3678 = scalar_lea.vmem [#allocation3], %s3677
          %3679 = dma.done %s3675, 4096
        $region60: #{bottleneck_forward.1} parent=55 // pred_fallthru
          _
      $region56: #{bottleneck_forward.1} parent=5 // pred_fallthru
        _
    $region6: #{bottleneck_forward.1} parent=1 // loop_footer
      %s20 = sadd.s32 1, %s16
    $region7: #{bottleneck_forward.1} parent=1 // loop_footer_branch
      %15 = sbr.rel target = $region3
    $region8: #{bottleneck_forward.1} parent=1 // loop_exit
      _
    %3680 = vsyncpa [#allocation4], 1
    %s3681 = scalar_lea.sflag [#allocation4], 1
    %3682 = vsyncpa %s3681, 1

</llo_original>
